<compile_context>
chip_gen: v7x
topology: tpu7x:2x2x1
jax: 0.10.0
libtpu: 0.0.40
codegen_flags: <defaults>
</compile_context>

<pallas_src>
import functools

import jax
import jax.numpy as jnp
from jax import lax
from jax.experimental import pallas as pl
from jax.experimental.pallas import tpu as pltpu

BN_EPS = 1e-5


def _conv1_kernel(x_ref, band_ref, y_ref, stats_ref, *, td, h, w):
    """Pass 1: 5x5x5 conv (bias-free) + per-tile BN partial statistics.

    x_ref     : (1, td+4, h+4, cin*(w+4))  haloed, zero-padded input tile
    band_ref  : (25, cin*(w+4), 2*w)       banded conv1 weights (kw folded in)
    y_ref     : (1, 2, td*h, w)            conv1 output tile (pre-BN)
    stats_ref : (1, 4, w)                  [sum0, sumsq0, sum1, sumsq1] row-sums
    """
    acc = jnp.zeros((td * h, 2 * w), dtype=jnp.float32)
    # 25 (kd, kh) taps; the kw tap + cin contraction live inside the banded
    # matmul, so no im2col buffer and no lane shifts are ever built.
    for kd in range(5):
        for kh in range(5):
            xs = x_ref[0, kd:kd + td, kh:kh + h, :]        # (td, h, cin*(w+4))
            xs2 = xs.reshape(td * h, xs.shape[-1])         # collapse leading dims
            acc = acc + jnp.dot(xs2, band_ref[5 * kd + kh],
                                preferred_element_type=jnp.float32)
    y0 = acc[:, :w]                                        # channel 0
    y1 = acc[:, w:]                                        # channel 1
    y_ref[0, 0] = y0
    y_ref[0, 1] = y1
    # Per-tile partial sums for the global (train-mode) BN statistics.
    stats_ref[0, 0:1, :] = jnp.sum(y0, axis=0, keepdims=True)
    stats_ref[0, 1:2, :] = jnp.sum(y0 * y0, axis=0, keepdims=True)
    stats_ref[0, 2:3, :] = jnp.sum(y1, axis=0, keepdims=True)
    stats_ref[0, 3:4, :] = jnp.sum(y1 * y1, axis=0, keepdims=True)


def _head_kernel(params_ref, y_ref, o_ref):
    """Pass 2: fused BN scale/shift + ReLU + 1x1x1 conv + 2-way softmax.

    params_ref : SMEM (10,) = [s0, s1, t0, t1, w00, w01, w10, w11, c0, c1]
    y_ref      : (1, 2, td*h, w)  conv1 output tile
    o_ref      : (1, 2, td*h, w)  softmax probabilities
    """
    s0 = params_ref[0]
    s1 = params_ref[1]
    t0 = params_ref[2]
    t1 = params_ref[3]
    w00 = params_ref[4]
    w01 = params_ref[5]
    w10 = params_ref[6]
    w11 = params_ref[7]
    c0 = params_ref[8]
    c1 = params_ref[9]
    # Fused BN affine (scale/shift precomputed in the wrapper) + ReLU.
    a0 = jnp.maximum(y_ref[0, 0] * s0 + t0, 0.0)
    a1 = jnp.maximum(y_ref[0, 1] * s1 + t1, 0.0)
    # 1x1x1 conv = 2x2 channel mix.
    z0 = a0 * w00 + a1 * w01 + c0
    z1 = a0 * w10 + a1 * w11 + c1
    # 2-channel softmax == sigmoid(z0 - z1); p0 + p1 == 1 by construction.
    p0 = 1.0 / (1.0 + jnp.exp(z1 - z0))
    o_ref[0, 0] = p0
    o_ref[0, 1] = 1.0 - p0


def _vmem_limit_bytes():
    try:
        cap = pltpu.get_tpu_info().vmem_capacity_bytes
    except Exception:
        cap = 64 << 20
    # Leave pipeline/scratch headroom: ~45 MiB on v7x (64 MiB physical VMEM),
    # up to ~90 MiB on v5e/v6e (128 MiB physical).
    return int(min(cap * 0.7, 96 << 20))


def _pick_depth_tile(d):
    """Largest divisor of D that is <= 8 (keeps the haloed tile small)."""
    td = 1
    for cand in range(1, d + 1):
        if cand <= 8 and d % cand == 0:
            td = cand
    return td


@jax.jit
def output_transition(x, w1, b1, gamma, beta, w2, b2):
    """Forward pass of OutputTransition.

    x:  (N, Cin, D, H, W) float32
    w1: (2, Cin, 5, 5, 5), b1: (2,)
    gamma, beta: (2,)          (BN affine; train-mode batch statistics)
    w2: (2, 2, 1, 1, 1), b2: (2,)
    returns (N, 2, D, H, W)
    """
    n, cin, d, h, w = x.shape
    td = _pick_depth_tile(d)
    ndt = d // td
    t_tiles = n * ndt
    w4 = w + 4
    kdim = cin * w4

    xf = x.astype(jnp.float32)
    # Zero-pad spatial dims by 2 (cheap: ~(1+4/D)(1+4/H)(1+4/W) expansion).
    xp = jnp.pad(xf, ((0, 0), (0, 0), (2, 2), (2, 2), (2, 2)))
    # (N, D+4, H+4, Cin*(W+4)): channels fold into the lane dim next to W so
    # the (cin, kw) contraction becomes one matmul per (kd, kh) tap.
    xt = jnp.transpose(xp, (0, 2, 3, 1, 4)).reshape(n, d + 4, h + 4, kdim)
    # Haloed depth tiles (4 overlap rows): (N*ndt, td+4, H+4, Cin*(W+4)).
    didx = jnp.arange(ndt)[:, None] * td + jnp.arange(td + 4)[None, :]
    xtiles = xt[:, didx].reshape(t_tiles, td + 4, h + 4, kdim)

    # Banded conv1 weights: B[(kd,kh), (cin,w'), (co,w)] = w1[co,cin,kd,kh,w'-w]
    # for 0 <= w'-w <= 4, else 0.  Folds the lane-offset (kw) tap into the MXU.
    w1f = w1.astype(jnp.float32)                         # (2, Cin, 5, 5, 5)
    wt = jnp.transpose(w1f, (2, 3, 1, 0, 4))             # (kd, kh, cin, co, kw)
    off = jnp.arange(w4)[:, None] - jnp.arange(w)[None, :]   # w' - w
    valid = (off >= 0) & (off < 5)
    band = wt[:, :, :, :, jnp.clip(off, 0, 4)]           # (5,5,Cin,2,W+4,W)
    band = jnp.where(valid[None, None, None, None], band, 0.0)
    band = jnp.transpose(band, (0, 1, 2, 4, 3, 5)).reshape(25, kdim, 2 * w)

    vmem_limit = _vmem_limit_bytes()

    # ---- Pass 1: conv1 + partial BN stats, gridded over depth tiles. -------
    kernel1 = functools.partial(_conv1_kernel, td=td, h=h, w=w)
    y_conv, stats = pl.pallas_call(
        kernel1,
        out_shape=(
            jax.ShapeDtypeStruct((t_tiles, 2, td * h, w), jnp.float32),
            jax.ShapeDtypeStruct((t_tiles, 4, w), jnp.float32),
        ),
        grid=(t_tiles,),
        in_specs=[
            pl.BlockSpec((1, td + 4, h + 4, kdim), lambda t: (t, 0, 0, 0)),
            pl.BlockSpec((25, kdim, 2 * w), lambda t: (0, 0, 0)),  # resident
        ],
        out_specs=(
            pl.BlockSpec((1, 2, td * h, w), lambda t: (t, 0, 0, 0)),
            pl.BlockSpec((1, 4, w), lambda t: (t, 0, 0)),
        ),
        compiler_params=pltpu.CompilerParams(
            dimension_semantics=("parallel",),
            vmem_limit_bytes=vmem_limit),
    )(xtiles, band)

    # ---- Global BN batch stats (biased var) + affine fold: 8 scalars. ------
    # conv1's bias is an exact no-op under train-mode mean subtraction.
    del b1
    count = jnp.float32(n * d * h * w)
    totals = jnp.sum(stats, axis=(0, 2))                 # [sum0, sq0, sum1, sq1]
    mean = jnp.stack([totals[0], totals[2]]) / count
    ex2 = jnp.stack([totals[1], totals[3]]) / count
    var = jnp.maximum(ex2 - mean * mean, 0.0)
    scale = gamma.astype(jnp.float32) * lax.rsqrt(var + BN_EPS)
    shift = beta.astype(jnp.float32) - mean * scale
    params = jnp.concatenate([
        scale, shift,
        w2.astype(jnp.float32).reshape(-1),
        b2.astype(jnp.float32).reshape(-1),
    ])                                                   # (10,) scalars -> SMEM

    # ---- Pass 2: normalize + ReLU + conv2 + softmax, gridded, scalars in SMEM.
    out_tiles = pl.pallas_call(
        _head_kernel,
        out_shape=jax.ShapeDtypeStruct((t_tiles, 2, td * h, w), jnp.float32),
        grid_spec=pltpu.PrefetchScalarGridSpec(
            num_scalar_prefetch=1,
            grid=(t_tiles,),
            in_specs=[pl.BlockSpec((1, 2, td * h, w),
                                   lambda t, p: (t, 0, 0, 0))],
            out_specs=pl.BlockSpec((1, 2, td * h, w),
                                   lambda t, p: (t, 0, 0, 0)),
        ),
        compiler_params=pltpu.CompilerParams(
            dimension_semantics=("parallel",),
            vmem_limit_bytes=vmem_limit),
    )(params, y_conv)

    # (N*ndt, 2, td*h, w) -> (N, 2, D, H, W)
    out = out_tiles.reshape(n, ndt, 2, td, h, w)
    return jnp.transpose(out, (0, 2, 1, 3, 4, 5)).reshape(n, 2, d, h, w)


def _reference(x, w1, b1, gamma, beta, w2, b2):
    """Pure-XLA reference for correctness checking."""
    dn = ("NCDHW", "OIDHW", "NCDHW")
    y = lax.conv_general_dilated(x, w1, (1, 1, 1), ((2, 2), (2, 2), (2, 2)),
                                 dimension_numbers=dn,
                                 precision=lax.Precision.HIGHEST)
    y = y + b1.reshape(1, 2, 1, 1, 1)
    mean = jnp.mean(y, axis=(0, 2, 3, 4), keepdims=True)
    var = jnp.mean((y - mean) ** 2, axis=(0, 2, 3, 4), keepdims=True)
    y = (y - mean) * lax.rsqrt(var + BN_EPS)
    y = y * gamma.reshape(1, 2, 1, 1, 1) + beta.reshape(1, 2, 1, 1, 1)
    y = jnp.maximum(y, 0.0)
    z = lax.conv_general_dilated(y, w2, (1, 1, 1), "VALID",
                                 dimension_numbers=dn,
                                 precision=lax.Precision.HIGHEST)
    z = z + b2.reshape(1, 2, 1, 1, 1)
    return jax.nn.softmax(z, axis=1)


if __name__ == "__main__":
    key = jax.random.PRNGKey(0)
    k_x, k_w1, k_b1, k_w2, k_b2 = jax.random.split(key, 5)

    N, Cin, D, H, W = 2, 4, 8, 8, 8
    x = jax.random.normal(k_x, (N, Cin, D, H, W), dtype=jnp.float32)

    # Deterministic synthetic parameters (module shapes from __init__).
    fan1 = Cin * 5 * 5 * 5
    w1 = jax.random.normal(k_w1, (2, Cin, 5, 5, 5), dtype=jnp.float32) / jnp.sqrt(fan1)
    b1 = jax.random.normal(k_b1, (2,), dtype=jnp.float32) * 0.1
    gamma = jnp.ones((2,), dtype=jnp.float32)            # BN weight init
    beta = jnp.zeros((2,), dtype=jnp.float32)            # BN bias init
    w2 = jax.random.normal(k_w2, (2, 2, 1, 1, 1), dtype=jnp.float32) / jnp.sqrt(2.0)
    b2 = jax.random.normal(k_b2, (2,), dtype=jnp.float32) * 0.1

    out = jax.block_until_ready(
        output_transition(x, w1, b1, gamma, beta, w2, b2))

    assert out.shape == (N, 2, D, H, W)
    # channel-softmax sanity: probabilities sum to 1
    assert jnp.allclose(jnp.sum(out, axis=1), 1.0, atol=1e-4)

    # compare against a pure-XLA reference (tolerance covers MXU f32 rounding)
    ref = jax.block_until_ready(_reference(x, w1, b1, gamma, beta, w2, b2))
    assert jnp.allclose(out, ref, atol=1e-2, rtol=1e-2), \
        float(jnp.max(jnp.abs(out - ref)))

    print("KERNEL_OK")
</pallas_src>

<mosaic_0001>
module attributes {stable_mosaic.version = 11 : i64} {
  func.func @_conv1_kernel(%arg0: i32, %arg1: memref<1x12x12x48xf32, #tpu.memory_space<vmem>>, %arg2: memref<25x48x16xf32, #tpu.memory_space<vmem>>, %arg3: memref<1x2x64x8xf32, #tpu.memory_space<vmem>>, %arg4: memref<1x4x8xf32, #tpu.memory_space<vmem>>) attributes {dimension_semantics = [#tpu.dimension_semantics<parallel>], iteration_bounds = array<i64: 2>, scalar_prefetch = 0 : i64, scratch_operands = 0 : i64, tpu.core_type = #tpu.core_type<tc>, window_params = [{transform_indices = @transform_0, window_bounds = array<i64: 1, 12, 12, 48>}, {pipeline_mode = #tpu.pipeline_mode<synchronous>, transform_indices = @transform_1, window_bounds = array<i64: 25, 48, 16>}, {transform_indices = @transform_2, window_bounds = array<i64: 1, 2, 64, 8>}, {transform_indices = @transform_3, window_bounds = array<i64: 1, 4, 8>}]} {
    %cst = arith.constant 0.000000e+00 : f32
    %0 = vector.broadcast %cst : f32 to vector<64x16xf32>
    %c0 = arith.constant 0 : index
    %c0_0 = arith.constant 0 : index
    %c0_1 = arith.constant 0 : index
    %c0_2 = arith.constant 0 : index
    %1 = vector.load %arg1[%c0, %c0_0, %c0_1, %c0_2] : memref<1x12x12x48xf32, #tpu.memory_space<vmem>>, vector<1x8x8x48xf32>
    %2 = vector.shape_cast %1 : vector<1x8x8x48xf32> to vector<8x8x48xf32>
    %3 = vector.shape_cast %2 : vector<8x8x48xf32> to vector<64x48xf32>
    %c0_3 = arith.constant 0 : index
    %c0_4 = arith.constant 0 : index
    %c0_5 = arith.constant 0 : index
    %4 = vector.load %arg2[%c0_3, %c0_4, %c0_5] : memref<25x48x16xf32, #tpu.memory_space<vmem>>, vector<1x48x16xf32>
    %5 = vector.shape_cast %4 : vector<1x48x16xf32> to vector<48x16xf32>
    %cst_6 = arith.constant dense<0.000000e+00> : vector<64x16xf32>
    %6 = tpu.matmul %3, %5, %cst_6 {dimension_numbers = #tpu.dot_dimension_numbers<[1], [0], [0], [1], [0, 0, 1, 1], [], []>} : vector<64x48xf32>, vector<48x16xf32>, vector<64x16xf32> -> vector<64x16xf32>
    %7 = arith.addf %0, %6 : vector<64x16xf32>
    %c0_7 = arith.constant 0 : index
    %c0_8 = arith.constant 0 : index
    %c1 = arith.constant 1 : index
    %c0_9 = arith.constant 0 : index
    %8 = vector.load %arg1[%c0_7, %c0_8, %c1, %c0_9] : memref<1x12x12x48xf32, #tpu.memory_space<vmem>>, vector<1x8x8x48xf32>
    %9 = vector.shape_cast %8 : vector<1x8x8x48xf32> to vector<8x8x48xf32>
    %10 = vector.shape_cast %9 : vector<8x8x48xf32> to vector<64x48xf32>
    %c1_10 = arith.constant 1 : index
    %c0_11 = arith.constant 0 : index
    %c0_12 = arith.constant 0 : index
    %11 = vector.load %arg2[%c1_10, %c0_11, %c0_12] : memref<25x48x16xf32, #tpu.memory_space<vmem>>, vector<1x48x16xf32>
    %12 = vector.shape_cast %11 : vector<1x48x16xf32> to vector<48x16xf32>
    %cst_13 = arith.constant dense<0.000000e+00> : vector<64x16xf32>
    %13 = tpu.matmul %10, %12, %cst_13 {dimension_numbers = #tpu.dot_dimension_numbers<[1], [0], [0], [1], [0, 0, 1, 1], [], []>} : vector<64x48xf32>, vector<48x16xf32>, vector<64x16xf32> -> vector<64x16xf32>
    %14 = arith.addf %7, %13 : vector<64x16xf32>
    %c0_14 = arith.constant 0 : index
    %c0_15 = arith.constant 0 : index
    %c2 = arith.constant 2 : index
    %c0_16 = arith.constant 0 : index
    %15 = vector.load %arg1[%c0_14, %c0_15, %c2, %c0_16] : memref<1x12x12x48xf32, #tpu.memory_space<vmem>>, vector<1x8x8x48xf32>
    %16 = vector.shape_cast %15 : vector<1x8x8x48xf32> to vector<8x8x48xf32>
    %17 = vector.shape_cast %16 : vector<8x8x48xf32> to vector<64x48xf32>
    %c2_17 = arith.constant 2 : index
    %c0_18 = arith.constant 0 : index
    %c0_19 = arith.constant 0 : index
    %18 = vector.load %arg2[%c2_17, %c0_18, %c0_19] : memref<25x48x16xf32, #tpu.memory_space<vmem>>, vector<1x48x16xf32>
    %19 = vector.shape_cast %18 : vector<1x48x16xf32> to vector<48x16xf32>
    %cst_20 = arith.constant dense<0.000000e+00> : vector<64x16xf32>
    %20 = tpu.matmul %17, %19, %cst_20 {dimension_numbers = #tpu.dot_dimension_numbers<[1], [0], [0], [1], [0, 0, 1, 1], [], []>} : vector<64x48xf32>, vector<48x16xf32>, vector<64x16xf32> -> vector<64x16xf32>
    %21 = arith.addf %14, %20 : vector<64x16xf32>
    %c0_21 = arith.constant 0 : index
    %c0_22 = arith.constant 0 : index
    %c3 = arith.constant 3 : index
    %c0_23 = arith.constant 0 : index
    %22 = vector.load %arg1[%c0_21, %c0_22, %c3, %c0_23] : memref<1x12x12x48xf32, #tpu.memory_space<vmem>>, vector<1x8x8x48xf32>
    %23 = vector.shape_cast %22 : vector<1x8x8x48xf32> to vector<8x8x48xf32>
    %24 = vector.shape_cast %23 : vector<8x8x48xf32> to vector<64x48xf32>
    %c3_24 = arith.constant 3 : index
    %c0_25 = arith.constant 0 : index
    %c0_26 = arith.constant 0 : index
    %25 = vector.load %arg2[%c3_24, %c0_25, %c0_26] : memref<25x48x16xf32, #tpu.memory_space<vmem>>, vector<1x48x16xf32>
    %26 = vector.shape_cast %25 : vector<1x48x16xf32> to vector<48x16xf32>
    %cst_27 = arith.constant dense<0.000000e+00> : vector<64x16xf32>
    %27 = tpu.matmul %24, %26, %cst_27 {dimension_numbers = #tpu.dot_dimension_numbers<[1], [0], [0], [1], [0, 0, 1, 1], [], []>} : vector<64x48xf32>, vector<48x16xf32>, vector<64x16xf32> -> vector<64x16xf32>
    %28 = arith.addf %21, %27 : vector<64x16xf32>
    %c0_28 = arith.constant 0 : index
    %c0_29 = arith.constant 0 : index
    %c4 = arith.constant 4 : index
    %c0_30 = arith.constant 0 : index
    %29 = vector.load %arg1[%c0_28, %c0_29, %c4, %c0_30] : memref<1x12x12x48xf32, #tpu.memory_space<vmem>>, vector<1x8x8x48xf32>
    %30 = vector.shape_cast %29 : vector<1x8x8x48xf32> to vector<8x8x48xf32>
    %31 = vector.shape_cast %30 : vector<8x8x48xf32> to vector<64x48xf32>
    %c4_31 = arith.constant 4 : index
    %c0_32 = arith.constant 0 : index
    %c0_33 = arith.constant 0 : index
    %32 = vector.load %arg2[%c4_31, %c0_32, %c0_33] : memref<25x48x16xf32, #tpu.memory_space<vmem>>, vector<1x48x16xf32>
    %33 = vector.shape_cast %32 : vector<1x48x16xf32> to vector<48x16xf32>
    %cst_34 = arith.constant dense<0.000000e+00> : vector<64x16xf32>
    %34 = tpu.matmul %31, %33, %cst_34 {dimension_numbers = #tpu.dot_dimension_numbers<[1], [0], [0], [1], [0, 0, 1, 1], [], []>} : vector<64x48xf32>, vector<48x16xf32>, vector<64x16xf32> -> vector<64x16xf32>
    %35 = arith.addf %28, %34 : vector<64x16xf32>
    %c0_35 = arith.constant 0 : index
    %c1_36 = arith.constant 1 : index
    %c0_37 = arith.constant 0 : index
    %c0_38 = arith.constant 0 : index
    %36 = vector.load %arg1[%c0_35, %c1_36, %c0_37, %c0_38] : memref<1x12x12x48xf32, #tpu.memory_space<vmem>>, vector<1x8x8x48xf32>
    %37 = vector.shape_cast %36 : vector<1x8x8x48xf32> to vector<8x8x48xf32>
    %38 = vector.shape_cast %37 : vector<8x8x48xf32> to vector<64x48xf32>
    %c5 = arith.constant 5 : index
    %c0_39 = arith.constant 0 : index
    %c0_40 = arith.constant 0 : index
    %39 = vector.load %arg2[%c5, %c0_39, %c0_40] : memref<25x48x16xf32, #tpu.memory_space<vmem>>, vector<1x48x16xf32>
    %40 = vector.shape_cast %39 : vector<1x48x16xf32> to vector<48x16xf32>
    %cst_41 = arith.constant dense<0.000000e+00> : vector<64x16xf32>
    %41 = tpu.matmul %38, %40, %cst_41 {dimension_numbers = #tpu.dot_dimension_numbers<[1], [0], [0], [1], [0, 0, 1, 1], [], []>} : vector<64x48xf32>, vector<48x16xf32>, vector<64x16xf32> -> vector<64x16xf32>
    %42 = arith.addf %35, %41 : vector<64x16xf32>
    %c0_42 = arith.constant 0 : index
    %c1_43 = arith.constant 1 : index
    %c1_44 = arith.constant 1 : index
    %c0_45 = arith.constant 0 : index
    %43 = vector.load %arg1[%c0_42, %c1_43, %c1_44, %c0_45] : memref<1x12x12x48xf32, #tpu.memory_space<vmem>>, vector<1x8x8x48xf32>
    %44 = vector.shape_cast %43 : vector<1x8x8x48xf32> to vector<8x8x48xf32>
    %45 = vector.shape_cast %44 : vector<8x8x48xf32> to vector<64x48xf32>
    %c6 = arith.constant 6 : index
    %c0_46 = arith.constant 0 : index
    %c0_47 = arith.constant 0 : index
    %46 = vector.load %arg2[%c6, %c0_46, %c0_47] : memref<25x48x16xf32, #tpu.memory_space<vmem>>, vector<1x48x16xf32>
    %47 = vector.shape_cast %46 : vector<1x48x16xf32> to vector<48x16xf32>
    %cst_48 = arith.constant dense<0.000000e+00> : vector<64x16xf32>
    %48 = tpu.matmul %45, %47, %cst_48 {dimension_numbers = #tpu.dot_dimension_numbers<[1], [0], [0], [1], [0, 0, 1, 1], [], []>} : vector<64x48xf32>, vector<48x16xf32>, vector<64x16xf32> -> vector<64x16xf32>
    %49 = arith.addf %42, %48 : vector<64x16xf32>
    %c0_49 = arith.constant 0 : index
    %c1_50 = arith.constant 1 : index
    %c2_51 = arith.constant 2 : index
    %c0_52 = arith.constant 0 : index
    %50 = vector.load %arg1[%c0_49, %c1_50, %c2_51, %c0_52] : memref<1x12x12x48xf32, #tpu.memory_space<vmem>>, vector<1x8x8x48xf32>
    %51 = vector.shape_cast %50 : vector<1x8x8x48xf32> to vector<8x8x48xf32>
    %52 = vector.shape_cast %51 : vector<8x8x48xf32> to vector<64x48xf32>
    %c7 = arith.constant 7 : index
    %c0_53 = arith.constant 0 : index
    %c0_54 = arith.constant 0 : index
    %53 = vector.load %arg2[%c7, %c0_53, %c0_54] : memref<25x48x16xf32, #tpu.memory_space<vmem>>, vector<1x48x16xf32>
    %54 = vector.shape_cast %53 : vector<1x48x16xf32> to vector<48x16xf32>
    %cst_55 = arith.constant dense<0.000000e+00> : vector<64x16xf32>
    %55 = tpu.matmul %52, %54, %cst_55 {dimension_numbers = #tpu.dot_dimension_numbers<[1], [0], [0], [1], [0, 0, 1, 1], [], []>} : vector<64x48xf32>, vector<48x16xf32>, vector<64x16xf32> -> vector<64x16xf32>
    %56 = arith.addf %49, %55 : vector<64x16xf32>
    %c0_56 = arith.constant 0 : index
    %c1_57 = arith.constant 1 : index
    %c3_58 = arith.constant 3 : index
    %c0_59 = arith.constant 0 : index
    %57 = vector.load %arg1[%c0_56, %c1_57, %c3_58, %c0_59] : memref<1x12x12x48xf32, #tpu.memory_space<vmem>>, vector<1x8x8x48xf32>
    %58 = vector.shape_cast %57 : vector<1x8x8x48xf32> to vector<8x8x48xf32>
    %59 = vector.shape_cast %58 : vector<8x8x48xf32> to vector<64x48xf32>
    %c8 = arith.constant 8 : index
    %c0_60 = arith.constant 0 : index
    %c0_61 = arith.constant 0 : index
    %60 = vector.load %arg2[%c8, %c0_60, %c0_61] : memref<25x48x16xf32, #tpu.memory_space<vmem>>, vector<1x48x16xf32>
    %61 = vector.shape_cast %60 : vector<1x48x16xf32> to vector<48x16xf32>
    %cst_62 = arith.constant dense<0.000000e+00> : vector<64x16xf32>
    %62 = tpu.matmul %59, %61, %cst_62 {dimension_numbers = #tpu.dot_dimension_numbers<[1], [0], [0], [1], [0, 0, 1, 1], [], []>} : vector<64x48xf32>, vector<48x16xf32>, vector<64x16xf32> -> vector<64x16xf32>
    %63 = arith.addf %56, %62 : vector<64x16xf32>
    %c0_63 = arith.constant 0 : index
    %c1_64 = arith.constant 1 : index
    %c4_65 = arith.constant 4 : index
    %c0_66 = arith.constant 0 : index
    %64 = vector.load %arg1[%c0_63, %c1_64, %c4_65, %c0_66] : memref<1x12x12x48xf32, #tpu.memory_space<vmem>>, vector<1x8x8x48xf32>
    %65 = vector.shape_cast %64 : vector<1x8x8x48xf32> to vector<8x8x48xf32>
    %66 = vector.shape_cast %65 : vector<8x8x48xf32> to vector<64x48xf32>
    %c9 = arith.constant 9 : index
    %c0_67 = arith.constant 0 : index
    %c0_68 = arith.constant 0 : index
    %67 = vector.load %arg2[%c9, %c0_67, %c0_68] : memref<25x48x16xf32, #tpu.memory_space<vmem>>, vector<1x48x16xf32>
    %68 = vector.shape_cast %67 : vector<1x48x16xf32> to vector<48x16xf32>
    %cst_69 = arith.constant dense<0.000000e+00> : vector<64x16xf32>
    %69 = tpu.matmul %66, %68, %cst_69 {dimension_numbers = #tpu.dot_dimension_numbers<[1], [0], [0], [1], [0, 0, 1, 1], [], []>} : vector<64x48xf32>, vector<48x16xf32>, vector<64x16xf32> -> vector<64x16xf32>
    %70 = arith.addf %63, %69 : vector<64x16xf32>
    %c0_70 = arith.constant 0 : index
    %c2_71 = arith.constant 2 : index
    %c0_72 = arith.constant 0 : index
    %c0_73 = arith.constant 0 : index
    %71 = vector.load %arg1[%c0_70, %c2_71, %c0_72, %c0_73] : memref<1x12x12x48xf32, #tpu.memory_space<vmem>>, vector<1x8x8x48xf32>
    %72 = vector.shape_cast %71 : vector<1x8x8x48xf32> to vector<8x8x48xf32>
    %73 = vector.shape_cast %72 : vector<8x8x48xf32> to vector<64x48xf32>
    %c10 = arith.constant 10 : index
    %c0_74 = arith.constant 0 : index
    %c0_75 = arith.constant 0 : index
    %74 = vector.load %arg2[%c10, %c0_74, %c0_75] : memref<25x48x16xf32, #tpu.memory_space<vmem>>, vector<1x48x16xf32>
    %75 = vector.shape_cast %74 : vector<1x48x16xf32> to vector<48x16xf32>
    %cst_76 = arith.constant dense<0.000000e+00> : vector<64x16xf32>
    %76 = tpu.matmul %73, %75, %cst_76 {dimension_numbers = #tpu.dot_dimension_numbers<[1], [0], [0], [1], [0, 0, 1, 1], [], []>} : vector<64x48xf32>, vector<48x16xf32>, vector<64x16xf32> -> vector<64x16xf32>
    %77 = arith.addf %70, %76 : vector<64x16xf32>
    %c0_77 = arith.constant 0 : index
    %c2_78 = arith.constant 2 : index
    %c1_79 = arith.constant 1 : index
    %c0_80 = arith.constant 0 : index
    %78 = vector.load %arg1[%c0_77, %c2_78, %c1_79, %c0_80] : memref<1x12x12x48xf32, #tpu.memory_space<vmem>>, vector<1x8x8x48xf32>
    %79 = vector.shape_cast %78 : vector<1x8x8x48xf32> to vector<8x8x48xf32>
    %80 = vector.shape_cast %79 : vector<8x8x48xf32> to vector<64x48xf32>
    %c11 = arith.constant 11 : index
    %c0_81 = arith.constant 0 : index
    %c0_82 = arith.constant 0 : index
    %81 = vector.load %arg2[%c11, %c0_81, %c0_82] : memref<25x48x16xf32, #tpu.memory_space<vmem>>, vector<1x48x16xf32>
    %82 = vector.shape_cast %81 : vector<1x48x16xf32> to vector<48x16xf32>
    %cst_83 = arith.constant dense<0.000000e+00> : vector<64x16xf32>
    %83 = tpu.matmul %80, %82, %cst_83 {dimension_numbers = #tpu.dot_dimension_numbers<[1], [0], [0], [1], [0, 0, 1, 1], [], []>} : vector<64x48xf32>, vector<48x16xf32>, vector<64x16xf32> -> vector<64x16xf32>
    %84 = arith.addf %77, %83 : vector<64x16xf32>
    %c0_84 = arith.constant 0 : index
    %c2_85 = arith.constant 2 : index
    %c2_86 = arith.constant 2 : index
    %c0_87 = arith.constant 0 : index
    %85 = vector.load %arg1[%c0_84, %c2_85, %c2_86, %c0_87] : memref<1x12x12x48xf32, #tpu.memory_space<vmem>>, vector<1x8x8x48xf32>
    %86 = vector.shape_cast %85 : vector<1x8x8x48xf32> to vector<8x8x48xf32>
    %87 = vector.shape_cast %86 : vector<8x8x48xf32> to vector<64x48xf32>
    %c12 = arith.constant 12 : index
    %c0_88 = arith.constant 0 : index
    %c0_89 = arith.constant 0 : index
    %88 = vector.load %arg2[%c12, %c0_88, %c0_89] : memref<25x48x16xf32, #tpu.memory_space<vmem>>, vector<1x48x16xf32>
    %89 = vector.shape_cast %88 : vector<1x48x16xf32> to vector<48x16xf32>
    %cst_90 = arith.constant dense<0.000000e+00> : vector<64x16xf32>
    %90 = tpu.matmul %87, %89, %cst_90 {dimension_numbers = #tpu.dot_dimension_numbers<[1], [0], [0], [1], [0, 0, 1, 1], [], []>} : vector<64x48xf32>, vector<48x16xf32>, vector<64x16xf32> -> vector<64x16xf32>
    %91 = arith.addf %84, %90 : vector<64x16xf32>
    %c0_91 = arith.constant 0 : index
    %c2_92 = arith.constant 2 : index
    %c3_93 = arith.constant 3 : index
    %c0_94 = arith.constant 0 : index
    %92 = vector.load %arg1[%c0_91, %c2_92, %c3_93, %c0_94] : memref<1x12x12x48xf32, #tpu.memory_space<vmem>>, vector<1x8x8x48xf32>
    %93 = vector.shape_cast %92 : vector<1x8x8x48xf32> to vector<8x8x48xf32>
    %94 = vector.shape_cast %93 : vector<8x8x48xf32> to vector<64x48xf32>
    %c13 = arith.constant 13 : index
    %c0_95 = arith.constant 0 : index
    %c0_96 = arith.constant 0 : index
    %95 = vector.load %arg2[%c13, %c0_95, %c0_96] : memref<25x48x16xf32, #tpu.memory_space<vmem>>, vector<1x48x16xf32>
    %96 = vector.shape_cast %95 : vector<1x48x16xf32> to vector<48x16xf32>
    %cst_97 = arith.constant dense<0.000000e+00> : vector<64x16xf32>
    %97 = tpu.matmul %94, %96, %cst_97 {dimension_numbers = #tpu.dot_dimension_numbers<[1], [0], [0], [1], [0, 0, 1, 1], [], []>} : vector<64x48xf32>, vector<48x16xf32>, vector<64x16xf32> -> vector<64x16xf32>
    %98 = arith.addf %91, %97 : vector<64x16xf32>
    %c0_98 = arith.constant 0 : index
    %c2_99 = arith.constant 2 : index
    %c4_100 = arith.constant 4 : index
    %c0_101 = arith.constant 0 : index
    %99 = vector.load %arg1[%c0_98, %c2_99, %c4_100, %c0_101] : memref<1x12x12x48xf32, #tpu.memory_space<vmem>>, vector<1x8x8x48xf32>
    %100 = vector.shape_cast %99 : vector<1x8x8x48xf32> to vector<8x8x48xf32>
    %101 = vector.shape_cast %100 : vector<8x8x48xf32> to vector<64x48xf32>
    %c14 = arith.constant 14 : index
    %c0_102 = arith.constant 0 : index
    %c0_103 = arith.constant 0 : index
    %102 = vector.load %arg2[%c14, %c0_102, %c0_103] : memref<25x48x16xf32, #tpu.memory_space<vmem>>, vector<1x48x16xf32>
    %103 = vector.shape_cast %102 : vector<1x48x16xf32> to vector<48x16xf32>
    %cst_104 = arith.constant dense<0.000000e+00> : vector<64x16xf32>
    %104 = tpu.matmul %101, %103, %cst_104 {dimension_numbers = #tpu.dot_dimension_numbers<[1], [0], [0], [1], [0, 0, 1, 1], [], []>} : vector<64x48xf32>, vector<48x16xf32>, vector<64x16xf32> -> vector<64x16xf32>
    %105 = arith.addf %98, %104 : vector<64x16xf32>
    %c0_105 = arith.constant 0 : index
    %c3_106 = arith.constant 3 : index
    %c0_107 = arith.constant 0 : index
    %c0_108 = arith.constant 0 : index
    %106 = vector.load %arg1[%c0_105, %c3_106, %c0_107, %c0_108] : memref<1x12x12x48xf32, #tpu.memory_space<vmem>>, vector<1x8x8x48xf32>
    %107 = vector.shape_cast %106 : vector<1x8x8x48xf32> to vector<8x8x48xf32>
    %108 = vector.shape_cast %107 : vector<8x8x48xf32> to vector<64x48xf32>
    %c15 = arith.constant 15 : index
    %c0_109 = arith.constant 0 : index
    %c0_110 = arith.constant 0 : index
    %109 = vector.load %arg2[%c15, %c0_109, %c0_110] : memref<25x48x16xf32, #tpu.memory_space<vmem>>, vector<1x48x16xf32>
    %110 = vector.shape_cast %109 : vector<1x48x16xf32> to vector<48x16xf32>
    %cst_111 = arith.constant dense<0.000000e+00> : vector<64x16xf32>
    %111 = tpu.matmul %108, %110, %cst_111 {dimension_numbers = #tpu.dot_dimension_numbers<[1], [0], [0], [1], [0, 0, 1, 1], [], []>} : vector<64x48xf32>, vector<48x16xf32>, vector<64x16xf32> -> vector<64x16xf32>
    %112 = arith.addf %105, %111 : vector<64x16xf32>
    %c0_112 = arith.constant 0 : index
    %c3_113 = arith.constant 3 : index
    %c1_114 = arith.constant 1 : index
    %c0_115 = arith.constant 0 : index
    %113 = vector.load %arg1[%c0_112, %c3_113, %c1_114, %c0_115] : memref<1x12x12x48xf32, #tpu.memory_space<vmem>>, vector<1x8x8x48xf32>
    %114 = vector.shape_cast %113 : vector<1x8x8x48xf32> to vector<8x8x48xf32>
    %115 = vector.shape_cast %114 : vector<8x8x48xf32> to vector<64x48xf32>
    %c16 = arith.constant 16 : index
    %c0_116 = arith.constant 0 : index
    %c0_117 = arith.constant 0 : index
    %116 = vector.load %arg2[%c16, %c0_116, %c0_117] : memref<25x48x16xf32, #tpu.memory_space<vmem>>, vector<1x48x16xf32>
    %117 = vector.shape_cast %116 : vector<1x48x16xf32> to vector<48x16xf32>
    %cst_118 = arith.constant dense<0.000000e+00> : vector<64x16xf32>
    %118 = tpu.matmul %115, %117, %cst_118 {dimension_numbers = #tpu.dot_dimension_numbers<[1], [0], [0], [1], [0, 0, 1, 1], [], []>} : vector<64x48xf32>, vector<48x16xf32>, vector<64x16xf32> -> vector<64x16xf32>
    %119 = arith.addf %112, %118 : vector<64x16xf32>
    %c0_119 = arith.constant 0 : index
    %c3_120 = arith.constant 3 : index
    %c2_121 = arith.constant 2 : index
    %c0_122 = arith.constant 0 : index
    %120 = vector.load %arg1[%c0_119, %c3_120, %c2_121, %c0_122] : memref<1x12x12x48xf32, #tpu.memory_space<vmem>>, vector<1x8x8x48xf32>
    %121 = vector.shape_cast %120 : vector<1x8x8x48xf32> to vector<8x8x48xf32>
    %122 = vector.shape_cast %121 : vector<8x8x48xf32> to vector<64x48xf32>
    %c17 = arith.constant 17 : index
    %c0_123 = arith.constant 0 : index
    %c0_124 = arith.constant 0 : index
    %123 = vector.load %arg2[%c17, %c0_123, %c0_124] : memref<25x48x16xf32, #tpu.memory_space<vmem>>, vector<1x48x16xf32>
    %124 = vector.shape_cast %123 : vector<1x48x16xf32> to vector<48x16xf32>
    %cst_125 = arith.constant dense<0.000000e+00> : vector<64x16xf32>
    %125 = tpu.matmul %122, %124, %cst_125 {dimension_numbers = #tpu.dot_dimension_numbers<[1], [0], [0], [1], [0, 0, 1, 1], [], []>} : vector<64x48xf32>, vector<48x16xf32>, vector<64x16xf32> -> vector<64x16xf32>
    %126 = arith.addf %119, %125 : vector<64x16xf32>
    %c0_126 = arith.constant 0 : index
    %c3_127 = arith.constant 3 : index
    %c3_128 = arith.constant 3 : index
    %c0_129 = arith.constant 0 : index
    %127 = vector.load %arg1[%c0_126, %c3_127, %c3_128, %c0_129] : memref<1x12x12x48xf32, #tpu.memory_space<vmem>>, vector<1x8x8x48xf32>
    %128 = vector.shape_cast %127 : vector<1x8x8x48xf32> to vector<8x8x48xf32>
    %129 = vector.shape_cast %128 : vector<8x8x48xf32> to vector<64x48xf32>
    %c18 = arith.constant 18 : index
    %c0_130 = arith.constant 0 : index
    %c0_131 = arith.constant 0 : index
    %130 = vector.load %arg2[%c18, %c0_130, %c0_131] : memref<25x48x16xf32, #tpu.memory_space<vmem>>, vector<1x48x16xf32>
    %131 = vector.shape_cast %130 : vector<1x48x16xf32> to vector<48x16xf32>
    %cst_132 = arith.constant dense<0.000000e+00> : vector<64x16xf32>
    %132 = tpu.matmul %129, %131, %cst_132 {dimension_numbers = #tpu.dot_dimension_numbers<[1], [0], [0], [1], [0, 0, 1, 1], [], []>} : vector<64x48xf32>, vector<48x16xf32>, vector<64x16xf32> -> vector<64x16xf32>
    %133 = arith.addf %126, %132 : vector<64x16xf32>
    %c0_133 = arith.constant 0 : index
    %c3_134 = arith.constant 3 : index
    %c4_135 = arith.constant 4 : index
    %c0_136 = arith.constant 0 : index
    %134 = vector.load %arg1[%c0_133, %c3_134, %c4_135, %c0_136] : memref<1x12x12x48xf32, #tpu.memory_space<vmem>>, vector<1x8x8x48xf32>
    %135 = vector.shape_cast %134 : vector<1x8x8x48xf32> to vector<8x8x48xf32>
    %136 = vector.shape_cast %135 : vector<8x8x48xf32> to vector<64x48xf32>
    %c19 = arith.constant 19 : index
    %c0_137 = arith.constant 0 : index
    %c0_138 = arith.constant 0 : index
    %137 = vector.load %arg2[%c19, %c0_137, %c0_138] : memref<25x48x16xf32, #tpu.memory_space<vmem>>, vector<1x48x16xf32>
    %138 = vector.shape_cast %137 : vector<1x48x16xf32> to vector<48x16xf32>
    %cst_139 = arith.constant dense<0.000000e+00> : vector<64x16xf32>
    %139 = tpu.matmul %136, %138, %cst_139 {dimension_numbers = #tpu.dot_dimension_numbers<[1], [0], [0], [1], [0, 0, 1, 1], [], []>} : vector<64x48xf32>, vector<48x16xf32>, vector<64x16xf32> -> vector<64x16xf32>
    %140 = arith.addf %133, %139 : vector<64x16xf32>
    %c0_140 = arith.constant 0 : index
    %c4_141 = arith.constant 4 : index
    %c0_142 = arith.constant 0 : index
    %c0_143 = arith.constant 0 : index
    %141 = vector.load %arg1[%c0_140, %c4_141, %c0_142, %c0_143] : memref<1x12x12x48xf32, #tpu.memory_space<vmem>>, vector<1x8x8x48xf32>
    %142 = vector.shape_cast %141 : vector<1x8x8x48xf32> to vector<8x8x48xf32>
    %143 = vector.shape_cast %142 : vector<8x8x48xf32> to vector<64x48xf32>
    %c20 = arith.constant 20 : index
    %c0_144 = arith.constant 0 : index
    %c0_145 = arith.constant 0 : index
    %144 = vector.load %arg2[%c20, %c0_144, %c0_145] : memref<25x48x16xf32, #tpu.memory_space<vmem>>, vector<1x48x16xf32>
    %145 = vector.shape_cast %144 : vector<1x48x16xf32> to vector<48x16xf32>
    %cst_146 = arith.constant dense<0.000000e+00> : vector<64x16xf32>
    %146 = tpu.matmul %143, %145, %cst_146 {dimension_numbers = #tpu.dot_dimension_numbers<[1], [0], [0], [1], [0, 0, 1, 1], [], []>} : vector<64x48xf32>, vector<48x16xf32>, vector<64x16xf32> -> vector<64x16xf32>
    %147 = arith.addf %140, %146 : vector<64x16xf32>
    %c0_147 = arith.constant 0 : index
    %c4_148 = arith.constant 4 : index
    %c1_149 = arith.constant 1 : index
    %c0_150 = arith.constant 0 : index
    %148 = vector.load %arg1[%c0_147, %c4_148, %c1_149, %c0_150] : memref<1x12x12x48xf32, #tpu.memory_space<vmem>>, vector<1x8x8x48xf32>
    %149 = vector.shape_cast %148 : vector<1x8x8x48xf32> to vector<8x8x48xf32>
    %150 = vector.shape_cast %149 : vector<8x8x48xf32> to vector<64x48xf32>
    %c21 = arith.constant 21 : index
    %c0_151 = arith.constant 0 : index
    %c0_152 = arith.constant 0 : index
    %151 = vector.load %arg2[%c21, %c0_151, %c0_152] : memref<25x48x16xf32, #tpu.memory_space<vmem>>, vector<1x48x16xf32>
    %152 = vector.shape_cast %151 : vector<1x48x16xf32> to vector<48x16xf32>
    %cst_153 = arith.constant dense<0.000000e+00> : vector<64x16xf32>
    %153 = tpu.matmul %150, %152, %cst_153 {dimension_numbers = #tpu.dot_dimension_numbers<[1], [0], [0], [1], [0, 0, 1, 1], [], []>} : vector<64x48xf32>, vector<48x16xf32>, vector<64x16xf32> -> vector<64x16xf32>
    %154 = arith.addf %147, %153 : vector<64x16xf32>
    %c0_154 = arith.constant 0 : index
    %c4_155 = arith.constant 4 : index
    %c2_156 = arith.constant 2 : index
    %c0_157 = arith.constant 0 : index
    %155 = vector.load %arg1[%c0_154, %c4_155, %c2_156, %c0_157] : memref<1x12x12x48xf32, #tpu.memory_space<vmem>>, vector<1x8x8x48xf32>
    %156 = vector.shape_cast %155 : vector<1x8x8x48xf32> to vector<8x8x48xf32>
    %157 = vector.shape_cast %156 : vector<8x8x48xf32> to vector<64x48xf32>
    %c22 = arith.constant 22 : index
    %c0_158 = arith.constant 0 : index
    %c0_159 = arith.constant 0 : index
    %158 = vector.load %arg2[%c22, %c0_158, %c0_159] : memref<25x48x16xf32, #tpu.memory_space<vmem>>, vector<1x48x16xf32>
    %159 = vector.shape_cast %158 : vector<1x48x16xf32> to vector<48x16xf32>
    %cst_160 = arith.constant dense<0.000000e+00> : vector<64x16xf32>
    %160 = tpu.matmul %157, %159, %cst_160 {dimension_numbers = #tpu.dot_dimension_numbers<[1], [0], [0], [1], [0, 0, 1, 1], [], []>} : vector<64x48xf32>, vector<48x16xf32>, vector<64x16xf32> -> vector<64x16xf32>
    %161 = arith.addf %154, %160 : vector<64x16xf32>
    %c0_161 = arith.constant 0 : index
    %c4_162 = arith.constant 4 : index
    %c3_163 = arith.constant 3 : index
    %c0_164 = arith.constant 0 : index
    %162 = vector.load %arg1[%c0_161, %c4_162, %c3_163, %c0_164] : memref<1x12x12x48xf32, #tpu.memory_space<vmem>>, vector<1x8x8x48xf32>
    %163 = vector.shape_cast %162 : vector<1x8x8x48xf32> to vector<8x8x48xf32>
    %164 = vector.shape_cast %163 : vector<8x8x48xf32> to vector<64x48xf32>
    %c23 = arith.constant 23 : index
    %c0_165 = arith.constant 0 : index
    %c0_166 = arith.constant 0 : index
    %165 = vector.load %arg2[%c23, %c0_165, %c0_166] : memref<25x48x16xf32, #tpu.memory_space<vmem>>, vector<1x48x16xf32>
    %166 = vector.shape_cast %165 : vector<1x48x16xf32> to vector<48x16xf32>
    %cst_167 = arith.constant dense<0.000000e+00> : vector<64x16xf32>
    %167 = tpu.matmul %164, %166, %cst_167 {dimension_numbers = #tpu.dot_dimension_numbers<[1], [0], [0], [1], [0, 0, 1, 1], [], []>} : vector<64x48xf32>, vector<48x16xf32>, vector<64x16xf32> -> vector<64x16xf32>
    %168 = arith.addf %161, %167 : vector<64x16xf32>
    %c0_168 = arith.constant 0 : index
    %c4_169 = arith.constant 4 : index
    %c4_170 = arith.constant 4 : index
    %c0_171 = arith.constant 0 : index
    %169 = vector.load %arg1[%c0_168, %c4_169, %c4_170, %c0_171] : memref<1x12x12x48xf32, #tpu.memory_space<vmem>>, vector<1x8x8x48xf32>
    %170 = vector.shape_cast %169 : vector<1x8x8x48xf32> to vector<8x8x48xf32>
    %171 = vector.shape_cast %170 : vector<8x8x48xf32> to vector<64x48xf32>
    %c24 = arith.constant 24 : index
    %c0_172 = arith.constant 0 : index
    %c0_173 = arith.constant 0 : index
    %172 = vector.load %arg2[%c24, %c0_172, %c0_173] : memref<25x48x16xf32, #tpu.memory_space<vmem>>, vector<1x48x16xf32>
    %173 = vector.shape_cast %172 : vector<1x48x16xf32> to vector<48x16xf32>
    %cst_174 = arith.constant dense<0.000000e+00> : vector<64x16xf32>
    %174 = tpu.matmul %171, %173, %cst_174 {dimension_numbers = #tpu.dot_dimension_numbers<[1], [0], [0], [1], [0, 0, 1, 1], [], []>} : vector<64x48xf32>, vector<48x16xf32>, vector<64x16xf32> -> vector<64x16xf32>
    %175 = arith.addf %168, %174 : vector<64x16xf32>
    %176 = vector.extract_strided_slice %175 {offsets = [0, 0], sizes = [64, 8], strides = [1, 1]} : vector<64x16xf32> to vector<64x8xf32>
    %177 = vector.extract_strided_slice %175 {offsets = [0, 8], sizes = [64, 8], strides = [1, 1]} : vector<64x16xf32> to vector<64x8xf32>
    %c0_175 = arith.constant 0 : index
    %c0_176 = arith.constant 0 : index
    %c0_177 = arith.constant 0 : index
    %c0_178 = arith.constant 0 : index
    %178 = vector.load %arg3[%c0_175, %c0_176, %c0_177, %c0_178] : memref<1x2x64x8xf32, #tpu.memory_space<vmem>>, vector<1x1x64x8xf32>
    %179 = vector.shape_cast %178 : vector<1x1x64x8xf32> to vector<64x8xf32>
    %180 = vector.shape_cast %176 : vector<64x8xf32> to vector<1x1x64x8xf32>
    tpu.vector_store %arg3[%c0_175, %c0_176, %c0_177, %c0_178], %180 {strides = array<i32>} : memref<1x2x64x8xf32, #tpu.memory_space<vmem>>, vector<1x1x64x8xf32>,
    %c0_179 = arith.constant 0 : index
    %c1_180 = arith.constant 1 : index
    %c0_181 = arith.constant 0 : index
    %c0_182 = arith.constant 0 : index
    %181 = vector.load %arg3[%c0_179, %c1_180, %c0_181, %c0_182] : memref<1x2x64x8xf32, #tpu.memory_space<vmem>>, vector<1x1x64x8xf32>
    %182 = vector.shape_cast %181 : vector<1x1x64x8xf32> to vector<64x8xf32>
    %183 = vector.shape_cast %177 : vector<64x8xf32> to vector<1x1x64x8xf32>
    tpu.vector_store %arg3[%c0_179, %c1_180, %c0_181, %c0_182], %183 {strides = array<i32>} : memref<1x2x64x8xf32, #tpu.memory_space<vmem>>, vector<1x1x64x8xf32>,
    %cst_183 = arith.constant dense<0.000000e+00> : vector<8xf32>
    %184 = vector.multi_reduction <add>, %176, %cst_183 [0] : vector<64x8xf32> to vector<8xf32>
    %185 = vector.shape_cast %184 : vector<8xf32> to vector<1x8xf32>
    %c0_184 = arith.constant 0 : index
    %c0_185 = arith.constant 0 : index
    %c0_186 = arith.constant 0 : index
    %186 = vector.load %arg4[%c0_184, %c0_185, %c0_186] : memref<1x4x8xf32, #tpu.memory_space<vmem>>, vector<1x1x8xf32>
    %187 = vector.shape_cast %186 : vector<1x1x8xf32> to vector<1x8xf32>
    %188 = vector.shape_cast %185 : vector<1x8xf32> to vector<1x1x8xf32>
    tpu.vector_store %arg4[%c0_184, %c0_185, %c0_186], %188 {strides = array<i32>} : memref<1x4x8xf32, #tpu.memory_space<vmem>>, vector<1x1x8xf32>,
    %189 = arith.mulf %176, %176 : vector<64x8xf32>
    %cst_187 = arith.constant dense<0.000000e+00> : vector<8xf32>
    %190 = vector.multi_reduction <add>, %189, %cst_187 [0] : vector<64x8xf32> to vector<8xf32>
    %191 = vector.shape_cast %190 : vector<8xf32> to vector<1x8xf32>
    %c0_188 = arith.constant 0 : index
    %c1_189 = arith.constant 1 : index
    %c0_190 = arith.constant 0 : index
    %192 = vector.load %arg4[%c0_188, %c1_189, %c0_190] : memref<1x4x8xf32, #tpu.memory_space<vmem>>, vector<1x1x8xf32>
    %193 = vector.shape_cast %192 : vector<1x1x8xf32> to vector<1x8xf32>
    %194 = vector.shape_cast %191 : vector<1x8xf32> to vector<1x1x8xf32>
    tpu.vector_store %arg4[%c0_188, %c1_189, %c0_190], %194 {strides = array<i32>} : memref<1x4x8xf32, #tpu.memory_space<vmem>>, vector<1x1x8xf32>,
    %cst_191 = arith.constant dense<0.000000e+00> : vector<8xf32>
    %195 = vector.multi_reduction <add>, %177, %cst_191 [0] : vector<64x8xf32> to vector<8xf32>
    %196 = vector.shape_cast %195 : vector<8xf32> to vector<1x8xf32>
    %c0_192 = arith.constant 0 : index
    %c2_193 = arith.constant 2 : index
    %c0_194 = arith.constant 0 : index
    %197 = vector.load %arg4[%c0_192, %c2_193, %c0_194] : memref<1x4x8xf32, #tpu.memory_space<vmem>>, vector<1x1x8xf32>
    %198 = vector.shape_cast %197 : vector<1x1x8xf32> to vector<1x8xf32>
    %199 = vector.shape_cast %196 : vector<1x8xf32> to vector<1x1x8xf32>
    tpu.vector_store %arg4[%c0_192, %c2_193, %c0_194], %199 {strides = array<i32>} : memref<1x4x8xf32, #tpu.memory_space<vmem>>, vector<1x1x8xf32>,
    %200 = arith.mulf %177, %177 : vector<64x8xf32>
    %cst_195 = arith.constant dense<0.000000e+00> : vector<8xf32>
    %201 = vector.multi_reduction <add>, %200, %cst_195 [0] : vector<64x8xf32> to vector<8xf32>
    %202 = vector.shape_cast %201 : vector<8xf32> to vector<1x8xf32>
    %c0_196 = arith.constant 0 : index
    %c3_197 = arith.constant 3 : index
    %c0_198 = arith.constant 0 : index
    %203 = vector.load %arg4[%c0_196, %c3_197, %c0_198] : memref<1x4x8xf32, #tpu.memory_space<vmem>>, vector<1x1x8xf32>
    %204 = vector.shape_cast %203 : vector<1x1x8xf32> to vector<1x8xf32>
    %205 = vector.shape_cast %202 : vector<1x8xf32> to vector<1x1x8xf32>
    tpu.vector_store %arg4[%c0_196, %c3_197, %c0_198], %205 {strides = array<i32>} : memref<1x4x8xf32, #tpu.memory_space<vmem>>, vector<1x1x8xf32>,
    return
  }
  func.func @transform_0(%arg0: i32) -> (i32, i32, i32, i32) {
    %c0_i32 = arith.constant 0 : i32
    %c0_i32_0 = arith.constant 0 : i32
    %c0_i32_1 = arith.constant 0 : i32
    %c0_i32_2 = arith.constant 0 : i32
    return %arg0, %c0_i32, %c0_i32_0, %c0_i32_1 : i32, i32, i32, i32
  }
  func.func @transform_1(%arg0: i32) -> (i32, i32, i32) {
    %c0_i32 = arith.constant 0 : i32
    %c0_i32_0 = arith.constant 0 : i32
    %c0_i32_1 = arith.constant 0 : i32
    %c0_i32_2 = arith.constant 0 : i32
    return %c0_i32, %c0_i32_0, %c0_i32_1 : i32, i32, i32
  }
  func.func @transform_2(%arg0: i32) -> (i32, i32, i32, i32) {
    %c0_i32 = arith.constant 0 : i32
    %c0_i32_0 = arith.constant 0 : i32
    %c0_i32_1 = arith.constant 0 : i32
    %c0_i32_2 = arith.constant 0 : i32
    return %arg0, %c0_i32, %c0_i32_0, %c0_i32_1 : i32, i32, i32, i32
  }
  func.func @transform_3(%arg0: i32) -> (i32, i32, i32) {
    %c0_i32 = arith.constant 0 : i32
    %c0_i32_0 = arith.constant 0 : i32
    %c0_i32_1 = arith.constant 0 : i32
    return %arg0, %c0_i32, %c0_i32_0 : i32, i32, i32
  }
}

module attributes {stable_mosaic.version = 11 : i64} {
  func.func @_head_kernel(%arg0: i32, %arg1: memref<10xf32, #tpu.memory_space<smem>>, %arg2: memref<1x2x64x8xf32, #tpu.memory_space<vmem>>, %arg3: memref<1x2x64x8xf32, #tpu.memory_space<vmem>>) attributes {dimension_semantics = [#tpu.dimension_semantics<parallel>], iteration_bounds = array<i64: 2>, scalar_prefetch = 1 : i64, scratch_operands = 0 : i64, tpu.core_type = #tpu.core_type<tc>, window_params = [{transform_indices = @transform_0, window_bounds = array<i64: 1, 2, 64, 8>}, {transform_indices = @transform_1, window_bounds = array<i64: 1, 2, 64, 8>}]} {
    %c0 = arith.constant 0 : index
    %0 = memref.load %arg1[%c0] : memref<10xf32, #tpu.memory_space<smem>>
    %c1 = arith.constant 1 : index
    %1 = memref.load %arg1[%c1] : memref<10xf32, #tpu.memory_space<smem>>
    %c2 = arith.constant 2 : index
    %2 = memref.load %arg1[%c2] : memref<10xf32, #tpu.memory_space<smem>>
    %c3 = arith.constant 3 : index
    %3 = memref.load %arg1[%c3] : memref<10xf32, #tpu.memory_space<smem>>
    %c4 = arith.constant 4 : index
    %4 = memref.load %arg1[%c4] : memref<10xf32, #tpu.memory_space<smem>>
    %c5 = arith.constant 5 : index
    %5 = memref.load %arg1[%c5] : memref<10xf32, #tpu.memory_space<smem>>
    %c6 = arith.constant 6 : index
    %6 = memref.load %arg1[%c6] : memref<10xf32, #tpu.memory_space<smem>>
    %c7 = arith.constant 7 : index
    %7 = memref.load %arg1[%c7] : memref<10xf32, #tpu.memory_space<smem>>
    %c8 = arith.constant 8 : index
    %8 = memref.load %arg1[%c8] : memref<10xf32, #tpu.memory_space<smem>>
    %c9 = arith.constant 9 : index
    %9 = memref.load %arg1[%c9] : memref<10xf32, #tpu.memory_space<smem>>
    %c0_0 = arith.constant 0 : index
    %c0_1 = arith.constant 0 : index
    %c0_2 = arith.constant 0 : index
    %c0_3 = arith.constant 0 : index
    %10 = vector.load %arg2[%c0_0, %c0_1, %c0_2, %c0_3] : memref<1x2x64x8xf32, #tpu.memory_space<vmem>>, vector<1x1x64x8xf32>
    %11 = vector.shape_cast %10 : vector<1x1x64x8xf32> to vector<64x8xf32>
    %12 = vector.broadcast %0 : f32 to vector<64x8xf32>
    %13 = arith.mulf %11, %12 : vector<64x8xf32>
    %14 = vector.broadcast %2 : f32 to vector<64x8xf32>
    %15 = arith.addf %13, %14 : vector<64x8xf32>
    %cst = arith.constant 0.000000e+00 : f32
    %16 = vector.broadcast %cst : f32 to vector<64x8xf32>
    %17 = arith.maximumf %15, %16 : vector<64x8xf32>
    %c0_4 = arith.constant 0 : index
    %c1_5 = arith.constant 1 : index
    %c0_6 = arith.constant 0 : index
    %c0_7 = arith.constant 0 : index
    %18 = vector.load %arg2[%c0_4, %c1_5, %c0_6, %c0_7] : memref<1x2x64x8xf32, #tpu.memory_space<vmem>>, vector<1x1x64x8xf32>
    %19 = vector.shape_cast %18 : vector<1x1x64x8xf32> to vector<64x8xf32>
    %20 = vector.broadcast %1 : f32 to vector<64x8xf32>
    %21 = arith.mulf %19, %20 : vector<64x8xf32>
    %22 = vector.broadcast %3 : f32 to vector<64x8xf32>
    %23 = arith.addf %21, %22 : vector<64x8xf32>
    %cst_8 = arith.constant 0.000000e+00 : f32
    %24 = vector.broadcast %cst_8 : f32 to vector<64x8xf32>
    %25 = arith.maximumf %23, %24 : vector<64x8xf32>
    %26 = vector.broadcast %4 : f32 to vector<64x8xf32>
    %27 = arith.mulf %17, %26 : vector<64x8xf32>
    %28 = vector.broadcast %5 : f32 to vector<64x8xf32>
    %29 = arith.mulf %25, %28 : vector<64x8xf32>
    %30 = arith.addf %27, %29 : vector<64x8xf32>
    %31 = vector.broadcast %8 : f32 to vector<64x8xf32>
    %32 = arith.addf %30, %31 : vector<64x8xf32>
    %33 = vector.broadcast %6 : f32 to vector<64x8xf32>
    %34 = arith.mulf %17, %33 : vector<64x8xf32>
    %35 = vector.broadcast %7 : f32 to vector<64x8xf32>
    %36 = arith.mulf %25, %35 : vector<64x8xf32>
    %37 = arith.addf %34, %36 : vector<64x8xf32>
    %38 = vector.broadcast %9 : f32 to vector<64x8xf32>
    %39 = arith.addf %37, %38 : vector<64x8xf32>
    %40 = arith.subf %39, %32 : vector<64x8xf32>
    %41 = math.exp %40 : vector<64x8xf32>
    %cst_9 = arith.constant 1.000000e+00 : f32
    %42 = vector.broadcast %cst_9 : f32 to vector<64x8xf32>
    %43 = arith.addf %42, %41 : vector<64x8xf32>
    %cst_10 = arith.constant 1.000000e+00 : f32
    %44 = vector.broadcast %cst_10 : f32 to vector<64x8xf32>
    %45 = arith.divf %44, %43 : vector<64x8xf32>
    %c0_11 = arith.constant 0 : index
    %c0_12 = arith.constant 0 : index
    %c0_13 = arith.constant 0 : index
    %c0_14 = arith.constant 0 : index
    %46 = vector.load %arg3[%c0_11, %c0_12, %c0_13, %c0_14] : memref<1x2x64x8xf32, #tpu.memory_space<vmem>>, vector<1x1x64x8xf32>
    %47 = vector.shape_cast %46 : vector<1x1x64x8xf32> to vector<64x8xf32>
    %48 = vector.shape_cast %45 : vector<64x8xf32> to vector<1x1x64x8xf32>
    tpu.vector_store %arg3[%c0_11, %c0_12, %c0_13, %c0_14], %48 {strides = array<i32>} : memref<1x2x64x8xf32, #tpu.memory_space<vmem>>, vector<1x1x64x8xf32>,
    %cst_15 = arith.constant 1.000000e+00 : f32
    %49 = vector.broadcast %cst_15 : f32 to vector<64x8xf32>
    %50 = arith.subf %49, %45 : vector<64x8xf32>
    %c0_16 = arith.constant 0 : index
    %c1_17 = arith.constant 1 : index
    %c0_18 = arith.constant 0 : index
    %c0_19 = arith.constant 0 : index
    %51 = vector.load %arg3[%c0_16, %c1_17, %c0_18, %c0_19] : memref<1x2x64x8xf32, #tpu.memory_space<vmem>>, vector<1x1x64x8xf32>
    %52 = vector.shape_cast %51 : vector<1x1x64x8xf32> to vector<64x8xf32>
    %53 = vector.shape_cast %50 : vector<64x8xf32> to vector<1x1x64x8xf32>
    tpu.vector_store %arg3[%c0_16, %c1_17, %c0_18, %c0_19], %53 {strides = array<i32>} : memref<1x2x64x8xf32, #tpu.memory_space<vmem>>, vector<1x1x64x8xf32>,
    return
  }
  func.func @transform_0(%arg0: i32, %arg1: memref<10xf32, #tpu.memory_space<smem>>) -> (i32, i32, i32, i32) {
    %c0_i32 = arith.constant 0 : i32
    %c0_i32_0 = arith.constant 0 : i32
    %c0_i32_1 = arith.constant 0 : i32
    %c0_i32_2 = arith.constant 0 : i32
    return %arg0, %c0_i32, %c0_i32_0, %c0_i32_1 : i32, i32, i32, i32
  }
  func.func @transform_1(%arg0: i32, %arg1: memref<10xf32, #tpu.memory_space<smem>>) -> (i32, i32, i32, i32) {
    %c0_i32 = arith.constant 0 : i32
    %c0_i32_0 = arith.constant 0 : i32
    %c0_i32_1 = arith.constant 0 : i32
    %c0_i32_2 = arith.constant 0 : i32
    return %arg0, %c0_i32, %c0_i32_0, %c0_i32_1 : i32, i32, i32, i32
  }
}

</mosaic_0001>

<llo_original>
// kernel: output_transition.3
$region0: #{output_transition.3}
  #allocation0 [shape = 'u32[]', space=smem, size = 0x4, offset = 0x4, fixed_abs, tag = 'smem constant byte address 0x4 - core index']
  #allocation1 [shape = 'u32[144,128]{1,0:T(1,128)}', space=vmem, size = 0x12000, scoped, tag = 'internal scratch']
  #allocation2 [shape = 's32[1]{0}', space=sflag, size = 0x4, scoped, tag = 'scoped memory for output_transition.3']
  #allocation3 [shape = 'u8[512]{0}', space=smem, size = 0x200, scoped, tag = 'prefetched SMEM operand 0']
  %s0 = inlined_call_operand.vmem [shape: f32[10], index: 0, kind: input, shape index: {}]
  %s1 = inlined_call_operand.vmem [shape: f32[2,2,64,8], index: 1, kind: input, shape index: {}]
  %s2 = inlined_call_operand.hbm [shape: f32[2,2,64,8], index: 2, kind: output, shape index: {}]
  %s3 = sld [smem:[#allocation0]]
  $region37: #{output_transition.3} parent=0
    _
  %s5 = ssub.s32 1, %s3
  %s6 = scalar_select 0, %s5, %s3
  %s7 = sshll.u32 %s0, 4
  %s8 = int_to_ptr.vmem [resolvable:$true] %s7
  %10 = dma.vmem_to_smem %s8, 16, [#allocation3], [#allocation2]
  %11 = dma.done [#allocation2], 16
  %12 = sfence
  $region1: #{output_transition.3} parent=0
    #allocation4 [shape = 'u8[131072]{0}', space=vmem, size = 0x20000, scoped, tag = 'output window, operand 0']
    #allocation5 [shape = 's32[2]{0}', space=sflag, size = 0x8, scoped, tag = 'scoped memory for output_transition.3']
    %13 = vsyncpa [#allocation5], 0
    %s14 = scalar_lea.sflag [#allocation5], 1
    %15 = vsyncpa %s14, 0
    loop: start=0, step=1, limit=4
    $region2: #{output_transition.3} parent=1 // loop_pre_header
      _
    $region3: #{output_transition.3} parent=1 // loop_header
      %s17 = sphi 0, %s21
      %p18 = scmp.ge.s32.totalorder %s17, 4
      %s27 = sphi 0, %s29
      %s30 = sphi 0, %s27
      %s31 = sphi 0, %s30
      %s47 = sphi 0, %s31
      %s53 = sphi 0, %s55
      %s56 = sphi 0, %s53
      %s57 = sphi 0, %s56
      %s73 = sphi 0, %s57
    $region4: #{output_transition.3} parent=1 // loop_header_branch
      %20 = sbr.rel (%p18) target = $region8
    $region5: #{output_transition.3} parent=1 // loop_body
      %s22 = ssub.s32 %s17, 1
      %s23 = ssub.s32 %s17, 2
      %s24 = sadd.s32 %s17, 1
      %s25 = ssub.s32 %s17, %s24
      %p26 = scmp.eq.s32.totalorder %s25, 0
      %s28 = sadd.s32 %s27, 1
      %s29 = scalar_select %p26, %s27, %s28
      %p32 = pneg %p26
      %p33 = scmp.eq.s32.totalorder %s17, 1
      %p34 = por %p32, %p33
      %p35 = scmp.ne.s32.totalorder %s27, %s30
      %p36 = scmp.eq.s32.totalorder %s17, 0
      %p37 = por %p35, %p36
      %p38 = scmp.ne.s32.totalorder %s27, %s30
      %p39 = scmp.eq.s32.totalorder %s22, 1
      %p40 = por %p38, %p39
      %p41 = scmp.ne.s32.totalorder %s30, %s31
      %p42 = scmp.eq.s32.totalorder %s22, 0
      %p43 = por %p41, %p42
      %p44 = scmp.ne.s32.totalorder %s30, %s31
      %p45 = scmp.eq.s32.totalorder %s23, 1
      %p46 = por %p44, %p45
      %p48 = scmp.ne.s32.totalorder %s31, %s47
      %p49 = scmp.eq.s32.totalorder %s23, 0
      %p50 = por %p48, %p49
      %s51 = ssub.s32 %s17, %s24
      %p52 = scmp.eq.s32.totalorder %s51, 0
      %s54 = sadd.s32 %s53, 1
      %s55 = scalar_select %p52, %s53, %s54
      %p58 = pneg %p52
      %p59 = scmp.eq.s32.totalorder %s17, 1
      %p60 = por %p58, %p59
      %p61 = scmp.ne.s32.totalorder %s53, %s56
      %p62 = scmp.eq.s32.totalorder %s17, 0
      %p63 = por %p61, %p62
      %p64 = scmp.ne.s32.totalorder %s53, %s56
      %p65 = scmp.eq.s32.totalorder %s22, 1
      %p66 = por %p64, %p65
      %p67 = scmp.ne.s32.totalorder %s56, %s57
      %p68 = scmp.eq.s32.totalorder %s22, 0
      %p69 = por %p67, %p68
      %p70 = scmp.ne.s32.totalorder %s56, %s57
      %p71 = scmp.eq.s32.totalorder %s23, 1
      %p72 = por %p70, %p71
      %p74 = scmp.ne.s32.totalorder %s57, %s73
      %p75 = scmp.eq.s32.totalorder %s23, 0
      %p76 = por %p74, %p75
      %p77 = scmp.le.s32.totalorder 1, %s17
      %p78 = scmp.lt.s32.totalorder %s17, 3
      %p79 = pnand %p77, %p78
      %p80 = pneg %p79
      // Predicated region
      $region9: #{output_transition.3} parent=5 // pred_check
        _
      $region10: #{output_transition.3} parent=5 // pred_check_branch
        %82 = sbr.rel (%p79) target = $region12
      $region11: #{output_transition.3} parent=5 // pred_region
        %s83 = ssub.s32 %s17, 1
      $region12: #{output_transition.3} parent=5 // pred_fallthru
        _
      %p84 = scmp.lt.s32.totalorder %s17, 2
      // Predicated region
      $region13: #{output_transition.3} parent=5 // pred_check
        %p85 = pneg %p84
      $region14: #{output_transition.3} parent=5 // pred_check_branch
        %87 = sbr.rel (%p85) target = $region16
      $region15: #{output_transition.3} parent=5 // pred_region
        // Predicated region
        $region17: #{output_transition.3} parent=15 // pred_check
          %p88 = pneg %p37
        $region18: #{output_transition.3} parent=15 // pred_check_branch
          %90 = sbr.rel (%p88) target = $region20
        $region19: #{output_transition.3} parent=15 // pred_region
          %p91 = scmp.lt.s32.totalorder %s17, 1
          %s92 = scalar_select %p91, %s17, 1
          %s93 = smul.addr %s92, 16
          %s94 = smul.addr %s93, 8
          %s95 = scalar_lea.vmem %s1, %s94
        $region20: #{output_transition.3} parent=15 // pred_fallthru
          _
      $region16: #{output_transition.3} parent=5 // pred_fallthru
        _
      %p96 = scmp.le.s32.totalorder 1, %s17
      %p97 = scmp.lt.s32.totalorder %s17, 3
      %p98 = pnand %p96, %p97
      %p99 = pneg %p98
      // Predicated region
      $region21: #{output_transition.3} parent=5 // pred_check
        _
      $region22: #{output_transition.3} parent=5 // pred_check_branch
        %101 = sbr.rel (%p98) target = $region24
      $region23: #{output_transition.3} parent=5 // pred_region
        %s102 = ssub.s32 %s17, 1
        %p103 = scmp.lt.s32.totalorder %s22, 1
        %s104 = scalar_select %p103, %s22, 1
        %s105 = smul.addr %s104, 16
        %s106 = smul.addr %s105, 8
        %s107 = scalar_lea.vmem %s1, %s106
        %p108 = pneg %p43
        %p109 = pneg %p40
        %p110 = pneg %p69
        %p111 = pneg %p66
        %s112 = sand.u32 %s56, 1
        %s113 = scalar_lea.sflag [#allocation5], %s112
        %s114 = sand.u32 %s56, 1
        %s115 = smul.addr %s114, 128
        %s116 = scalar_lea.vmem [#allocation4], %s115
        %p117 = scmp.lt.s32.totalorder %s22, 1
        %s118 = scalar_select %p117, %s22, 1
        %s119 = smul.addr %s118, 16
        %s120 = smul.addr %s119, 8
        %s121 = scalar_lea.vmem %s1, %s120
        %s122 = sld [smem:[#allocation3]]
        %s123 = sld [smem:[#allocation3 + $0x1]]
        %s124 = sld [smem:[#allocation3 + $0x2]]
        %s125 = sld [smem:[#allocation3 + $0x3]]
        %s126 = sld [smem:[#allocation3 + $0x4]]
        %s127 = sld [smem:[#allocation3 + $0x5]]
        %s128 = sld [smem:[#allocation3 + $0x6]]
        %s129 = sld [smem:[#allocation3 + $0x7]]
        %s130 = sld [smem:[#allocation3 + $0x8]]
        %s131 = sld [smem:[#allocation3 + $0x9]]
        %v132 = vld [vmem:[%s121] sm:$0xff]
        %v133 = vld [vmem:[%s121 + $0x8] sm:$0xff]
        %v134 = vld [vmem:[%s121 + $0x10] sm:$0xff]
        %v135 = vld [vmem:[%s121 + $0x18] sm:$0xff]
        %v136 = vld [vmem:[%s121 + $0x20] sm:$0xff]
        %v137 = vld [vmem:[%s121 + $0x28] sm:$0xff]
        %v138 = vld [vmem:[%s121 + $0x30] sm:$0xff]
        %v139 = vld [vmem:[%s121 + $0x38] sm:$0xff]
        %v140 = vstv %s122
        %v141 = vmul.f32 %v132, %v140
        %v142 = vmul.f32 %v133, %v140
        %v143 = vmul.f32 %v134, %v140
        %v144 = vmul.f32 %v135, %v140
        %v145 = vmul.f32 %v136, %v140
        %v146 = vmul.f32 %v137, %v140
        %v147 = vmul.f32 %v138, %v140
        %v148 = vmul.f32 %v139, %v140
        %v149 = vstv %s124
        %v150 = vadd.f32 %v141, %v149
        %v151 = vadd.f32 %v142, %v149
        %v152 = vadd.f32 %v143, %v149
        %v153 = vadd.f32 %v144, %v149
        %v154 = vadd.f32 %v145, %v149
        %v155 = vadd.f32 %v146, %v149
        %v156 = vadd.f32 %v147, %v149
        %v157 = vadd.f32 %v148, %v149
        %v158 = vmax.f32 %v150, 0.0
        %v159 = vmax.f32 %v151, 0.0
        %v160 = vmax.f32 %v152, 0.0
        %v161 = vmax.f32 %v153, 0.0
        %v162 = vmax.f32 %v154, 0.0
        %v163 = vmax.f32 %v155, 0.0
        %v164 = vmax.f32 %v156, 0.0
        %v165 = vmax.f32 %v157, 0.0
        %s166 = scalar_lea.vmem %s121, 64
        %v167 = vld [vmem:[%s166] sm:$0xff]
        %v168 = vld [vmem:[%s166 + $0x8] sm:$0xff]
        %v169 = vld [vmem:[%s166 + $0x10] sm:$0xff]
        %v170 = vld [vmem:[%s166 + $0x18] sm:$0xff]
        %v171 = vld [vmem:[%s166 + $0x20] sm:$0xff]
        %v172 = vld [vmem:[%s166 + $0x28] sm:$0xff]
        %v173 = vld [vmem:[%s166 + $0x30] sm:$0xff]
        %v174 = vld [vmem:[%s166 + $0x38] sm:$0xff]
        %v175 = vstv %s123
        %v176 = vmul.f32 %v167, %v175
        %v177 = vmul.f32 %v168, %v175
        %v178 = vmul.f32 %v169, %v175
        %v179 = vmul.f32 %v170, %v175
        %v180 = vmul.f32 %v171, %v175
        %v181 = vmul.f32 %v172, %v175
        %v182 = vmul.f32 %v173, %v175
        %v183 = vmul.f32 %v174, %v175
        %v184 = vstv %s125
        %v185 = vadd.f32 %v176, %v184
        %v186 = vadd.f32 %v177, %v184
        %v187 = vadd.f32 %v178, %v184
        %v188 = vadd.f32 %v179, %v184
        %v189 = vadd.f32 %v180, %v184
        %v190 = vadd.f32 %v181, %v184
        %v191 = vadd.f32 %v182, %v184
        %v192 = vadd.f32 %v183, %v184
        %v193 = vmax.f32 %v185, 0.0
        %v194 = vmax.f32 %v186, 0.0
        %v195 = vmax.f32 %v187, 0.0
        %v196 = vmax.f32 %v188, 0.0
        %v197 = vmax.f32 %v189, 0.0
        %v198 = vmax.f32 %v190, 0.0
        %v199 = vmax.f32 %v191, 0.0
        %v200 = vmax.f32 %v192, 0.0
        %v201 = vstv %s126
        %v202 = vmul.f32 %v158, %v201
        %v203 = vmul.f32 %v159, %v201
        %v204 = vmul.f32 %v160, %v201
        %v205 = vmul.f32 %v161, %v201
        %v206 = vmul.f32 %v162, %v201
        %v207 = vmul.f32 %v163, %v201
        %v208 = vmul.f32 %v164, %v201
        %v209 = vmul.f32 %v165, %v201
        %v210 = vstv %s127
        %v211 = vmul.f32 %v193, %v210
        %v212 = vmul.f32 %v194, %v210
        %v213 = vmul.f32 %v195, %v210
        %v214 = vmul.f32 %v196, %v210
        %v215 = vmul.f32 %v197, %v210
        %v216 = vmul.f32 %v198, %v210
        %v217 = vmul.f32 %v199, %v210
        %v218 = vmul.f32 %v200, %v210
        %v219 = vadd.f32 %v202, %v211
        %v220 = vadd.f32 %v203, %v212
        %v221 = vadd.f32 %v204, %v213
        %v222 = vadd.f32 %v205, %v214
        %v223 = vadd.f32 %v206, %v215
        %v224 = vadd.f32 %v207, %v216
        %v225 = vadd.f32 %v208, %v217
        %v226 = vadd.f32 %v209, %v218
        %v227 = vstv %s130
        %v228 = vadd.f32 %v219, %v227
        %v229 = vadd.f32 %v220, %v227
        %v230 = vadd.f32 %v221, %v227
        %v231 = vadd.f32 %v222, %v227
        %v232 = vadd.f32 %v223, %v227
        %v233 = vadd.f32 %v224, %v227
        %v234 = vadd.f32 %v225, %v227
        %v235 = vadd.f32 %v226, %v227
        %v236 = vstv %s128
        %v237 = vmul.f32 %v158, %v236
        %v238 = vmul.f32 %v159, %v236
        %v239 = vmul.f32 %v160, %v236
        %v240 = vmul.f32 %v161, %v236
        %v241 = vmul.f32 %v162, %v236
        %v242 = vmul.f32 %v163, %v236
        %v243 = vmul.f32 %v164, %v236
        %v244 = vmul.f32 %v165, %v236
        %v245 = vstv %s129
        %v246 = vmul.f32 %v193, %v245
        %v247 = vmul.f32 %v194, %v245
        %v248 = vmul.f32 %v195, %v245
        %v249 = vmul.f32 %v196, %v245
        %v250 = vmul.f32 %v197, %v245
        %v251 = vmul.f32 %v198, %v245
        %v252 = vmul.f32 %v199, %v245
        %v253 = vmul.f32 %v200, %v245
        %v254 = vadd.f32 %v237, %v246
        %v255 = vadd.f32 %v238, %v247
        %v256 = vadd.f32 %v239, %v248
        %v257 = vadd.f32 %v240, %v249
        %v258 = vadd.f32 %v241, %v250
        %v259 = vadd.f32 %v242, %v251
        %v260 = vadd.f32 %v243, %v252
        %v261 = vadd.f32 %v244, %v253
        %v262 = vstv %s131
        %v263 = vadd.f32 %v254, %v262
        %v264 = vadd.f32 %v255, %v262
        %v265 = vadd.f32 %v256, %v262
        %v266 = vadd.f32 %v257, %v262
        %v267 = vadd.f32 %v258, %v262
        %v268 = vadd.f32 %v259, %v262
        %v269 = vadd.f32 %v260, %v262
        %v270 = vadd.f32 %v261, %v262
        %v271 = vsub.f32 %v263, %v228
        %v272 = vsub.f32 %v264, %v229
        %v273 = vsub.f32 %v265, %v230
        %v274 = vsub.f32 %v266, %v231
        %v275 = vsub.f32 %v267, %v232
        %v276 = vsub.f32 %v268, %v233
        %v277 = vsub.f32 %v269, %v234
        %v278 = vsub.f32 %v270, %v235
        %v279 = vmul.f32 %v271, 1.442695
        %v280 = vpow.pop %v279
        %v281 = vmul.f32 %v272, 1.442695
        %v282 = vpow.pop %v281
        %v283 = vmul.f32 %v273, 1.442695
        %v284 = vpow.pop %v283
        %v285 = vmul.f32 %v274, 1.442695
        %v286 = vpow.pop %v285
        %v287 = vmul.f32 %v275, 1.442695
        %v288 = vpow.pop %v287
        %v289 = vmul.f32 %v276, 1.442695
        %v290 = vpow.pop %v289
        %v291 = vmul.f32 %v277, 1.442695
        %v292 = vpow.pop %v291
        %v293 = vmul.f32 %v278, 1.442695
        %v294 = vpow.pop %v293
        %v295 = vadd.f32 %v280, 1.0
        %v296 = vadd.f32 %v282, 1.0
        %v297 = vadd.f32 %v284, 1.0
        %v298 = vadd.f32 %v286, 1.0
        %v299 = vadd.f32 %v288, 1.0
        %v300 = vadd.f32 %v290, 1.0
        %v301 = vadd.f32 %v292, 1.0
        %v302 = vadd.f32 %v294, 1.0
        %v303 = vrcp.pop %v295
        %v304 = vmul.f32 1.0, %v303
        %v305 = vrcp.pop %v296
        %v306 = vmul.f32 1.0, %v305
        %v307 = vrcp.pop %v297
        %v308 = vmul.f32 1.0, %v307
        %v309 = vrcp.pop %v298
        %v310 = vmul.f32 1.0, %v309
        %v311 = vrcp.pop %v299
        %v312 = vmul.f32 1.0, %v311
        %v313 = vrcp.pop %v300
        %v314 = vmul.f32 1.0, %v313
        %v315 = vrcp.pop %v301
        %v316 = vmul.f32 1.0, %v315
        %v317 = vrcp.pop %v302
        %v318 = vmul.f32 1.0, %v317
        %vm319 = vcmask 64512
        %320 = vst.msk [vmem:[%s116] sm:$0xff] %vm319, %v304
        %321 = vst.msk [vmem:[%s116 + $0x8] sm:$0xff] %vm319, %v306
        %322 = vst.msk [vmem:[%s116 + $0x10] sm:$0xff] %vm319, %v308
        %323 = vst.msk [vmem:[%s116 + $0x18] sm:$0xff] %vm319, %v310
        %324 = vst.msk [vmem:[%s116 + $0x20] sm:$0xff] %vm319, %v312
        %325 = vst.msk [vmem:[%s116 + $0x28] sm:$0xff] %vm319, %v314
        %326 = vst.msk [vmem:[%s116 + $0x30] sm:$0xff] %vm319, %v316
        %327 = vst.msk [vmem:[%s116 + $0x38] sm:$0xff] %vm319, %v318
        %v328 = vsub.f32 1.0, %v304
        %v329 = vsub.f32 1.0, %v306
        %v330 = vsub.f32 1.0, %v308
        %v331 = vsub.f32 1.0, %v310
        %v332 = vsub.f32 1.0, %v312
        %v333 = vsub.f32 1.0, %v314
        %v334 = vsub.f32 1.0, %v316
        %v335 = vsub.f32 1.0, %v318
        %s336 = scalar_lea.vmem %s116, 64 [#allocation4]
        %337 = vst.msk [vmem:[%s336] sm:$0xff] %vm319, %v328
        %338 = vst.msk [vmem:[%s336 + $0x8] sm:$0xff] %vm319, %v329
        %339 = vst.msk [vmem:[%s336 + $0x10] sm:$0xff] %vm319, %v330
        %340 = vst.msk [vmem:[%s336 + $0x18] sm:$0xff] %vm319, %v331
        %341 = vst.msk [vmem:[%s336 + $0x20] sm:$0xff] %vm319, %v332
        %342 = vst.msk [vmem:[%s336 + $0x28] sm:$0xff] %vm319, %v333
        %343 = vst.msk [vmem:[%s336 + $0x30] sm:$0xff] %vm319, %v334
        %344 = vst.msk [vmem:[%s336 + $0x38] sm:$0xff] %vm319, %v335
        %s345 = sand.u32 %s56, 1
        %s346 = scalar_lea.sflag [#allocation5], %s345
        %s347 = sand.u32 %s56, 1
        %s348 = smul.addr %s347, 128
        %s349 = scalar_lea.vmem [#allocation4], %s348
        // Predicated region
        $region25: #{output_transition.3} parent=23 // pred_check
          %p350 = pneg %p66
        $region26: #{output_transition.3} parent=23 // pred_check_branch
          %352 = sbr.rel (%p350) target = $region28
        $region27: #{output_transition.3} parent=23 // pred_region
          %s354 = ssub.s32 2048, 2048
          %355 = vsyncadd %s346, %s354
          %s356 = smul.addr %s22, 16
          %s357 = smul.addr %s356, 128
          %s358 = scalar_lea.hbm %s2, %s357
          %s359 = sshll.u32 %s349, 4
          %s360 = int_to_ptr.vmem [resolvable:$true] %s359
          %365 = dma.vmem_to_hbm [thread:$0]  %s360, 2048, %s358, %s346, 128, 128, 8
        $region28: #{output_transition.3} parent=23 // pred_fallthru
          _
      $region24: #{output_transition.3} parent=5 // pred_fallthru
        _
      %p366 = scmp.le.s32.totalorder 2, %s17
      // Predicated region
      $region29: #{output_transition.3} parent=5 // pred_check
        %p367 = pneg %p366
      $region30: #{output_transition.3} parent=5 // pred_check_branch
        %369 = sbr.rel (%p367) target = $region32
      $region31: #{output_transition.3} parent=5 // pred_region
        %s370 = ssub.s32 %s17, 2
        // Predicated region
        $region33: #{output_transition.3} parent=31 // pred_check
          %p371 = pneg %p72
        $region34: #{output_transition.3} parent=31 // pred_check_branch
          %373 = sbr.rel (%p371) target = $region36
        $region35: #{output_transition.3} parent=31 // pred_region
          %s374 = sand.u32 %s57, 1
          %s375 = scalar_lea.sflag [#allocation5], %s374
          %s376 = sand.u32 %s57, 1
          %s377 = smul.addr %s376, 128
          %s378 = scalar_lea.vmem [#allocation4], %s377
          %379 = dma.done %s375, 2048
        $region36: #{output_transition.3} parent=31 // pred_fallthru
          _
      $region32: #{output_transition.3} parent=5 // pred_fallthru
        _
    $region6: #{output_transition.3} parent=1 // loop_footer
      %s21 = sadd.s32 1, %s17
    $region7: #{output_transition.3} parent=1 // loop_footer_branch
      %16 = sbr.rel target = $region3
    $region8: #{output_transition.3} parent=1 // loop_exit
      _
    %380 = vsyncpa [#allocation5], 1
    %s381 = scalar_lea.sflag [#allocation5], 1
    %382 = vsyncpa %s381, 1

// kernel: output_transition.2
$region0: #{output_transition.2}
  #allocation0 [shape = 'u32[]', space=smem, size = 0x4, offset = 0x4, fixed_abs, tag = 'smem constant byte address 0x4 - core index']
  #allocation1 [shape = 'u32[144,128]{1,0:T(1,128)}', space=vmem, size = 0x12000, scoped, tag = 'internal scratch']
  %s0 = inlined_call_operand.vmem [shape: f32[2,12,12,48], index: 0, kind: input, shape index: {}]
  %s1 = inlined_call_operand.vmem [shape: f32[25,48,16], index: 1, kind: input, shape index: {}]
  %s2 = inlined_call_operand.vmem [shape: f32[2,2,64,8], index: 2, kind: output, shape index: {0}]
  %s3 = inlined_call_operand.vmem [shape: f32[2,4,8], index: 3, kind: output, shape index: {1}]
  %4 = xla_tuple %s2, %s3
  %s5 = sld [smem:[#allocation0]]
  $region49: #{output_transition.2} parent=0
    _
  %s7 = ssub.s32 1, %s5
  %s8 = scalar_select 0, %s7, %s5
  loop: start=0, step=1, limit=4
  $region2: #{output_transition.2} parent=0 // loop_pre_header
    _
  $region3: #{output_transition.2} parent=0 // loop_header
    %s10 = sphi 0, %s14
    %p11 = scmp.ge.s32.totalorder %s10, 4
    %s20 = sphi 0, %s22
    %s23 = sphi 0, %s20
    %s24 = sphi 0, %s23
    %s40 = sphi 0, %s24
    %s44 = sphi 0, %s44
    %s46 = sphi 0, %s44
    %s47 = sphi 0, %s46
    %s61 = sphi 0, %s47
    %s67 = sphi 0, %s69
    %s70 = sphi 0, %s67
    %s71 = sphi 0, %s70
    %s87 = sphi 0, %s71
    %s93 = sphi 0, %s95
    %s96 = sphi 0, %s93
    %s97 = sphi 0, %s96
    %s113 = sphi 0, %s97
  $region4: #{output_transition.2} parent=0 // loop_header_branch
    %13 = sbr.rel (%p11) target = $region8
  $region5: #{output_transition.2} parent=0 // loop_body
    %s15 = ssub.s32 %s10, 1
    %s16 = ssub.s32 %s10, 2
    %s17 = sadd.s32 %s10, 1
    %s18 = ssub.s32 %s10, %s17
    %p19 = scmp.eq.s32.totalorder %s18, 0
    %s21 = sadd.s32 %s20, 1
    %s22 = scalar_select %p19, %s20, %s21
    %p25 = pneg %p19
    %p26 = scmp.eq.s32.totalorder %s10, 1
    %p27 = por %p25, %p26
    %p28 = scmp.ne.s32.totalorder %s20, %s23
    %p29 = scmp.eq.s32.totalorder %s10, 0
    %p30 = por %p28, %p29
    %p31 = scmp.ne.s32.totalorder %s20, %s23
    %p32 = scmp.eq.s32.totalorder %s15, 1
    %p33 = por %p31, %p32
    %p34 = scmp.ne.s32.totalorder %s23, %s24
    %p35 = scmp.eq.s32.totalorder %s15, 0
    %p36 = por %p34, %p35
    %p37 = scmp.ne.s32.totalorder %s23, %s24
    %p38 = scmp.eq.s32.totalorder %s16, 1
    %p39 = por %p37, %p38
    %p41 = scmp.ne.s32.totalorder %s24, %s40
    %p42 = scmp.eq.s32.totalorder %s16, 0
    %p43 = por %p41, %p42
    %s45 = sadd.s32 %s44, 1
    %p48 = scmp.eq.s32.totalorder %s10, 1
    %p49 = scmp.ne.s32.totalorder %s44, %s46
    %p50 = scmp.eq.s32.totalorder %s10, 0
    %p51 = por %p49, %p50
    %p52 = scmp.ne.s32.totalorder %s44, %s46
    %p53 = scmp.eq.s32.totalorder %s15, 1
    %p54 = por %p52, %p53
    %p55 = scmp.ne.s32.totalorder %s46, %s47
    %p56 = scmp.eq.s32.totalorder %s15, 0
    %p57 = por %p55, %p56
    %p58 = scmp.ne.s32.totalorder %s46, %s47
    %p59 = scmp.eq.s32.totalorder %s16, 1
    %p60 = por %p58, %p59
    %p62 = scmp.ne.s32.totalorder %s47, %s61
    %p63 = scmp.eq.s32.totalorder %s16, 0
    %p64 = por %p62, %p63
    %s65 = ssub.s32 %s10, %s17
    %p66 = scmp.eq.s32.totalorder %s65, 0
    %s68 = sadd.s32 %s67, 1
    %s69 = scalar_select %p66, %s67, %s68
    %p72 = pneg %p66
    %p73 = scmp.eq.s32.totalorder %s10, 1
    %p74 = por %p72, %p73
    %p75 = scmp.ne.s32.totalorder %s67, %s70
    %p76 = scmp.eq.s32.totalorder %s10, 0
    %p77 = por %p75, %p76
    %p78 = scmp.ne.s32.totalorder %s67, %s70
    %p79 = scmp.eq.s32.totalorder %s15, 1
    %p80 = por %p78, %p79
    %p81 = scmp.ne.s32.totalorder %s70, %s71
    %p82 = scmp.eq.s32.totalorder %s15, 0
    %p83 = por %p81, %p82
    %p84 = scmp.ne.s32.totalorder %s70, %s71
    %p85 = scmp.eq.s32.totalorder %s16, 1
    %p86 = por %p84, %p85
    %p88 = scmp.ne.s32.totalorder %s71, %s87
    %p89 = scmp.eq.s32.totalorder %s16, 0
    %p90 = por %p88, %p89
    %s91 = ssub.s32 %s10, %s17
    %p92 = scmp.eq.s32.totalorder %s91, 0
    %s94 = sadd.s32 %s93, 1
    %s95 = scalar_select %p92, %s93, %s94
    %p98 = pneg %p92
    %p99 = scmp.eq.s32.totalorder %s10, 1
    %p100 = por %p98, %p99
    %p101 = scmp.ne.s32.totalorder %s93, %s96
    %p102 = scmp.eq.s32.totalorder %s10, 0
    %p103 = por %p101, %p102
    %p104 = scmp.ne.s32.totalorder %s93, %s96
    %p105 = scmp.eq.s32.totalorder %s15, 1
    %p106 = por %p104, %p105
    %p107 = scmp.ne.s32.totalorder %s96, %s97
    %p108 = scmp.eq.s32.totalorder %s15, 0
    %p109 = por %p107, %p108
    %p110 = scmp.ne.s32.totalorder %s96, %s97
    %p111 = scmp.eq.s32.totalorder %s16, 1
    %p112 = por %p110, %p111
    %p114 = scmp.ne.s32.totalorder %s97, %s113
    %p115 = scmp.eq.s32.totalorder %s16, 0
    %p116 = por %p114, %p115
    %p117 = scmp.le.s32.totalorder 1, %s10
    %p118 = scmp.lt.s32.totalorder %s10, 3
    %p119 = pnand %p117, %p118
    %p120 = pneg %p119
    // Predicated region
    $region9: #{output_transition.2} parent=5 // pred_check
      _
    $region10: #{output_transition.2} parent=5 // pred_check_branch
      %122 = sbr.rel (%p119) target = $region12
    $region11: #{output_transition.2} parent=5 // pred_region
      %s123 = ssub.s32 %s10, 1
      // Predicated region
      $region13: #{output_transition.2} parent=11 // pred_check
        %p124 = pneg %p57
      $region14: #{output_transition.2} parent=11 // pred_check_branch
        %126 = sbr.rel (%p124) target = $region16
      $region15: #{output_transition.2} parent=11 // pred_region
        _
      $region16: #{output_transition.2} parent=11 // pred_fallthru
        _
    $region12: #{output_transition.2} parent=5 // pred_fallthru
      _
    %p127 = scmp.lt.s32.totalorder %s10, 2
    // Predicated region
    $region17: #{output_transition.2} parent=5 // pred_check
      %p128 = pneg %p127
    $region18: #{output_transition.2} parent=5 // pred_check_branch
      %130 = sbr.rel (%p128) target = $region20
    $region19: #{output_transition.2} parent=5 // pred_region
      // Predicated region
      $region21: #{output_transition.2} parent=19 // pred_check
        %p131 = pneg %p30
      $region22: #{output_transition.2} parent=19 // pred_check_branch
        %133 = sbr.rel (%p131) target = $region24
      $region23: #{output_transition.2} parent=19 // pred_region
        %p134 = scmp.lt.s32.totalorder %s10, 1
        %s135 = scalar_select %p134, %s10, 1
        %s136 = smul.addr %s135, 24
        %s137 = smul.addr %s136, 8
        %s138 = scalar_lea.vmem %s0, %s137
      $region24: #{output_transition.2} parent=19 // pred_fallthru
        _
    $region20: #{output_transition.2} parent=5 // pred_fallthru
      _
    %p139 = scmp.le.s32.totalorder 1, %s10
    %p140 = scmp.lt.s32.totalorder %s10, 3
    %p141 = pnand %p139, %p140
    %p142 = pneg %p141
    // Predicated region
    $region25: #{output_transition.2} parent=5 // pred_check
      _
    $region26: #{output_transition.2} parent=5 // pred_check_branch
      %144 = sbr.rel (%p141) target = $region28
    $region27: #{output_transition.2} parent=5 // pred_region
      %s145 = ssub.s32 %s10, 1
      %p146 = scmp.lt.s32.totalorder %s15, 1
      %s147 = scalar_select %p146, %s15, 1
      %s148 = smul.addr %s147, 24
      %s149 = smul.addr %s148, 8
      %s150 = scalar_lea.vmem %s0, %s149
      %p151 = pneg %p36
      %p152 = pneg %p33
      %p153 = pneg %p57
      %p154 = pneg %p54
      %p155 = pneg %p83
      %p156 = pneg %p80
      %p157 = scmp.lt.s32.totalorder %s15, 1
      %s158 = scalar_select %p157, %s15, 1
      %s159 = smul.addr %s158, 16
      %s160 = smul.addr %s159, 8
      %s161 = scalar_lea.vmem %s2, %s160
      %p162 = pneg %p109
      %p163 = pneg %p106
      %p164 = scmp.lt.s32.totalorder %s15, 1
      %s165 = scalar_select %p164, %s15, 1
      %s166 = smul.addr %s165, 4
      %s167 = scalar_lea.vmem %s3, %s166
      %p168 = scmp.lt.s32.totalorder %s15, 1
      %s169 = scalar_select %p168, %s15, 1
      %s170 = smul.addr %s169, 24
      %s171 = smul.addr %s170, 8
      %s172 = scalar_lea.vmem %s0, %s171
      %p173 = scmp.lt.s32.totalorder %s15, 1
      %s174 = scalar_select %p173, %s15, 1
      %s175 = smul.addr %s174, 16
      %s176 = smul.addr %s175, 8
      %s177 = scalar_lea.vmem %s2, %s176
      %p178 = scmp.lt.s32.totalorder %s15, 1
      %s179 = scalar_select %p178, %s15, 1
      %s180 = smul.addr %s179, 4
      %s181 = scalar_lea.vmem %s3, %s180
      %v182 = vld [vmem:[%s172] sm:$0xff]
      %v183 = vld [vmem:[%s172 + $0x10] sm:$0xff]
      %v184 = vld [vmem:[%s172 + $0x20] sm:$0xff]
      %v185 = vld [vmem:[%s172 + $0x30] sm:$0xff]
      %v186 = vld [vmem:[%s172 + $0x40] sm:$0xff]
      %v187 = vld [vmem:[%s172 + $0x50] sm:$0xff]
      %v188 = vld [vmem:[%s172 + $0x60] sm:$0xff]
      %v189 = vld [vmem:[%s172 + $0x70] sm:$0xff]
      %v190 = vld [vmem:[%s1] sm:$0xff]
      %v191 = vld [vmem:[%s1 + $0x8] sm:$0xff]
      %v192 = vld [vmem:[%s1 + $0x10] sm:$0xff]
      %v193 = vld [vmem:[%s1 + $0x18] sm:$0xff]
      %v194 = vld [vmem:[%s1 + $0x20] sm:$0xff]
      %v195 = vld [vmem:[%s1 + $0x28] sm:$0xff]
      %v196 = vld [vmem:[%s172 + $0x1] sm:$0xff]
      %v197 = vld [vmem:[%s172 + $0x11] sm:$0xff]
      %v198 = vld [vmem:[%s172 + $0x21] sm:$0xff]
      %v199 = vld [vmem:[%s172 + $0x31] sm:$0xff]
      %v200 = vld [vmem:[%s172 + $0x41] sm:$0xff]
      %v201 = vld [vmem:[%s172 + $0x51] sm:$0xff]
      %v202 = vld [vmem:[%s172 + $0x61] sm:$0xff]
      %v203 = vld [vmem:[%s172 + $0x71] sm:$0xff]
      %s204 = scalar_lea.vmem %s1, 48
      %v205 = vld [vmem:[%s204] sm:$0xff]
      %v206 = vld [vmem:[%s204 + $0x8] sm:$0xff]
      %v207 = vld [vmem:[%s204 + $0x10] sm:$0xff]
      %v208 = vld [vmem:[%s204 + $0x18] sm:$0xff]
      %v209 = vld [vmem:[%s204 + $0x20] sm:$0xff]
      %v210 = vld [vmem:[%s204 + $0x28] sm:$0xff]
      %vm211 = vcmask 392192
      %v213 = vsel %vm211, %v196, 0
      %v216 = vsel %vm211, %v197, 0
      %v219 = vsel %vm211, %v198, 0
      %v222 = vsel %vm211, %v199, 0
      %v225 = vsel %vm211, %v200, 0
      %v228 = vsel %vm211, %v201, 0
      %v231 = vsel %vm211, %v202, 0
      %v234 = vsel %vm211, %v203, 0
      %236 = vmatprep.subr.mxu0 0.0
      %237 = vmatpush1.msra.mxu0 %v205
      %238 = vmatprep.subr.mxu0 0.0
      %239 = vmatpush1.msra.mxu0 %v206
      %240 = vmatprep.subr.mxu0 0.0
      %241 = vmatpush1.msra.mxu0 %v207
      %242 = vmatprep.subr.mxu0 0.0
      %243 = vmatpush1.msra.mxu0 %v208
      %244 = vmatprep.subr.mxu0 0.0
      %245 = vmatpush1.msra.mxu0 %v209
      %246 = vmatprep.subr.mxu0 0.0
      %247 = vmatpush1.msra.mxu0 %v210
      %248 = vmatprep.subr.mxu0 0.0
      %249 = vmatpush1.msra.mxu0 0.0
      %250 = vmatprep.subr.mxu0 0.0
      %251 = vmatpush1.msra.mxu0 0.0
      %252 = vmatprep.subr.mxu0 0.0
      %253 = vmatpush1.msra.mxu0 0.0
      %254 = vmatprep.subr.mxu0 0.0
      %255 = vmatpush1.msra.mxu0 0.0
      %256 = vmatprep.subr.mxu0 0.0
      %257 = vmatpush1.msra.mxu0 0.0
      %258 = vmatprep.subr.mxu0 0.0
      %259 = vmatpush1.msra.mxu0 0.0
      %260 = vmatprep.subr.mxu0 0.0
      %261 = vmatpush1.msra.mxu0 0.0
      %262 = vmatprep.subr.mxu0 0.0
      %263 = vmatpush1.msra.mxu0 0.0
      %264 = vmatprep.subr.mxu0 0.0
      %265 = vmatpush1.msra.mxu0 0.0
      %266 = vmatprep.subr.mxu0 0.0
      %267 = vmatpush1.msra.mxu0 0.0
      %268 = vmatprep.subr.mxu0 0.0
      %269 = vmatpush1.msra.mxu0 0.0
      %270 = vmatprep.subr.mxu0 0.0
      %271 = vmatpush1.msra.mxu0 0.0
      %272 = vmatprep.subr.mxu0 0.0
      %273 = vmatpush1.msra.mxu0 0.0
      %274 = vmatprep.subr.mxu0 0.0
      %275 = vmatpush1.msra.mxu0 0.0
      %276 = vmatprep.subr.mxu0 0.0
      %277 = vmatpush1.msra.mxu0 0.0
      %278 = vmatprep.subr.mxu0 0.0
      %279 = vmatpush1.msra.mxu0 0.0
      %280 = vmatprep.subr.mxu0 0.0
      %281 = vmatpush1.msra.mxu0 0.0
      %282 = vmatprep.subr.mxu0 0.0
      %283 = vmatpush1.msra.mxu0 0.0
      %284 = vmatprep.subr.mxu0 0.0
      %285 = vmatpush1.msra.mxu0 0.0
      %286 = vmatprep.subr.mxu0 0.0
      %287 = vmatpush1.msra.mxu0 0.0
      %288 = vmatprep.subr.mxu0 0.0
      %289 = vmatpush1.msra.mxu0 0.0
      %290 = vmatprep.subr.mxu0 0.0
      %291 = vmatpush1.msra.mxu0 0.0
      %292 = vmatprep.subr.mxu0 0.0
      %293 = vmatpush1.msra.mxu0 0.0
      %294 = vmatprep.subr.mxu0 0.0
      %295 = vmatpush1.msra.mxu0 0.0
      %296 = vmatprep.subr.mxu0 0.0
      %297 = vmatpush1.msra.mxu0 0.0
      %298 = vmatprep.subr.mxu0 0.0
      %299 = vmatpush1.msra.mxu0 0.0
      %300 = vmatprep.mubr.f32.mxu0 0.0
      %301 = vmatmul.mubr.f32.gmra.mrb[0].mxu0 %v213
      %v302 = vpop.f32.mrb[0].mxu0
      %v303 = vadd.f32 0.0, %v302
      %v304 = vpop.f32.mrb[0].mxu0
      %305 = vmatprep.mubr.f32.mxu0 0.0
      %306 = vmatmul.mubr.f32.gmra.mrb[0].mxu0 %v216
      %v307 = vpop.f32.mrb[0].mxu0
      %v308 = vadd.f32 0.0, %v307
      %v309 = vpop.f32.mrb[0].mxu0
      %310 = vmatprep.mubr.f32.mxu0 0.0
      %311 = vmatmul.mubr.f32.gmra.mrb[0].mxu0 %v219
      %v312 = vpop.f32.mrb[0].mxu0
      %v313 = vadd.f32 0.0, %v312
      %v314 = vpop.f32.mrb[0].mxu0
      %315 = vmatprep.mubr.f32.mxu0 0.0
      %316 = vmatmul.mubr.f32.gmra.mrb[0].mxu0 %v222
      %v317 = vpop.f32.mrb[0].mxu0
      %v318 = vadd.f32 0.0, %v317
      %v319 = vpop.f32.mrb[0].mxu0
      %320 = vmatprep.mubr.f32.mxu0 0.0
      %321 = vmatmul.mubr.f32.gmra.mrb[0].mxu0 %v225
      %v322 = vpop.f32.mrb[0].mxu0
      %v323 = vadd.f32 0.0, %v322
      %v324 = vpop.f32.mrb[0].mxu0
      %325 = vmatprep.mubr.f32.mxu0 0.0
      %326 = vmatmul.mubr.f32.gmra.mrb[0].mxu0 %v228
      %v327 = vpop.f32.mrb[0].mxu0
      %v328 = vadd.f32 0.0, %v327
      %v329 = vpop.f32.mrb[0].mxu0
      %330 = vmatprep.mubr.f32.mxu0 0.0
      %331 = vmatmul.mubr.f32.gmra.mrb[0].mxu0 %v231
      %v332 = vpop.f32.mrb[0].mxu0
      %v333 = vadd.f32 0.0, %v332
      %v334 = vpop.f32.mrb[0].mxu0
      %335 = vmatprep.mubr.f32.mxu0 0.0
      %336 = vmatmul.mubr.f32.gmra.mrb[0].mxu0 %v234
      %v337 = vpop.f32.mrb[0].mxu0
      %v338 = vadd.f32 0.0, %v337
      %v339 = vpop.f32.mrb[0].mxu0
      %340 = vdwg.mxu0
      %v342 = vsel %vm211, %v182, 0
      %v345 = vsel %vm211, %v183, 0
      %v348 = vsel %vm211, %v184, 0
      %v351 = vsel %vm211, %v185, 0
      %v354 = vsel %vm211, %v186, 0
      %v357 = vsel %vm211, %v187, 0
      %v360 = vsel %vm211, %v188, 0
      %v363 = vsel %vm211, %v189, 0
      %365 = vmatprep.subr.mxu0 0.0
      %366 = vmatpush1.msra.mxu0 %v190
      %367 = vmatprep.subr.mxu0 0.0
      %368 = vmatpush1.msra.mxu0 %v191
      %369 = vmatprep.subr.mxu0 0.0
      %370 = vmatpush1.msra.mxu0 %v192
      %371 = vmatprep.subr.mxu0 0.0
      %372 = vmatpush1.msra.mxu0 %v193
      %373 = vmatprep.subr.mxu0 0.0
      %374 = vmatpush1.msra.mxu0 %v194
      %375 = vmatprep.subr.mxu0 0.0
      %376 = vmatpush1.msra.mxu0 %v195
      %377 = vmatprep.subr.mxu0 0.0
      %378 = vmatpush1.msra.mxu0 0.0
      %379 = vmatprep.subr.mxu0 0.0
      %380 = vmatpush1.msra.mxu0 0.0
      %381 = vmatprep.subr.mxu0 0.0
      %382 = vmatpush1.msra.mxu0 0.0
      %383 = vmatprep.subr.mxu0 0.0
      %384 = vmatpush1.msra.mxu0 0.0
      %385 = vmatprep.subr.mxu0 0.0
      %386 = vmatpush1.msra.mxu0 0.0
      %387 = vmatprep.subr.mxu0 0.0
      %388 = vmatpush1.msra.mxu0 0.0
      %389 = vmatprep.subr.mxu0 0.0
      %390 = vmatpush1.msra.mxu0 0.0
      %391 = vmatprep.subr.mxu0 0.0
      %392 = vmatpush1.msra.mxu0 0.0
      %393 = vmatprep.subr.mxu0 0.0
      %394 = vmatpush1.msra.mxu0 0.0
      %395 = vmatprep.subr.mxu0 0.0
      %396 = vmatpush1.msra.mxu0 0.0
      %397 = vmatprep.subr.mxu0 0.0
      %398 = vmatpush1.msra.mxu0 0.0
      %399 = vmatprep.subr.mxu0 0.0
      %400 = vmatpush1.msra.mxu0 0.0
      %401 = vmatprep.subr.mxu0 0.0
      %402 = vmatpush1.msra.mxu0 0.0
      %403 = vmatprep.subr.mxu0 0.0
      %404 = vmatpush1.msra.mxu0 0.0
      %405 = vmatprep.subr.mxu0 0.0
      %406 = vmatpush1.msra.mxu0 0.0
      %407 = vmatprep.subr.mxu0 0.0
      %408 = vmatpush1.msra.mxu0 0.0
      %409 = vmatprep.subr.mxu0 0.0
      %410 = vmatpush1.msra.mxu0 0.0
      %411 = vmatprep.subr.mxu0 0.0
      %412 = vmatpush1.msra.mxu0 0.0
      %413 = vmatprep.subr.mxu0 0.0
      %414 = vmatpush1.msra.mxu0 0.0
      %415 = vmatprep.subr.mxu0 0.0
      %416 = vmatpush1.msra.mxu0 0.0
      %417 = vmatprep.subr.mxu0 0.0
      %418 = vmatpush1.msra.mxu0 0.0
      %419 = vmatprep.subr.mxu0 0.0
      %420 = vmatpush1.msra.mxu0 0.0
      %421 = vmatprep.subr.mxu0 0.0
      %422 = vmatpush1.msra.mxu0 0.0
      %423 = vmatprep.subr.mxu0 0.0
      %424 = vmatpush1.msra.mxu0 0.0
      %425 = vmatprep.subr.mxu0 0.0
      %426 = vmatpush1.msra.mxu0 0.0
      %427 = vmatprep.subr.mxu0 0.0
      %428 = vmatpush1.msra.mxu0 0.0
      %429 = vmatprep.mubr.f32.mxu0 0.0
      %430 = vmatmul.mubr.f32.gmra.mrb[0].mxu0 %v342
      %v431 = vpop.f32.mrb[0].mxu0
      %v432 = vadd.f32 %v303, %v431
      %v433 = vpop.f32.mrb[0].mxu0
      %434 = vmatprep.mubr.f32.mxu0 0.0
      %435 = vmatmul.mubr.f32.gmra.mrb[0].mxu0 %v345
      %v436 = vpop.f32.mrb[0].mxu0
      %v437 = vadd.f32 %v308, %v436
      %v438 = vpop.f32.mrb[0].mxu0
      %439 = vmatprep.mubr.f32.mxu0 0.0
      %440 = vmatmul.mubr.f32.gmra.mrb[0].mxu0 %v348
      %v441 = vpop.f32.mrb[0].mxu0
      %v442 = vadd.f32 %v313, %v441
      %v443 = vpop.f32.mrb[0].mxu0
      %444 = vmatprep.mubr.f32.mxu0 0.0
      %445 = vmatmul.mubr.f32.gmra.mrb[0].mxu0 %v351
      %v446 = vpop.f32.mrb[0].mxu0
      %v447 = vadd.f32 %v318, %v446
      %v448 = vpop.f32.mrb[0].mxu0
      %449 = vmatprep.mubr.f32.mxu0 0.0
      %450 = vmatmul.mubr.f32.gmra.mrb[0].mxu0 %v354
      %v451 = vpop.f32.mrb[0].mxu0
      %v452 = vadd.f32 %v323, %v451
      %v453 = vpop.f32.mrb[0].mxu0
      %454 = vmatprep.mubr.f32.mxu0 0.0
      %455 = vmatmul.mubr.f32.gmra.mrb[0].mxu0 %v357
      %v456 = vpop.f32.mrb[0].mxu0
      %v457 = vadd.f32 %v328, %v456
      %v458 = vpop.f32.mrb[0].mxu0
      %459 = vmatprep.mubr.f32.mxu0 0.0
      %460 = vmatmul.mubr.f32.gmra.mrb[0].mxu0 %v360
      %v461 = vpop.f32.mrb[0].mxu0
      %v462 = vadd.f32 %v333, %v461
      %v463 = vpop.f32.mrb[0].mxu0
      %464 = vmatprep.mubr.f32.mxu0 0.0
      %465 = vmatmul.mubr.f32.gmra.mrb[0].mxu0 %v363
      %v466 = vpop.f32.mrb[0].mxu0
      %v467 = vadd.f32 %v338, %v466
      %v468 = vpop.f32.mrb[0].mxu0
      %469 = vdwg.mxu0
      %v470 = vld [vmem:[%s172 + $0x2] sm:$0xff]
      %v471 = vld [vmem:[%s172 + $0x12] sm:$0xff]
      %v472 = vld [vmem:[%s172 + $0x22] sm:$0xff]
      %v473 = vld [vmem:[%s172 + $0x32] sm:$0xff]
      %v474 = vld [vmem:[%s172 + $0x42] sm:$0xff]
      %v475 = vld [vmem:[%s172 + $0x52] sm:$0xff]
      %v476 = vld [vmem:[%s172 + $0x62] sm:$0xff]
      %v477 = vld [vmem:[%s172 + $0x72] sm:$0xff]
      %s478 = scalar_lea.vmem %s1, 96
      %v479 = vld [vmem:[%s478] sm:$0xff]
      %v480 = vld [vmem:[%s478 + $0x8] sm:$0xff]
      %v481 = vld [vmem:[%s478 + $0x10] sm:$0xff]
      %v482 = vld [vmem:[%s478 + $0x18] sm:$0xff]
      %v483 = vld [vmem:[%s478 + $0x20] sm:$0xff]
      %v484 = vld [vmem:[%s478 + $0x28] sm:$0xff]
      %v486 = vsel %vm211, %v470, 0
      %v489 = vsel %vm211, %v471, 0
      %v492 = vsel %vm211, %v472, 0
      %v495 = vsel %vm211, %v473, 0
      %v498 = vsel %vm211, %v474, 0
      %v501 = vsel %vm211, %v475, 0
      %v504 = vsel %vm211, %v476, 0
      %v507 = vsel %vm211, %v477, 0
      %509 = vmatprep.subr.mxu0 0.0
      %510 = vmatpush1.msra.mxu0 %v479
      %511 = vmatprep.subr.mxu0 0.0
      %512 = vmatpush1.msra.mxu0 %v480
      %513 = vmatprep.subr.mxu0 0.0
      %514 = vmatpush1.msra.mxu0 %v481
      %515 = vmatprep.subr.mxu0 0.0
      %516 = vmatpush1.msra.mxu0 %v482
      %517 = vmatprep.subr.mxu0 0.0
      %518 = vmatpush1.msra.mxu0 %v483
      %519 = vmatprep.subr.mxu0 0.0
      %520 = vmatpush1.msra.mxu0 %v484
      %521 = vmatprep.subr.mxu0 0.0
      %522 = vmatpush1.msra.mxu0 0.0
      %523 = vmatprep.subr.mxu0 0.0
      %524 = vmatpush1.msra.mxu0 0.0
      %525 = vmatprep.subr.mxu0 0.0
      %526 = vmatpush1.msra.mxu0 0.0
      %527 = vmatprep.subr.mxu0 0.0
      %528 = vmatpush1.msra.mxu0 0.0
      %529 = vmatprep.subr.mxu0 0.0
      %530 = vmatpush1.msra.mxu0 0.0
      %531 = vmatprep.subr.mxu0 0.0
      %532 = vmatpush1.msra.mxu0 0.0
      %533 = vmatprep.subr.mxu0 0.0
      %534 = vmatpush1.msra.mxu0 0.0
      %535 = vmatprep.subr.mxu0 0.0
      %536 = vmatpush1.msra.mxu0 0.0
      %537 = vmatprep.subr.mxu0 0.0
      %538 = vmatpush1.msra.mxu0 0.0
      %539 = vmatprep.subr.mxu0 0.0
      %540 = vmatpush1.msra.mxu0 0.0
      %541 = vmatprep.subr.mxu0 0.0
      %542 = vmatpush1.msra.mxu0 0.0
      %543 = vmatprep.subr.mxu0 0.0
      %544 = vmatpush1.msra.mxu0 0.0
      %545 = vmatprep.subr.mxu0 0.0
      %546 = vmatpush1.msra.mxu0 0.0
      %547 = vmatprep.subr.mxu0 0.0
      %548 = vmatpush1.msra.mxu0 0.0
      %549 = vmatprep.subr.mxu0 0.0
      %550 = vmatpush1.msra.mxu0 0.0
      %551 = vmatprep.subr.mxu0 0.0
      %552 = vmatpush1.msra.mxu0 0.0
      %553 = vmatprep.subr.mxu0 0.0
      %554 = vmatpush1.msra.mxu0 0.0
      %555 = vmatprep.subr.mxu0 0.0
      %556 = vmatpush1.msra.mxu0 0.0
      %557 = vmatprep.subr.mxu0 0.0
      %558 = vmatpush1.msra.mxu0 0.0
      %559 = vmatprep.subr.mxu0 0.0
      %560 = vmatpush1.msra.mxu0 0.0
      %561 = vmatprep.subr.mxu0 0.0
      %562 = vmatpush1.msra.mxu0 0.0
      %563 = vmatprep.subr.mxu0 0.0
      %564 = vmatpush1.msra.mxu0 0.0
      %565 = vmatprep.subr.mxu0 0.0
      %566 = vmatpush1.msra.mxu0 0.0
      %567 = vmatprep.subr.mxu0 0.0
      %568 = vmatpush1.msra.mxu0 0.0
      %569 = vmatprep.subr.mxu0 0.0
      %570 = vmatpush1.msra.mxu0 0.0
      %571 = vmatprep.subr.mxu0 0.0
      %572 = vmatpush1.msra.mxu0 0.0
      %573 = vmatprep.mubr.f32.mxu0 0.0
      %574 = vmatmul.mubr.f32.gmra.mrb[0].mxu0 %v486
      %v575 = vpop.f32.mrb[0].mxu0
      %v576 = vadd.f32 0.0, %v575
      %v577 = vpop.f32.mrb[0].mxu0
      %578 = vmatprep.mubr.f32.mxu0 0.0
      %579 = vmatmul.mubr.f32.gmra.mrb[0].mxu0 %v489
      %v580 = vpop.f32.mrb[0].mxu0
      %v581 = vadd.f32 0.0, %v580
      %v582 = vpop.f32.mrb[0].mxu0
      %583 = vmatprep.mubr.f32.mxu0 0.0
      %584 = vmatmul.mubr.f32.gmra.mrb[0].mxu0 %v492
      %v585 = vpop.f32.mrb[0].mxu0
      %v586 = vadd.f32 0.0, %v585
      %v587 = vpop.f32.mrb[0].mxu0
      %588 = vmatprep.mubr.f32.mxu0 0.0
      %589 = vmatmul.mubr.f32.gmra.mrb[0].mxu0 %v495
      %v590 = vpop.f32.mrb[0].mxu0
      %v591 = vadd.f32 0.0, %v590
      %v592 = vpop.f32.mrb[0].mxu0
      %593 = vmatprep.mubr.f32.mxu0 0.0
      %594 = vmatmul.mubr.f32.gmra.mrb[0].mxu0 %v498
      %v595 = vpop.f32.mrb[0].mxu0
      %v596 = vadd.f32 0.0, %v595
      %v597 = vpop.f32.mrb[0].mxu0
      %598 = vmatprep.mubr.f32.mxu0 0.0
      %599 = vmatmul.mubr.f32.gmra.mrb[0].mxu0 %v501
      %v600 = vpop.f32.mrb[0].mxu0
      %v601 = vadd.f32 0.0, %v600
      %v602 = vpop.f32.mrb[0].mxu0
      %603 = vmatprep.mubr.f32.mxu0 0.0
      %604 = vmatmul.mubr.f32.gmra.mrb[0].mxu0 %v504
      %v605 = vpop.f32.mrb[0].mxu0
      %v606 = vadd.f32 0.0, %v605
      %v607 = vpop.f32.mrb[0].mxu0
      %608 = vmatprep.mubr.f32.mxu0 0.0
      %609 = vmatmul.mubr.f32.gmra.mrb[0].mxu0 %v507
      %v610 = vpop.f32.mrb[0].mxu0
      %v611 = vadd.f32 0.0, %v610
      %v612 = vpop.f32.mrb[0].mxu0
      %613 = vdwg.mxu0
      %v614 = vadd.f32 %v432, %v576
      %v615 = vadd.f32 %v437, %v581
      %v616 = vadd.f32 %v442, %v586
      %v617 = vadd.f32 %v447, %v591
      %v618 = vadd.f32 %v452, %v596
      %v619 = vadd.f32 %v457, %v601
      %v620 = vadd.f32 %v462, %v606
      %v621 = vadd.f32 %v467, %v611
      %v622 = vld [vmem:[%s172 + $0x3] sm:$0xff]
      %v623 = vld [vmem:[%s172 + $0x13] sm:$0xff]
      %v624 = vld [vmem:[%s172 + $0x23] sm:$0xff]
      %v625 = vld [vmem:[%s172 + $0x33] sm:$0xff]
      %v626 = vld [vmem:[%s172 + $0x43] sm:$0xff]
      %v627 = vld [vmem:[%s172 + $0x53] sm:$0xff]
      %v628 = vld [vmem:[%s172 + $0x63] sm:$0xff]
      %v629 = vld [vmem:[%s172 + $0x73] sm:$0xff]
      %s630 = scalar_lea.vmem %s1, 144
      %v631 = vld [vmem:[%s630] sm:$0xff]
      %v632 = vld [vmem:[%s630 + $0x8] sm:$0xff]
      %v633 = vld [vmem:[%s630 + $0x10] sm:$0xff]
      %v634 = vld [vmem:[%s630 + $0x18] sm:$0xff]
      %v635 = vld [vmem:[%s630 + $0x20] sm:$0xff]
      %v636 = vld [vmem:[%s630 + $0x28] sm:$0xff]
      %v638 = vsel %vm211, %v622, 0
      %v641 = vsel %vm211, %v623, 0
      %v644 = vsel %vm211, %v624, 0
      %v647 = vsel %vm211, %v625, 0
      %v650 = vsel %vm211, %v626, 0
      %v653 = vsel %vm211, %v627, 0
      %v656 = vsel %vm211, %v628, 0
      %v659 = vsel %vm211, %v629, 0
      %661 = vmatprep.subr.mxu0 0.0
      %662 = vmatpush1.msra.mxu0 %v631
      %663 = vmatprep.subr.mxu0 0.0
      %664 = vmatpush1.msra.mxu0 %v632
      %665 = vmatprep.subr.mxu0 0.0
      %666 = vmatpush1.msra.mxu0 %v633
      %667 = vmatprep.subr.mxu0 0.0
      %668 = vmatpush1.msra.mxu0 %v634
      %669 = vmatprep.subr.mxu0 0.0
      %670 = vmatpush1.msra.mxu0 %v635
      %671 = vmatprep.subr.mxu0 0.0
      %672 = vmatpush1.msra.mxu0 %v636
      %673 = vmatprep.subr.mxu0 0.0
      %674 = vmatpush1.msra.mxu0 0.0
      %675 = vmatprep.subr.mxu0 0.0
      %676 = vmatpush1.msra.mxu0 0.0
      %677 = vmatprep.subr.mxu0 0.0
      %678 = vmatpush1.msra.mxu0 0.0
      %679 = vmatprep.subr.mxu0 0.0
      %680 = vmatpush1.msra.mxu0 0.0
      %681 = vmatprep.subr.mxu0 0.0
      %682 = vmatpush1.msra.mxu0 0.0
      %683 = vmatprep.subr.mxu0 0.0
      %684 = vmatpush1.msra.mxu0 0.0
      %685 = vmatprep.subr.mxu0 0.0
      %686 = vmatpush1.msra.mxu0 0.0
      %687 = vmatprep.subr.mxu0 0.0
      %688 = vmatpush1.msra.mxu0 0.0
      %689 = vmatprep.subr.mxu0 0.0
      %690 = vmatpush1.msra.mxu0 0.0
      %691 = vmatprep.subr.mxu0 0.0
      %692 = vmatpush1.msra.mxu0 0.0
      %693 = vmatprep.subr.mxu0 0.0
      %694 = vmatpush1.msra.mxu0 0.0
      %695 = vmatprep.subr.mxu0 0.0
      %696 = vmatpush1.msra.mxu0 0.0
      %697 = vmatprep.subr.mxu0 0.0
      %698 = vmatpush1.msra.mxu0 0.0
      %699 = vmatprep.subr.mxu0 0.0
      %700 = vmatpush1.msra.mxu0 0.0
      %701 = vmatprep.subr.mxu0 0.0
      %702 = vmatpush1.msra.mxu0 0.0
      %703 = vmatprep.subr.mxu0 0.0
      %704 = vmatpush1.msra.mxu0 0.0
      %705 = vmatprep.subr.mxu0 0.0
      %706 = vmatpush1.msra.mxu0 0.0
      %707 = vmatprep.subr.mxu0 0.0
      %708 = vmatpush1.msra.mxu0 0.0
      %709 = vmatprep.subr.mxu0 0.0
      %710 = vmatpush1.msra.mxu0 0.0
      %711 = vmatprep.subr.mxu0 0.0
      %712 = vmatpush1.msra.mxu0 0.0
      %713 = vmatprep.subr.mxu0 0.0
      %714 = vmatpush1.msra.mxu0 0.0
      %715 = vmatprep.subr.mxu0 0.0
      %716 = vmatpush1.msra.mxu0 0.0
      %717 = vmatprep.subr.mxu0 0.0
      %718 = vmatpush1.msra.mxu0 0.0
      %719 = vmatprep.subr.mxu0 0.0
      %720 = vmatpush1.msra.mxu0 0.0
      %721 = vmatprep.subr.mxu0 0.0
      %722 = vmatpush1.msra.mxu0 0.0
      %723 = vmatprep.subr.mxu0 0.0
      %724 = vmatpush1.msra.mxu0 0.0
      %725 = vmatprep.mubr.f32.mxu0 0.0
      %726 = vmatmul.mubr.f32.gmra.mrb[0].mxu0 %v638
      %v727 = vpop.f32.mrb[0].mxu0
      %v728 = vadd.f32 0.0, %v727
      %v729 = vpop.f32.mrb[0].mxu0
      %730 = vmatprep.mubr.f32.mxu0 0.0
      %731 = vmatmul.mubr.f32.gmra.mrb[0].mxu0 %v641
      %v732 = vpop.f32.mrb[0].mxu0
      %v733 = vadd.f32 0.0, %v732
      %v734 = vpop.f32.mrb[0].mxu0
      %735 = vmatprep.mubr.f32.mxu0 0.0
      %736 = vmatmul.mubr.f32.gmra.mrb[0].mxu0 %v644
      %v737 = vpop.f32.mrb[0].mxu0
      %v738 = vadd.f32 0.0, %v737
      %v739 = vpop.f32.mrb[0].mxu0
      %740 = vmatprep.mubr.f32.mxu0 0.0
      %741 = vmatmul.mubr.f32.gmra.mrb[0].mxu0 %v647
      %v742 = vpop.f32.mrb[0].mxu0
      %v743 = vadd.f32 0.0, %v742
      %v744 = vpop.f32.mrb[0].mxu0
      %745 = vmatprep.mubr.f32.mxu0 0.0
      %746 = vmatmul.mubr.f32.gmra.mrb[0].mxu0 %v650
      %v747 = vpop.f32.mrb[0].mxu0
      %v748 = vadd.f32 0.0, %v747
      %v749 = vpop.f32.mrb[0].mxu0
      %750 = vmatprep.mubr.f32.mxu0 0.0
      %751 = vmatmul.mubr.f32.gmra.mrb[0].mxu0 %v653
      %v752 = vpop.f32.mrb[0].mxu0
      %v753 = vadd.f32 0.0, %v752
      %v754 = vpop.f32.mrb[0].mxu0
      %755 = vmatprep.mubr.f32.mxu0 0.0
      %756 = vmatmul.mubr.f32.gmra.mrb[0].mxu0 %v656
      %v757 = vpop.f32.mrb[0].mxu0
      %v758 = vadd.f32 0.0, %v757
      %v759 = vpop.f32.mrb[0].mxu0
      %760 = vmatprep.mubr.f32.mxu0 0.0
      %761 = vmatmul.mubr.f32.gmra.mrb[0].mxu0 %v659
      %v762 = vpop.f32.mrb[0].mxu0
      %v763 = vadd.f32 0.0, %v762
      %v764 = vpop.f32.mrb[0].mxu0
      %765 = vdwg.mxu0
      %v766 = vadd.f32 %v614, %v728
      %v767 = vadd.f32 %v615, %v733
      %v768 = vadd.f32 %v616, %v738
      %v769 = vadd.f32 %v617, %v743
      %v770 = vadd.f32 %v618, %v748
      %v771 = vadd.f32 %v619, %v753
      %v772 = vadd.f32 %v620, %v758
      %v773 = vadd.f32 %v621, %v763
      %v774 = vld [vmem:[%s172 + $0x4] sm:$0xff]
      %v775 = vld [vmem:[%s172 + $0x14] sm:$0xff]
      %v776 = vld [vmem:[%s172 + $0x24] sm:$0xff]
      %v777 = vld [vmem:[%s172 + $0x34] sm:$0xff]
      %v778 = vld [vmem:[%s172 + $0x44] sm:$0xff]
      %v779 = vld [vmem:[%s172 + $0x54] sm:$0xff]
      %v780 = vld [vmem:[%s172 + $0x64] sm:$0xff]
      %v781 = vld [vmem:[%s172 + $0x74] sm:$0xff]
      %s782 = scalar_lea.vmem %s1, 192
      %v783 = vld [vmem:[%s782] sm:$0xff]
      %v784 = vld [vmem:[%s782 + $0x8] sm:$0xff]
      %v785 = vld [vmem:[%s782 + $0x10] sm:$0xff]
      %v786 = vld [vmem:[%s782 + $0x18] sm:$0xff]
      %v787 = vld [vmem:[%s782 + $0x20] sm:$0xff]
      %v788 = vld [vmem:[%s782 + $0x28] sm:$0xff]
      %v790 = vsel %vm211, %v774, 0
      %v793 = vsel %vm211, %v775, 0
      %v796 = vsel %vm211, %v776, 0
      %v799 = vsel %vm211, %v777, 0
      %v802 = vsel %vm211, %v778, 0
      %v805 = vsel %vm211, %v779, 0
      %v808 = vsel %vm211, %v780, 0
      %v811 = vsel %vm211, %v781, 0
      %813 = vmatprep.subr.mxu0 0.0
      %814 = vmatpush1.msra.mxu0 %v783
      %815 = vmatprep.subr.mxu0 0.0
      %816 = vmatpush1.msra.mxu0 %v784
      %817 = vmatprep.subr.mxu0 0.0
      %818 = vmatpush1.msra.mxu0 %v785
      %819 = vmatprep.subr.mxu0 0.0
      %820 = vmatpush1.msra.mxu0 %v786
      %821 = vmatprep.subr.mxu0 0.0
      %822 = vmatpush1.msra.mxu0 %v787
      %823 = vmatprep.subr.mxu0 0.0
      %824 = vmatpush1.msra.mxu0 %v788
      %825 = vmatprep.subr.mxu0 0.0
      %826 = vmatpush1.msra.mxu0 0.0
      %827 = vmatprep.subr.mxu0 0.0
      %828 = vmatpush1.msra.mxu0 0.0
      %829 = vmatprep.subr.mxu0 0.0
      %830 = vmatpush1.msra.mxu0 0.0
      %831 = vmatprep.subr.mxu0 0.0
      %832 = vmatpush1.msra.mxu0 0.0
      %833 = vmatprep.subr.mxu0 0.0
      %834 = vmatpush1.msra.mxu0 0.0
      %835 = vmatprep.subr.mxu0 0.0
      %836 = vmatpush1.msra.mxu0 0.0
      %837 = vmatprep.subr.mxu0 0.0
      %838 = vmatpush1.msra.mxu0 0.0
      %839 = vmatprep.subr.mxu0 0.0
      %840 = vmatpush1.msra.mxu0 0.0
      %841 = vmatprep.subr.mxu0 0.0
      %842 = vmatpush1.msra.mxu0 0.0
      %843 = vmatprep.subr.mxu0 0.0
      %844 = vmatpush1.msra.mxu0 0.0
      %845 = vmatprep.subr.mxu0 0.0
      %846 = vmatpush1.msra.mxu0 0.0
      %847 = vmatprep.subr.mxu0 0.0
      %848 = vmatpush1.msra.mxu0 0.0
      %849 = vmatprep.subr.mxu0 0.0
      %850 = vmatpush1.msra.mxu0 0.0
      %851 = vmatprep.subr.mxu0 0.0
      %852 = vmatpush1.msra.mxu0 0.0
      %853 = vmatprep.subr.mxu0 0.0
      %854 = vmatpush1.msra.mxu0 0.0
      %855 = vmatprep.subr.mxu0 0.0
      %856 = vmatpush1.msra.mxu0 0.0
      %857 = vmatprep.subr.mxu0 0.0
      %858 = vmatpush1.msra.mxu0 0.0
      %859 = vmatprep.subr.mxu0 0.0
      %860 = vmatpush1.msra.mxu0 0.0
      %861 = vmatprep.subr.mxu0 0.0
      %862 = vmatpush1.msra.mxu0 0.0
      %863 = vmatprep.subr.mxu0 0.0
      %864 = vmatpush1.msra.mxu0 0.0
      %865 = vmatprep.subr.mxu0 0.0
      %866 = vmatpush1.msra.mxu0 0.0
      %867 = vmatprep.subr.mxu0 0.0
      %868 = vmatpush1.msra.mxu0 0.0
      %869 = vmatprep.subr.mxu0 0.0
      %870 = vmatpush1.msra.mxu0 0.0
      %871 = vmatprep.subr.mxu0 0.0
      %872 = vmatpush1.msra.mxu0 0.0
      %873 = vmatprep.subr.mxu0 0.0
      %874 = vmatpush1.msra.mxu0 0.0
      %875 = vmatprep.subr.mxu0 0.0
      %876 = vmatpush1.msra.mxu0 0.0
      %877 = vmatprep.mubr.f32.mxu0 0.0
      %878 = vmatmul.mubr.f32.gmra.mrb[0].mxu0 %v790
      %v879 = vpop.f32.mrb[0].mxu0
      %v880 = vadd.f32 0.0, %v879
      %v881 = vpop.f32.mrb[0].mxu0
      %882 = vmatprep.mubr.f32.mxu0 0.0
      %883 = vmatmul.mubr.f32.gmra.mrb[0].mxu0 %v793
      %v884 = vpop.f32.mrb[0].mxu0
      %v885 = vadd.f32 0.0, %v884
      %v886 = vpop.f32.mrb[0].mxu0
      %887 = vmatprep.mubr.f32.mxu0 0.0
      %888 = vmatmul.mubr.f32.gmra.mrb[0].mxu0 %v796
      %v889 = vpop.f32.mrb[0].mxu0
      %v890 = vadd.f32 0.0, %v889
      %v891 = vpop.f32.mrb[0].mxu0
      %892 = vmatprep.mubr.f32.mxu0 0.0
      %893 = vmatmul.mubr.f32.gmra.mrb[0].mxu0 %v799
      %v894 = vpop.f32.mrb[0].mxu0
      %v895 = vadd.f32 0.0, %v894
      %v896 = vpop.f32.mrb[0].mxu0
      %897 = vmatprep.mubr.f32.mxu0 0.0
      %898 = vmatmul.mubr.f32.gmra.mrb[0].mxu0 %v802
      %v899 = vpop.f32.mrb[0].mxu0
      %v900 = vadd.f32 0.0, %v899
      %v901 = vpop.f32.mrb[0].mxu0
      %902 = vmatprep.mubr.f32.mxu0 0.0
      %903 = vmatmul.mubr.f32.gmra.mrb[0].mxu0 %v805
      %v904 = vpop.f32.mrb[0].mxu0
      %v905 = vadd.f32 0.0, %v904
      %v906 = vpop.f32.mrb[0].mxu0
      %907 = vmatprep.mubr.f32.mxu0 0.0
      %908 = vmatmul.mubr.f32.gmra.mrb[0].mxu0 %v808
      %v909 = vpop.f32.mrb[0].mxu0
      %v910 = vadd.f32 0.0, %v909
      %v911 = vpop.f32.mrb[0].mxu0
      %912 = vmatprep.mubr.f32.mxu0 0.0
      %913 = vmatmul.mubr.f32.gmra.mrb[0].mxu0 %v811
      %v914 = vpop.f32.mrb[0].mxu0
      %v915 = vadd.f32 0.0, %v914
      %v916 = vpop.f32.mrb[0].mxu0
      %917 = vdwg.mxu0
      %v918 = vadd.f32 %v766, %v880
      %v919 = vadd.f32 %v767, %v885
      %v920 = vadd.f32 %v768, %v890
      %v921 = vadd.f32 %v769, %v895
      %v922 = vadd.f32 %v770, %v900
      %v923 = vadd.f32 %v771, %v905
      %v924 = vadd.f32 %v772, %v910
      %v925 = vadd.f32 %v773, %v915
      %s926 = scalar_lea.vmem %s172, 16
      %v927 = vld [vmem:[%s926] sm:$0xff]
      %v928 = vld [vmem:[%s926 + $0x10] sm:$0xff]
      %v929 = vld [vmem:[%s926 + $0x20] sm:$0xff]
      %v930 = vld [vmem:[%s926 + $0x30] sm:$0xff]
      %v931 = vld [vmem:[%s926 + $0x40] sm:$0xff]
      %v932 = vld [vmem:[%s926 + $0x50] sm:$0xff]
      %v933 = vld [vmem:[%s926 + $0x60] sm:$0xff]
      %v934 = vld [vmem:[%s926 + $0x70] sm:$0xff]
      %s935 = scalar_lea.vmem %s1, 240
      %v936 = vld [vmem:[%s935] sm:$0xff]
      %v937 = vld [vmem:[%s935 + $0x8] sm:$0xff]
      %v938 = vld [vmem:[%s935 + $0x10] sm:$0xff]
      %v939 = vld [vmem:[%s935 + $0x18] sm:$0xff]
      %v940 = vld [vmem:[%s935 + $0x20] sm:$0xff]
      %v941 = vld [vmem:[%s935 + $0x28] sm:$0xff]
      %v943 = vsel %vm211, %v927, 0
      %v946 = vsel %vm211, %v928, 0
      %v949 = vsel %vm211, %v929, 0
      %v952 = vsel %vm211, %v930, 0
      %v955 = vsel %vm211, %v931, 0
      %v958 = vsel %vm211, %v932, 0
      %v961 = vsel %vm211, %v933, 0
      %v964 = vsel %vm211, %v934, 0
      %966 = vmatprep.subr.mxu0 0.0
      %967 = vmatpush1.msra.mxu0 %v936
      %968 = vmatprep.subr.mxu0 0.0
      %969 = vmatpush1.msra.mxu0 %v937
      %970 = vmatprep.subr.mxu0 0.0
      %971 = vmatpush1.msra.mxu0 %v938
      %972 = vmatprep.subr.mxu0 0.0
      %973 = vmatpush1.msra.mxu0 %v939
      %974 = vmatprep.subr.mxu0 0.0
      %975 = vmatpush1.msra.mxu0 %v940
      %976 = vmatprep.subr.mxu0 0.0
      %977 = vmatpush1.msra.mxu0 %v941
      %978 = vmatprep.subr.mxu0 0.0
      %979 = vmatpush1.msra.mxu0 0.0
      %980 = vmatprep.subr.mxu0 0.0
      %981 = vmatpush1.msra.mxu0 0.0
      %982 = vmatprep.subr.mxu0 0.0
      %983 = vmatpush1.msra.mxu0 0.0
      %984 = vmatprep.subr.mxu0 0.0
      %985 = vmatpush1.msra.mxu0 0.0
      %986 = vmatprep.subr.mxu0 0.0
      %987 = vmatpush1.msra.mxu0 0.0
      %988 = vmatprep.subr.mxu0 0.0
      %989 = vmatpush1.msra.mxu0 0.0
      %990 = vmatprep.subr.mxu0 0.0
      %991 = vmatpush1.msra.mxu0 0.0
      %992 = vmatprep.subr.mxu0 0.0
      %993 = vmatpush1.msra.mxu0 0.0
      %994 = vmatprep.subr.mxu0 0.0
      %995 = vmatpush1.msra.mxu0 0.0
      %996 = vmatprep.subr.mxu0 0.0
      %997 = vmatpush1.msra.mxu0 0.0
      %998 = vmatprep.subr.mxu0 0.0
      %999 = vmatpush1.msra.mxu0 0.0
      %1000 = vmatprep.subr.mxu0 0.0
      %1001 = vmatpush1.msra.mxu0 0.0
      %1002 = vmatprep.subr.mxu0 0.0
      %1003 = vmatpush1.msra.mxu0 0.0
      %1004 = vmatprep.subr.mxu0 0.0
      %1005 = vmatpush1.msra.mxu0 0.0
      %1006 = vmatprep.subr.mxu0 0.0
      %1007 = vmatpush1.msra.mxu0 0.0
      %1008 = vmatprep.subr.mxu0 0.0
      %1009 = vmatpush1.msra.mxu0 0.0
      %1010 = vmatprep.subr.mxu0 0.0
      %1011 = vmatpush1.msra.mxu0 0.0
      %1012 = vmatprep.subr.mxu0 0.0
      %1013 = vmatpush1.msra.mxu0 0.0
      %1014 = vmatprep.subr.mxu0 0.0
      %1015 = vmatpush1.msra.mxu0 0.0
      %1016 = vmatprep.subr.mxu0 0.0
      %1017 = vmatpush1.msra.mxu0 0.0
      %1018 = vmatprep.subr.mxu0 0.0
      %1019 = vmatpush1.msra.mxu0 0.0
      %1020 = vmatprep.subr.mxu0 0.0
      %1021 = vmatpush1.msra.mxu0 0.0
      %1022 = vmatprep.subr.mxu0 0.0
      %1023 = vmatpush1.msra.mxu0 0.0
      %1024 = vmatprep.subr.mxu0 0.0
      %1025 = vmatpush1.msra.mxu0 0.0
      %1026 = vmatprep.subr.mxu0 0.0
      %1027 = vmatpush1.msra.mxu0 0.0
      %1028 = vmatprep.subr.mxu0 0.0
      %1029 = vmatpush1.msra.mxu0 0.0
      %1030 = vmatprep.mubr.f32.mxu0 0.0
      %1031 = vmatmul.mubr.f32.gmra.mrb[0].mxu0 %v943
      %v1032 = vpop.f32.mrb[0].mxu0
      %v1033 = vadd.f32 0.0, %v1032
      %v1034 = vpop.f32.mrb[0].mxu0
      %1035 = vmatprep.mubr.f32.mxu0 0.0
      %1036 = vmatmul.mubr.f32.gmra.mrb[0].mxu0 %v946
      %v1037 = vpop.f32.mrb[0].mxu0
      %v1038 = vadd.f32 0.0, %v1037
      %v1039 = vpop.f32.mrb[0].mxu0
      %1040 = vmatprep.mubr.f32.mxu0 0.0
      %1041 = vmatmul.mubr.f32.gmra.mrb[0].mxu0 %v949
      %v1042 = vpop.f32.mrb[0].mxu0
      %v1043 = vadd.f32 0.0, %v1042
      %v1044 = vpop.f32.mrb[0].mxu0
      %1045 = vmatprep.mubr.f32.mxu0 0.0
      %1046 = vmatmul.mubr.f32.gmra.mrb[0].mxu0 %v952
      %v1047 = vpop.f32.mrb[0].mxu0
      %v1048 = vadd.f32 0.0, %v1047
      %v1049 = vpop.f32.mrb[0].mxu0
      %1050 = vmatprep.mubr.f32.mxu0 0.0
      %1051 = vmatmul.mubr.f32.gmra.mrb[0].mxu0 %v955
      %v1052 = vpop.f32.mrb[0].mxu0
      %v1053 = vadd.f32 0.0, %v1052
      %v1054 = vpop.f32.mrb[0].mxu0
      %1055 = vmatprep.mubr.f32.mxu0 0.0
      %1056 = vmatmul.mubr.f32.gmra.mrb[0].mxu0 %v958
      %v1057 = vpop.f32.mrb[0].mxu0
      %v1058 = vadd.f32 0.0, %v1057
      %v1059 = vpop.f32.mrb[0].mxu0
      %1060 = vmatprep.mubr.f32.mxu0 0.0
      %1061 = vmatmul.mubr.f32.gmra.mrb[0].mxu0 %v961
      %v1062 = vpop.f32.mrb[0].mxu0
      %v1063 = vadd.f32 0.0, %v1062
      %v1064 = vpop.f32.mrb[0].mxu0
      %1065 = vmatprep.mubr.f32.mxu0 0.0
      %1066 = vmatmul.mubr.f32.gmra.mrb[0].mxu0 %v964
      %v1067 = vpop.f32.mrb[0].mxu0
      %v1068 = vadd.f32 0.0, %v1067
      %v1069 = vpop.f32.mrb[0].mxu0
      %1070 = vdwg.mxu0
      %v1071 = vadd.f32 %v918, %v1033
      %v1072 = vadd.f32 %v919, %v1038
      %v1073 = vadd.f32 %v920, %v1043
      %v1074 = vadd.f32 %v921, %v1048
      %v1075 = vadd.f32 %v922, %v1053
      %v1076 = vadd.f32 %v923, %v1058
      %v1077 = vadd.f32 %v924, %v1063
      %v1078 = vadd.f32 %v925, %v1068
      %v1079 = vld [vmem:[%s926 + $0x1] sm:$0xff]
      %v1080 = vld [vmem:[%s926 + $0x11] sm:$0xff]
      %v1081 = vld [vmem:[%s926 + $0x21] sm:$0xff]
      %v1082 = vld [vmem:[%s926 + $0x31] sm:$0xff]
      %v1083 = vld [vmem:[%s926 + $0x41] sm:$0xff]
      %v1084 = vld [vmem:[%s926 + $0x51] sm:$0xff]
      %v1085 = vld [vmem:[%s926 + $0x61] sm:$0xff]
      %v1086 = vld [vmem:[%s926 + $0x71] sm:$0xff]
      %s1087 = scalar_lea.vmem %s1, 288
      %v1088 = vld [vmem:[%s1087] sm:$0xff]
      %v1089 = vld [vmem:[%s1087 + $0x8] sm:$0xff]
      %v1090 = vld [vmem:[%s1087 + $0x10] sm:$0xff]
      %v1091 = vld [vmem:[%s1087 + $0x18] sm:$0xff]
      %v1092 = vld [vmem:[%s1087 + $0x20] sm:$0xff]
      %v1093 = vld [vmem:[%s1087 + $0x28] sm:$0xff]
      %v1095 = vsel %vm211, %v1079, 0
      %v1098 = vsel %vm211, %v1080, 0
      %v1101 = vsel %vm211, %v1081, 0
      %v1104 = vsel %vm211, %v1082, 0
      %v1107 = vsel %vm211, %v1083, 0
      %v1110 = vsel %vm211, %v1084, 0
      %v1113 = vsel %vm211, %v1085, 0
      %v1116 = vsel %vm211, %v1086, 0
      %1118 = vmatprep.subr.mxu0 0.0
      %1119 = vmatpush1.msra.mxu0 %v1088
      %1120 = vmatprep.subr.mxu0 0.0
      %1121 = vmatpush1.msra.mxu0 %v1089
      %1122 = vmatprep.subr.mxu0 0.0
      %1123 = vmatpush1.msra.mxu0 %v1090
      %1124 = vmatprep.subr.mxu0 0.0
      %1125 = vmatpush1.msra.mxu0 %v1091
      %1126 = vmatprep.subr.mxu0 0.0
      %1127 = vmatpush1.msra.mxu0 %v1092
      %1128 = vmatprep.subr.mxu0 0.0
      %1129 = vmatpush1.msra.mxu0 %v1093
      %1130 = vmatprep.subr.mxu0 0.0
      %1131 = vmatpush1.msra.mxu0 0.0
      %1132 = vmatprep.subr.mxu0 0.0
      %1133 = vmatpush1.msra.mxu0 0.0
      %1134 = vmatprep.subr.mxu0 0.0
      %1135 = vmatpush1.msra.mxu0 0.0
      %1136 = vmatprep.subr.mxu0 0.0
      %1137 = vmatpush1.msra.mxu0 0.0
      %1138 = vmatprep.subr.mxu0 0.0
      %1139 = vmatpush1.msra.mxu0 0.0
      %1140 = vmatprep.subr.mxu0 0.0
      %1141 = vmatpush1.msra.mxu0 0.0
      %1142 = vmatprep.subr.mxu0 0.0
      %1143 = vmatpush1.msra.mxu0 0.0
      %1144 = vmatprep.subr.mxu0 0.0
      %1145 = vmatpush1.msra.mxu0 0.0
      %1146 = vmatprep.subr.mxu0 0.0
      %1147 = vmatpush1.msra.mxu0 0.0
      %1148 = vmatprep.subr.mxu0 0.0
      %1149 = vmatpush1.msra.mxu0 0.0
      %1150 = vmatprep.subr.mxu0 0.0
      %1151 = vmatpush1.msra.mxu0 0.0
      %1152 = vmatprep.subr.mxu0 0.0
      %1153 = vmatpush1.msra.mxu0 0.0
      %1154 = vmatprep.subr.mxu0 0.0
      %1155 = vmatpush1.msra.mxu0 0.0
      %1156 = vmatprep.subr.mxu0 0.0
      %1157 = vmatpush1.msra.mxu0 0.0
      %1158 = vmatprep.subr.mxu0 0.0
      %1159 = vmatpush1.msra.mxu0 0.0
      %1160 = vmatprep.subr.mxu0 0.0
      %1161 = vmatpush1.msra.mxu0 0.0
      %1162 = vmatprep.subr.mxu0 0.0
      %1163 = vmatpush1.msra.mxu0 0.0
      %1164 = vmatprep.subr.mxu0 0.0
      %1165 = vmatpush1.msra.mxu0 0.0
      %1166 = vmatprep.subr.mxu0 0.0
      %1167 = vmatpush1.msra.mxu0 0.0
      %1168 = vmatprep.subr.mxu0 0.0
      %1169 = vmatpush1.msra.mxu0 0.0
      %1170 = vmatprep.subr.mxu0 0.0
      %1171 = vmatpush1.msra.mxu0 0.0
      %1172 = vmatprep.subr.mxu0 0.0
      %1173 = vmatpush1.msra.mxu0 0.0
      %1174 = vmatprep.subr.mxu0 0.0
      %1175 = vmatpush1.msra.mxu0 0.0
      %1176 = vmatprep.subr.mxu0 0.0
      %1177 = vmatpush1.msra.mxu0 0.0
      %1178 = vmatprep.subr.mxu0 0.0
      %1179 = vmatpush1.msra.mxu0 0.0
      %1180 = vmatprep.subr.mxu0 0.0
      %1181 = vmatpush1.msra.mxu0 0.0
      %1182 = vmatprep.mubr.f32.mxu0 0.0
      %1183 = vmatmul.mubr.f32.gmra.mrb[0].mxu0 %v1095
      %v1184 = vpop.f32.mrb[0].mxu0
      %v1185 = vadd.f32 0.0, %v1184
      %v1186 = vpop.f32.mrb[0].mxu0
      %1187 = vmatprep.mubr.f32.mxu0 0.0
      %1188 = vmatmul.mubr.f32.gmra.mrb[0].mxu0 %v1098
      %v1189 = vpop.f32.mrb[0].mxu0
      %v1190 = vadd.f32 0.0, %v1189
      %v1191 = vpop.f32.mrb[0].mxu0
      %1192 = vmatprep.mubr.f32.mxu0 0.0
      %1193 = vmatmul.mubr.f32.gmra.mrb[0].mxu0 %v1101
      %v1194 = vpop.f32.mrb[0].mxu0
      %v1195 = vadd.f32 0.0, %v1194
      %v1196 = vpop.f32.mrb[0].mxu0
      %1197 = vmatprep.mubr.f32.mxu0 0.0
      %1198 = vmatmul.mubr.f32.gmra.mrb[0].mxu0 %v1104
      %v1199 = vpop.f32.mrb[0].mxu0
      %v1200 = vadd.f32 0.0, %v1199
      %v1201 = vpop.f32.mrb[0].mxu0
      %1202 = vmatprep.mubr.f32.mxu0 0.0
      %1203 = vmatmul.mubr.f32.gmra.mrb[0].mxu0 %v1107
      %v1204 = vpop.f32.mrb[0].mxu0
      %v1205 = vadd.f32 0.0, %v1204
      %v1206 = vpop.f32.mrb[0].mxu0
      %1207 = vmatprep.mubr.f32.mxu0 0.0
      %1208 = vmatmul.mubr.f32.gmra.mrb[0].mxu0 %v1110
      %v1209 = vpop.f32.mrb[0].mxu0
      %v1210 = vadd.f32 0.0, %v1209
      %v1211 = vpop.f32.mrb[0].mxu0
      %1212 = vmatprep.mubr.f32.mxu0 0.0
      %1213 = vmatmul.mubr.f32.gmra.mrb[0].mxu0 %v1113
      %v1214 = vpop.f32.mrb[0].mxu0
      %v1215 = vadd.f32 0.0, %v1214
      %v1216 = vpop.f32.mrb[0].mxu0
      %1217 = vmatprep.mubr.f32.mxu0 0.0
      %1218 = vmatmul.mubr.f32.gmra.mrb[0].mxu0 %v1116
      %v1219 = vpop.f32.mrb[0].mxu0
      %v1220 = vadd.f32 0.0, %v1219
      %v1221 = vpop.f32.mrb[0].mxu0
      %1222 = vdwg.mxu0
      %v1223 = vadd.f32 %v1071, %v1185
      %v1224 = vadd.f32 %v1072, %v1190
      %v1225 = vadd.f32 %v1073, %v1195
      %v1226 = vadd.f32 %v1074, %v1200
      %v1227 = vadd.f32 %v1075, %v1205
      %v1228 = vadd.f32 %v1076, %v1210
      %v1229 = vadd.f32 %v1077, %v1215
      %v1230 = vadd.f32 %v1078, %v1220
      %v1231 = vld [vmem:[%s926 + $0x2] sm:$0xff]
      %v1232 = vld [vmem:[%s926 + $0x12] sm:$0xff]
      %v1233 = vld [vmem:[%s926 + $0x22] sm:$0xff]
      %v1234 = vld [vmem:[%s926 + $0x32] sm:$0xff]
      %v1235 = vld [vmem:[%s926 + $0x42] sm:$0xff]
      %v1236 = vld [vmem:[%s926 + $0x52] sm:$0xff]
      %v1237 = vld [vmem:[%s926 + $0x62] sm:$0xff]
      %v1238 = vld [vmem:[%s926 + $0x72] sm:$0xff]
      %s1239 = scalar_lea.vmem %s1, 336
      %v1240 = vld [vmem:[%s1239] sm:$0xff]
      %v1241 = vld [vmem:[%s1239 + $0x8] sm:$0xff]
      %v1242 = vld [vmem:[%s1239 + $0x10] sm:$0xff]
      %v1243 = vld [vmem:[%s1239 + $0x18] sm:$0xff]
      %v1244 = vld [vmem:[%s1239 + $0x20] sm:$0xff]
      %v1245 = vld [vmem:[%s1239 + $0x28] sm:$0xff]
      %v1247 = vsel %vm211, %v1231, 0
      %v1250 = vsel %vm211, %v1232, 0
      %v1253 = vsel %vm211, %v1233, 0
      %v1256 = vsel %vm211, %v1234, 0
      %v1259 = vsel %vm211, %v1235, 0
      %v1262 = vsel %vm211, %v1236, 0
      %v1265 = vsel %vm211, %v1237, 0
      %v1268 = vsel %vm211, %v1238, 0
      %1270 = vmatprep.subr.mxu0 0.0
      %1271 = vmatpush1.msra.mxu0 %v1240
      %1272 = vmatprep.subr.mxu0 0.0
      %1273 = vmatpush1.msra.mxu0 %v1241
      %1274 = vmatprep.subr.mxu0 0.0
      %1275 = vmatpush1.msra.mxu0 %v1242
      %1276 = vmatprep.subr.mxu0 0.0
      %1277 = vmatpush1.msra.mxu0 %v1243
      %1278 = vmatprep.subr.mxu0 0.0
      %1279 = vmatpush1.msra.mxu0 %v1244
      %1280 = vmatprep.subr.mxu0 0.0
      %1281 = vmatpush1.msra.mxu0 %v1245
      %1282 = vmatprep.subr.mxu0 0.0
      %1283 = vmatpush1.msra.mxu0 0.0
      %1284 = vmatprep.subr.mxu0 0.0
      %1285 = vmatpush1.msra.mxu0 0.0
      %1286 = vmatprep.subr.mxu0 0.0
      %1287 = vmatpush1.msra.mxu0 0.0
      %1288 = vmatprep.subr.mxu0 0.0
      %1289 = vmatpush1.msra.mxu0 0.0
      %1290 = vmatprep.subr.mxu0 0.0
      %1291 = vmatpush1.msra.mxu0 0.0
      %1292 = vmatprep.subr.mxu0 0.0
      %1293 = vmatpush1.msra.mxu0 0.0
      %1294 = vmatprep.subr.mxu0 0.0
      %1295 = vmatpush1.msra.mxu0 0.0
      %1296 = vmatprep.subr.mxu0 0.0
      %1297 = vmatpush1.msra.mxu0 0.0
      %1298 = vmatprep.subr.mxu0 0.0
      %1299 = vmatpush1.msra.mxu0 0.0
      %1300 = vmatprep.subr.mxu0 0.0
      %1301 = vmatpush1.msra.mxu0 0.0
      %1302 = vmatprep.subr.mxu0 0.0
      %1303 = vmatpush1.msra.mxu0 0.0
      %1304 = vmatprep.subr.mxu0 0.0
      %1305 = vmatpush1.msra.mxu0 0.0
      %1306 = vmatprep.subr.mxu0 0.0
      %1307 = vmatpush1.msra.mxu0 0.0
      %1308 = vmatprep.subr.mxu0 0.0
      %1309 = vmatpush1.msra.mxu0 0.0
      %1310 = vmatprep.subr.mxu0 0.0
      %1311 = vmatpush1.msra.mxu0 0.0
      %1312 = vmatprep.subr.mxu0 0.0
      %1313 = vmatpush1.msra.mxu0 0.0
      %1314 = vmatprep.subr.mxu0 0.0
      %1315 = vmatpush1.msra.mxu0 0.0
      %1316 = vmatprep.subr.mxu0 0.0
      %1317 = vmatpush1.msra.mxu0 0.0
      %1318 = vmatprep.subr.mxu0 0.0
      %1319 = vmatpush1.msra.mxu0 0.0
      %1320 = vmatprep.subr.mxu0 0.0
      %1321 = vmatpush1.msra.mxu0 0.0
      %1322 = vmatprep.subr.mxu0 0.0
      %1323 = vmatpush1.msra.mxu0 0.0
      %1324 = vmatprep.subr.mxu0 0.0
      %1325 = vmatpush1.msra.mxu0 0.0
      %1326 = vmatprep.subr.mxu0 0.0
      %1327 = vmatpush1.msra.mxu0 0.0
      %1328 = vmatprep.subr.mxu0 0.0
      %1329 = vmatpush1.msra.mxu0 0.0
      %1330 = vmatprep.subr.mxu0 0.0
      %1331 = vmatpush1.msra.mxu0 0.0
      %1332 = vmatprep.subr.mxu0 0.0
      %1333 = vmatpush1.msra.mxu0 0.0
      %1334 = vmatprep.mubr.f32.mxu0 0.0
      %1335 = vmatmul.mubr.f32.gmra.mrb[0].mxu0 %v1247
      %v1336 = vpop.f32.mrb[0].mxu0
      %v1337 = vadd.f32 0.0, %v1336
      %v1338 = vpop.f32.mrb[0].mxu0
      %1339 = vmatprep.mubr.f32.mxu0 0.0
      %1340 = vmatmul.mubr.f32.gmra.mrb[0].mxu0 %v1250
      %v1341 = vpop.f32.mrb[0].mxu0
      %v1342 = vadd.f32 0.0, %v1341
      %v1343 = vpop.f32.mrb[0].mxu0
      %1344 = vmatprep.mubr.f32.mxu0 0.0
      %1345 = vmatmul.mubr.f32.gmra.mrb[0].mxu0 %v1253
      %v1346 = vpop.f32.mrb[0].mxu0
      %v1347 = vadd.f32 0.0, %v1346
      %v1348 = vpop.f32.mrb[0].mxu0
      %1349 = vmatprep.mubr.f32.mxu0 0.0
      %1350 = vmatmul.mubr.f32.gmra.mrb[0].mxu0 %v1256
      %v1351 = vpop.f32.mrb[0].mxu0
      %v1352 = vadd.f32 0.0, %v1351
      %v1353 = vpop.f32.mrb[0].mxu0
      %1354 = vmatprep.mubr.f32.mxu0 0.0
      %1355 = vmatmul.mubr.f32.gmra.mrb[0].mxu0 %v1259
      %v1356 = vpop.f32.mrb[0].mxu0
      %v1357 = vadd.f32 0.0, %v1356
      %v1358 = vpop.f32.mrb[0].mxu0
      %1359 = vmatprep.mubr.f32.mxu0 0.0
      %1360 = vmatmul.mubr.f32.gmra.mrb[0].mxu0 %v1262
      %v1361 = vpop.f32.mrb[0].mxu0
      %v1362 = vadd.f32 0.0, %v1361
      %v1363 = vpop.f32.mrb[0].mxu0
      %1364 = vmatprep.mubr.f32.mxu0 0.0
      %1365 = vmatmul.mubr.f32.gmra.mrb[0].mxu0 %v1265
      %v1366 = vpop.f32.mrb[0].mxu0
      %v1367 = vadd.f32 0.0, %v1366
      %v1368 = vpop.f32.mrb[0].mxu0
      %1369 = vmatprep.mubr.f32.mxu0 0.0
      %1370 = vmatmul.mubr.f32.gmra.mrb[0].mxu0 %v1268
      %v1371 = vpop.f32.mrb[0].mxu0
      %v1372 = vadd.f32 0.0, %v1371
      %v1373 = vpop.f32.mrb[0].mxu0
      %1374 = vdwg.mxu0
      %v1375 = vadd.f32 %v1223, %v1337
      %v1376 = vadd.f32 %v1224, %v1342
      %v1377 = vadd.f32 %v1225, %v1347
      %v1378 = vadd.f32 %v1226, %v1352
      %v1379 = vadd.f32 %v1227, %v1357
      %v1380 = vadd.f32 %v1228, %v1362
      %v1381 = vadd.f32 %v1229, %v1367
      %v1382 = vadd.f32 %v1230, %v1372
      %v1383 = vld [vmem:[%s926 + $0x3] sm:$0xff]
      %v1384 = vld [vmem:[%s926 + $0x13] sm:$0xff]
      %v1385 = vld [vmem:[%s926 + $0x23] sm:$0xff]
      %v1386 = vld [vmem:[%s926 + $0x33] sm:$0xff]
      %v1387 = vld [vmem:[%s926 + $0x43] sm:$0xff]
      %v1388 = vld [vmem:[%s926 + $0x53] sm:$0xff]
      %v1389 = vld [vmem:[%s926 + $0x63] sm:$0xff]
      %v1390 = vld [vmem:[%s926 + $0x73] sm:$0xff]
      %s1391 = scalar_lea.vmem %s1, 384
      %v1392 = vld [vmem:[%s1391] sm:$0xff]
      %v1393 = vld [vmem:[%s1391 + $0x8] sm:$0xff]
      %v1394 = vld [vmem:[%s1391 + $0x10] sm:$0xff]
      %v1395 = vld [vmem:[%s1391 + $0x18] sm:$0xff]
      %v1396 = vld [vmem:[%s1391 + $0x20] sm:$0xff]
      %v1397 = vld [vmem:[%s1391 + $0x28] sm:$0xff]
      %v1399 = vsel %vm211, %v1383, 0
      %v1402 = vsel %vm211, %v1384, 0
      %v1405 = vsel %vm211, %v1385, 0
      %v1408 = vsel %vm211, %v1386, 0
      %v1411 = vsel %vm211, %v1387, 0
      %v1414 = vsel %vm211, %v1388, 0
      %v1417 = vsel %vm211, %v1389, 0
      %v1420 = vsel %vm211, %v1390, 0
      %1422 = vmatprep.subr.mxu0 0.0
      %1423 = vmatpush1.msra.mxu0 %v1392
      %1424 = vmatprep.subr.mxu0 0.0
      %1425 = vmatpush1.msra.mxu0 %v1393
      %1426 = vmatprep.subr.mxu0 0.0
      %1427 = vmatpush1.msra.mxu0 %v1394
      %1428 = vmatprep.subr.mxu0 0.0
      %1429 = vmatpush1.msra.mxu0 %v1395
      %1430 = vmatprep.subr.mxu0 0.0
      %1431 = vmatpush1.msra.mxu0 %v1396
      %1432 = vmatprep.subr.mxu0 0.0
      %1433 = vmatpush1.msra.mxu0 %v1397
      %1434 = vmatprep.subr.mxu0 0.0
      %1435 = vmatpush1.msra.mxu0 0.0
      %1436 = vmatprep.subr.mxu0 0.0
      %1437 = vmatpush1.msra.mxu0 0.0
      %1438 = vmatprep.subr.mxu0 0.0
      %1439 = vmatpush1.msra.mxu0 0.0
      %1440 = vmatprep.subr.mxu0 0.0
      %1441 = vmatpush1.msra.mxu0 0.0
      %1442 = vmatprep.subr.mxu0 0.0
      %1443 = vmatpush1.msra.mxu0 0.0
      %1444 = vmatprep.subr.mxu0 0.0
      %1445 = vmatpush1.msra.mxu0 0.0
      %1446 = vmatprep.subr.mxu0 0.0
      %1447 = vmatpush1.msra.mxu0 0.0
      %1448 = vmatprep.subr.mxu0 0.0
      %1449 = vmatpush1.msra.mxu0 0.0
      %1450 = vmatprep.subr.mxu0 0.0
      %1451 = vmatpush1.msra.mxu0 0.0
      %1452 = vmatprep.subr.mxu0 0.0
      %1453 = vmatpush1.msra.mxu0 0.0
      %1454 = vmatprep.subr.mxu0 0.0
      %1455 = vmatpush1.msra.mxu0 0.0
      %1456 = vmatprep.subr.mxu0 0.0
      %1457 = vmatpush1.msra.mxu0 0.0
      %1458 = vmatprep.subr.mxu0 0.0
      %1459 = vmatpush1.msra.mxu0 0.0
      %1460 = vmatprep.subr.mxu0 0.0
      %1461 = vmatpush1.msra.mxu0 0.0
      %1462 = vmatprep.subr.mxu0 0.0
      %1463 = vmatpush1.msra.mxu0 0.0
      %1464 = vmatprep.subr.mxu0 0.0
      %1465 = vmatpush1.msra.mxu0 0.0
      %1466 = vmatprep.subr.mxu0 0.0
      %1467 = vmatpush1.msra.mxu0 0.0
      %1468 = vmatprep.subr.mxu0 0.0
      %1469 = vmatpush1.msra.mxu0 0.0
      %1470 = vmatprep.subr.mxu0 0.0
      %1471 = vmatpush1.msra.mxu0 0.0
      %1472 = vmatprep.subr.mxu0 0.0
      %1473 = vmatpush1.msra.mxu0 0.0
      %1474 = vmatprep.subr.mxu0 0.0
      %1475 = vmatpush1.msra.mxu0 0.0
      %1476 = vmatprep.subr.mxu0 0.0
      %1477 = vmatpush1.msra.mxu0 0.0
      %1478 = vmatprep.subr.mxu0 0.0
      %1479 = vmatpush1.msra.mxu0 0.0
      %1480 = vmatprep.subr.mxu0 0.0
      %1481 = vmatpush1.msra.mxu0 0.0
      %1482 = vmatprep.subr.mxu0 0.0
      %1483 = vmatpush1.msra.mxu0 0.0
      %1484 = vmatprep.subr.mxu0 0.0
      %1485 = vmatpush1.msra.mxu0 0.0
      %1486 = vmatprep.mubr.f32.mxu0 0.0
      %1487 = vmatmul.mubr.f32.gmra.mrb[0].mxu0 %v1399
      %v1488 = vpop.f32.mrb[0].mxu0
      %v1489 = vadd.f32 0.0, %v1488
      %v1490 = vpop.f32.mrb[0].mxu0
      %1491 = vmatprep.mubr.f32.mxu0 0.0
      %1492 = vmatmul.mubr.f32.gmra.mrb[0].mxu0 %v1402
      %v1493 = vpop.f32.mrb[0].mxu0
      %v1494 = vadd.f32 0.0, %v1493
      %v1495 = vpop.f32.mrb[0].mxu0
      %1496 = vmatprep.mubr.f32.mxu0 0.0
      %1497 = vmatmul.mubr.f32.gmra.mrb[0].mxu0 %v1405
      %v1498 = vpop.f32.mrb[0].mxu0
      %v1499 = vadd.f32 0.0, %v1498
      %v1500 = vpop.f32.mrb[0].mxu0
      %1501 = vmatprep.mubr.f32.mxu0 0.0
      %1502 = vmatmul.mubr.f32.gmra.mrb[0].mxu0 %v1408
      %v1503 = vpop.f32.mrb[0].mxu0
      %v1504 = vadd.f32 0.0, %v1503
      %v1505 = vpop.f32.mrb[0].mxu0
      %1506 = vmatprep.mubr.f32.mxu0 0.0
      %1507 = vmatmul.mubr.f32.gmra.mrb[0].mxu0 %v1411
      %v1508 = vpop.f32.mrb[0].mxu0
      %v1509 = vadd.f32 0.0, %v1508
      %v1510 = vpop.f32.mrb[0].mxu0
      %1511 = vmatprep.mubr.f32.mxu0 0.0
      %1512 = vmatmul.mubr.f32.gmra.mrb[0].mxu0 %v1414
      %v1513 = vpop.f32.mrb[0].mxu0
      %v1514 = vadd.f32 0.0, %v1513
      %v1515 = vpop.f32.mrb[0].mxu0
      %1516 = vmatprep.mubr.f32.mxu0 0.0
      %1517 = vmatmul.mubr.f32.gmra.mrb[0].mxu0 %v1417
      %v1518 = vpop.f32.mrb[0].mxu0
      %v1519 = vadd.f32 0.0, %v1518
      %v1520 = vpop.f32.mrb[0].mxu0
      %1521 = vmatprep.mubr.f32.mxu0 0.0
      %1522 = vmatmul.mubr.f32.gmra.mrb[0].mxu0 %v1420
      %v1523 = vpop.f32.mrb[0].mxu0
      %v1524 = vadd.f32 0.0, %v1523
      %v1525 = vpop.f32.mrb[0].mxu0
      %1526 = vdwg.mxu0
      %v1527 = vadd.f32 %v1375, %v1489
      %v1528 = vadd.f32 %v1376, %v1494
      %v1529 = vadd.f32 %v1377, %v1499
      %v1530 = vadd.f32 %v1378, %v1504
      %v1531 = vadd.f32 %v1379, %v1509
      %v1532 = vadd.f32 %v1380, %v1514
      %v1533 = vadd.f32 %v1381, %v1519
      %v1534 = vadd.f32 %v1382, %v1524
      %v1535 = vld [vmem:[%s926 + $0x4] sm:$0xff]
      %v1536 = vld [vmem:[%s926 + $0x14] sm:$0xff]
      %v1537 = vld [vmem:[%s926 + $0x24] sm:$0xff]
      %v1538 = vld [vmem:[%s926 + $0x34] sm:$0xff]
      %v1539 = vld [vmem:[%s926 + $0x44] sm:$0xff]
      %v1540 = vld [vmem:[%s926 + $0x54] sm:$0xff]
      %v1541 = vld [vmem:[%s926 + $0x64] sm:$0xff]
      %v1542 = vld [vmem:[%s926 + $0x74] sm:$0xff]
      %s1543 = scalar_lea.vmem %s1, 432
      %v1544 = vld [vmem:[%s1543] sm:$0xff]
      %v1545 = vld [vmem:[%s1543 + $0x8] sm:$0xff]
      %v1546 = vld [vmem:[%s1543 + $0x10] sm:$0xff]
      %v1547 = vld [vmem:[%s1543 + $0x18] sm:$0xff]
      %v1548 = vld [vmem:[%s1543 + $0x20] sm:$0xff]
      %v1549 = vld [vmem:[%s1543 + $0x28] sm:$0xff]
      %v1551 = vsel %vm211, %v1535, 0
      %v1554 = vsel %vm211, %v1536, 0
      %v1557 = vsel %vm211, %v1537, 0
      %v1560 = vsel %vm211, %v1538, 0
      %v1563 = vsel %vm211, %v1539, 0
      %v1566 = vsel %vm211, %v1540, 0
      %v1569 = vsel %vm211, %v1541, 0
      %v1572 = vsel %vm211, %v1542, 0
      %1574 = vmatprep.subr.mxu0 0.0
      %1575 = vmatpush1.msra.mxu0 %v1544
      %1576 = vmatprep.subr.mxu0 0.0
      %1577 = vmatpush1.msra.mxu0 %v1545
      %1578 = vmatprep.subr.mxu0 0.0
      %1579 = vmatpush1.msra.mxu0 %v1546
      %1580 = vmatprep.subr.mxu0 0.0
      %1581 = vmatpush1.msra.mxu0 %v1547
      %1582 = vmatprep.subr.mxu0 0.0
      %1583 = vmatpush1.msra.mxu0 %v1548
      %1584 = vmatprep.subr.mxu0 0.0
      %1585 = vmatpush1.msra.mxu0 %v1549
      %1586 = vmatprep.subr.mxu0 0.0
      %1587 = vmatpush1.msra.mxu0 0.0
      %1588 = vmatprep.subr.mxu0 0.0
      %1589 = vmatpush1.msra.mxu0 0.0
      %1590 = vmatprep.subr.mxu0 0.0
      %1591 = vmatpush1.msra.mxu0 0.0
      %1592 = vmatprep.subr.mxu0 0.0
      %1593 = vmatpush1.msra.mxu0 0.0
      %1594 = vmatprep.subr.mxu0 0.0
      %1595 = vmatpush1.msra.mxu0 0.0
      %1596 = vmatprep.subr.mxu0 0.0
      %1597 = vmatpush1.msra.mxu0 0.0
      %1598 = vmatprep.subr.mxu0 0.0
      %1599 = vmatpush1.msra.mxu0 0.0
      %1600 = vmatprep.subr.mxu0 0.0
      %1601 = vmatpush1.msra.mxu0 0.0
      %1602 = vmatprep.subr.mxu0 0.0
      %1603 = vmatpush1.msra.mxu0 0.0
      %1604 = vmatprep.subr.mxu0 0.0
      %1605 = vmatpush1.msra.mxu0 0.0
      %1606 = vmatprep.subr.mxu0 0.0
      %1607 = vmatpush1.msra.mxu0 0.0
      %1608 = vmatprep.subr.mxu0 0.0
      %1609 = vmatpush1.msra.mxu0 0.0
      %1610 = vmatprep.subr.mxu0 0.0
      %1611 = vmatpush1.msra.mxu0 0.0
      %1612 = vmatprep.subr.mxu0 0.0
      %1613 = vmatpush1.msra.mxu0 0.0
      %1614 = vmatprep.subr.mxu0 0.0
      %1615 = vmatpush1.msra.mxu0 0.0
      %1616 = vmatprep.subr.mxu0 0.0
      %1617 = vmatpush1.msra.mxu0 0.0
      %1618 = vmatprep.subr.mxu0 0.0
      %1619 = vmatpush1.msra.mxu0 0.0
      %1620 = vmatprep.subr.mxu0 0.0
      %1621 = vmatpush1.msra.mxu0 0.0
      %1622 = vmatprep.subr.mxu0 0.0
      %1623 = vmatpush1.msra.mxu0 0.0
      %1624 = vmatprep.subr.mxu0 0.0
      %1625 = vmatpush1.msra.mxu0 0.0
      %1626 = vmatprep.subr.mxu0 0.0
      %1627 = vmatpush1.msra.mxu0 0.0
      %1628 = vmatprep.subr.mxu0 0.0
      %1629 = vmatpush1.msra.mxu0 0.0
      %1630 = vmatprep.subr.mxu0 0.0
      %1631 = vmatpush1.msra.mxu0 0.0
      %1632 = vmatprep.subr.mxu0 0.0
      %1633 = vmatpush1.msra.mxu0 0.0
      %1634 = vmatprep.subr.mxu0 0.0
      %1635 = vmatpush1.msra.mxu0 0.0
      %1636 = vmatprep.subr.mxu0 0.0
      %1637 = vmatpush1.msra.mxu0 0.0
      %1638 = vmatprep.mubr.f32.mxu0 0.0
      %1639 = vmatmul.mubr.f32.gmra.mrb[0].mxu0 %v1551
      %v1640 = vpop.f32.mrb[0].mxu0
      %v1641 = vadd.f32 0.0, %v1640
      %v1642 = vpop.f32.mrb[0].mxu0
      %1643 = vmatprep.mubr.f32.mxu0 0.0
      %1644 = vmatmul.mubr.f32.gmra.mrb[0].mxu0 %v1554
      %v1645 = vpop.f32.mrb[0].mxu0
      %v1646 = vadd.f32 0.0, %v1645
      %v1647 = vpop.f32.mrb[0].mxu0
      %1648 = vmatprep.mubr.f32.mxu0 0.0
      %1649 = vmatmul.mubr.f32.gmra.mrb[0].mxu0 %v1557
      %v1650 = vpop.f32.mrb[0].mxu0
      %v1651 = vadd.f32 0.0, %v1650
      %v1652 = vpop.f32.mrb[0].mxu0
      %1653 = vmatprep.mubr.f32.mxu0 0.0
      %1654 = vmatmul.mubr.f32.gmra.mrb[0].mxu0 %v1560
      %v1655 = vpop.f32.mrb[0].mxu0
      %v1656 = vadd.f32 0.0, %v1655
      %v1657 = vpop.f32.mrb[0].mxu0
      %1658 = vmatprep.mubr.f32.mxu0 0.0
      %1659 = vmatmul.mubr.f32.gmra.mrb[0].mxu0 %v1563
      %v1660 = vpop.f32.mrb[0].mxu0
      %v1661 = vadd.f32 0.0, %v1660
      %v1662 = vpop.f32.mrb[0].mxu0
      %1663 = vmatprep.mubr.f32.mxu0 0.0
      %1664 = vmatmul.mubr.f32.gmra.mrb[0].mxu0 %v1566
      %v1665 = vpop.f32.mrb[0].mxu0
      %v1666 = vadd.f32 0.0, %v1665
      %v1667 = vpop.f32.mrb[0].mxu0
      %1668 = vmatprep.mubr.f32.mxu0 0.0
      %1669 = vmatmul.mubr.f32.gmra.mrb[0].mxu0 %v1569
      %v1670 = vpop.f32.mrb[0].mxu0
      %v1671 = vadd.f32 0.0, %v1670
      %v1672 = vpop.f32.mrb[0].mxu0
      %1673 = vmatprep.mubr.f32.mxu0 0.0
      %1674 = vmatmul.mubr.f32.gmra.mrb[0].mxu0 %v1572
      %v1675 = vpop.f32.mrb[0].mxu0
      %v1676 = vadd.f32 0.0, %v1675
      %v1677 = vpop.f32.mrb[0].mxu0
      %1678 = vdwg.mxu0
      %v1679 = vadd.f32 %v1527, %v1641
      %v1680 = vadd.f32 %v1528, %v1646
      %v1681 = vadd.f32 %v1529, %v1651
      %v1682 = vadd.f32 %v1530, %v1656
      %v1683 = vadd.f32 %v1531, %v1661
      %v1684 = vadd.f32 %v1532, %v1666
      %v1685 = vadd.f32 %v1533, %v1671
      %v1686 = vadd.f32 %v1534, %v1676
      %s1687 = scalar_lea.vmem %s172, 32
      %v1688 = vld [vmem:[%s1687] sm:$0xff]
      %v1689 = vld [vmem:[%s1687 + $0x10] sm:$0xff]
      %v1690 = vld [vmem:[%s1687 + $0x20] sm:$0xff]
      %v1691 = vld [vmem:[%s1687 + $0x30] sm:$0xff]
      %v1692 = vld [vmem:[%s1687 + $0x40] sm:$0xff]
      %v1693 = vld [vmem:[%s1687 + $0x50] sm:$0xff]
      %v1694 = vld [vmem:[%s1687 + $0x60] sm:$0xff]
      %v1695 = vld [vmem:[%s1687 + $0x70] sm:$0xff]
      %s1696 = scalar_lea.vmem %s1, 480
      %v1697 = vld [vmem:[%s1696] sm:$0xff]
      %v1698 = vld [vmem:[%s1696 + $0x8] sm:$0xff]
      %v1699 = vld [vmem:[%s1696 + $0x10] sm:$0xff]
      %v1700 = vld [vmem:[%s1696 + $0x18] sm:$0xff]
      %v1701 = vld [vmem:[%s1696 + $0x20] sm:$0xff]
      %v1702 = vld [vmem:[%s1696 + $0x28] sm:$0xff]
      %v1704 = vsel %vm211, %v1688, 0
      %v1707 = vsel %vm211, %v1689, 0
      %v1710 = vsel %vm211, %v1690, 0
      %v1713 = vsel %vm211, %v1691, 0
      %v1716 = vsel %vm211, %v1692, 0
      %v1719 = vsel %vm211, %v1693, 0
      %v1722 = vsel %vm211, %v1694, 0
      %v1725 = vsel %vm211, %v1695, 0
      %1727 = vmatprep.subr.mxu0 0.0
      %1728 = vmatpush1.msra.mxu0 %v1697
      %1729 = vmatprep.subr.mxu0 0.0
      %1730 = vmatpush1.msra.mxu0 %v1698
      %1731 = vmatprep.subr.mxu0 0.0
      %1732 = vmatpush1.msra.mxu0 %v1699
      %1733 = vmatprep.subr.mxu0 0.0
      %1734 = vmatpush1.msra.mxu0 %v1700
      %1735 = vmatprep.subr.mxu0 0.0
      %1736 = vmatpush1.msra.mxu0 %v1701
      %1737 = vmatprep.subr.mxu0 0.0
      %1738 = vmatpush1.msra.mxu0 %v1702
      %1739 = vmatprep.subr.mxu0 0.0
      %1740 = vmatpush1.msra.mxu0 0.0
      %1741 = vmatprep.subr.mxu0 0.0
      %1742 = vmatpush1.msra.mxu0 0.0
      %1743 = vmatprep.subr.mxu0 0.0
      %1744 = vmatpush1.msra.mxu0 0.0
      %1745 = vmatprep.subr.mxu0 0.0
      %1746 = vmatpush1.msra.mxu0 0.0
      %1747 = vmatprep.subr.mxu0 0.0
      %1748 = vmatpush1.msra.mxu0 0.0
      %1749 = vmatprep.subr.mxu0 0.0
      %1750 = vmatpush1.msra.mxu0 0.0
      %1751 = vmatprep.subr.mxu0 0.0
      %1752 = vmatpush1.msra.mxu0 0.0
      %1753 = vmatprep.subr.mxu0 0.0
      %1754 = vmatpush1.msra.mxu0 0.0
      %1755 = vmatprep.subr.mxu0 0.0
      %1756 = vmatpush1.msra.mxu0 0.0
      %1757 = vmatprep.subr.mxu0 0.0
      %1758 = vmatpush1.msra.mxu0 0.0
      %1759 = vmatprep.subr.mxu0 0.0
      %1760 = vmatpush1.msra.mxu0 0.0
      %1761 = vmatprep.subr.mxu0 0.0
      %1762 = vmatpush1.msra.mxu0 0.0
      %1763 = vmatprep.subr.mxu0 0.0
      %1764 = vmatpush1.msra.mxu0 0.0
      %1765 = vmatprep.subr.mxu0 0.0
      %1766 = vmatpush1.msra.mxu0 0.0
      %1767 = vmatprep.subr.mxu0 0.0
      %1768 = vmatpush1.msra.mxu0 0.0
      %1769 = vmatprep.subr.mxu0 0.0
      %1770 = vmatpush1.msra.mxu0 0.0
      %1771 = vmatprep.subr.mxu0 0.0
      %1772 = vmatpush1.msra.mxu0 0.0
      %1773 = vmatprep.subr.mxu0 0.0
      %1774 = vmatpush1.msra.mxu0 0.0
      %1775 = vmatprep.subr.mxu0 0.0
      %1776 = vmatpush1.msra.mxu0 0.0
      %1777 = vmatprep.subr.mxu0 0.0
      %1778 = vmatpush1.msra.mxu0 0.0
      %1779 = vmatprep.subr.mxu0 0.0
      %1780 = vmatpush1.msra.mxu0 0.0
      %1781 = vmatprep.subr.mxu0 0.0
      %1782 = vmatpush1.msra.mxu0 0.0
      %1783 = vmatprep.subr.mxu0 0.0
      %1784 = vmatpush1.msra.mxu0 0.0
      %1785 = vmatprep.subr.mxu0 0.0
      %1786 = vmatpush1.msra.mxu0 0.0
      %1787 = vmatprep.subr.mxu0 0.0
      %1788 = vmatpush1.msra.mxu0 0.0
      %1789 = vmatprep.subr.mxu0 0.0
      %1790 = vmatpush1.msra.mxu0 0.0
      %1791 = vmatprep.mubr.f32.mxu0 0.0
      %1792 = vmatmul.mubr.f32.gmra.mrb[0].mxu0 %v1704
      %v1793 = vpop.f32.mrb[0].mxu0
      %v1794 = vadd.f32 0.0, %v1793
      %v1795 = vpop.f32.mrb[0].mxu0
      %1796 = vmatprep.mubr.f32.mxu0 0.0
      %1797 = vmatmul.mubr.f32.gmra.mrb[0].mxu0 %v1707
      %v1798 = vpop.f32.mrb[0].mxu0
      %v1799 = vadd.f32 0.0, %v1798
      %v1800 = vpop.f32.mrb[0].mxu0
      %1801 = vmatprep.mubr.f32.mxu0 0.0
      %1802 = vmatmul.mubr.f32.gmra.mrb[0].mxu0 %v1710
      %v1803 = vpop.f32.mrb[0].mxu0
      %v1804 = vadd.f32 0.0, %v1803
      %v1805 = vpop.f32.mrb[0].mxu0
      %1806 = vmatprep.mubr.f32.mxu0 0.0
      %1807 = vmatmul.mubr.f32.gmra.mrb[0].mxu0 %v1713
      %v1808 = vpop.f32.mrb[0].mxu0
      %v1809 = vadd.f32 0.0, %v1808
      %v1810 = vpop.f32.mrb[0].mxu0
      %1811 = vmatprep.mubr.f32.mxu0 0.0
      %1812 = vmatmul.mubr.f32.gmra.mrb[0].mxu0 %v1716
      %v1813 = vpop.f32.mrb[0].mxu0
      %v1814 = vadd.f32 0.0, %v1813
      %v1815 = vpop.f32.mrb[0].mxu0
      %1816 = vmatprep.mubr.f32.mxu0 0.0
      %1817 = vmatmul.mubr.f32.gmra.mrb[0].mxu0 %v1719
      %v1818 = vpop.f32.mrb[0].mxu0
      %v1819 = vadd.f32 0.0, %v1818
      %v1820 = vpop.f32.mrb[0].mxu0
      %1821 = vmatprep.mubr.f32.mxu0 0.0
      %1822 = vmatmul.mubr.f32.gmra.mrb[0].mxu0 %v1722
      %v1823 = vpop.f32.mrb[0].mxu0
      %v1824 = vadd.f32 0.0, %v1823
      %v1825 = vpop.f32.mrb[0].mxu0
      %1826 = vmatprep.mubr.f32.mxu0 0.0
      %1827 = vmatmul.mubr.f32.gmra.mrb[0].mxu0 %v1725
      %v1828 = vpop.f32.mrb[0].mxu0
      %v1829 = vadd.f32 0.0, %v1828
      %v1830 = vpop.f32.mrb[0].mxu0
      %1831 = vdwg.mxu0
      %v1832 = vadd.f32 %v1679, %v1794
      %v1833 = vadd.f32 %v1680, %v1799
      %v1834 = vadd.f32 %v1681, %v1804
      %v1835 = vadd.f32 %v1682, %v1809
      %v1836 = vadd.f32 %v1683, %v1814
      %v1837 = vadd.f32 %v1684, %v1819
      %v1838 = vadd.f32 %v1685, %v1824
      %v1839 = vadd.f32 %v1686, %v1829
      %v1840 = vld [vmem:[%s1687 + $0x1] sm:$0xff]
      %v1841 = vld [vmem:[%s1687 + $0x11] sm:$0xff]
      %v1842 = vld [vmem:[%s1687 + $0x21] sm:$0xff]
      %v1843 = vld [vmem:[%s1687 + $0x31] sm:$0xff]
      %v1844 = vld [vmem:[%s1687 + $0x41] sm:$0xff]
      %v1845 = vld [vmem:[%s1687 + $0x51] sm:$0xff]
      %v1846 = vld [vmem:[%s1687 + $0x61] sm:$0xff]
      %v1847 = vld [vmem:[%s1687 + $0x71] sm:$0xff]
      %s1848 = scalar_lea.vmem %s1, 528
      %v1849 = vld [vmem:[%s1848] sm:$0xff]
      %v1850 = vld [vmem:[%s1848 + $0x8] sm:$0xff]
      %v1851 = vld [vmem:[%s1848 + $0x10] sm:$0xff]
      %v1852 = vld [vmem:[%s1848 + $0x18] sm:$0xff]
      %v1853 = vld [vmem:[%s1848 + $0x20] sm:$0xff]
      %v1854 = vld [vmem:[%s1848 + $0x28] sm:$0xff]
      %v1856 = vsel %vm211, %v1840, 0
      %v1859 = vsel %vm211, %v1841, 0
      %v1862 = vsel %vm211, %v1842, 0
      %v1865 = vsel %vm211, %v1843, 0
      %v1868 = vsel %vm211, %v1844, 0
      %v1871 = vsel %vm211, %v1845, 0
      %v1874 = vsel %vm211, %v1846, 0
      %v1877 = vsel %vm211, %v1847, 0
      %1879 = vmatprep.subr.mxu0 0.0
      %1880 = vmatpush1.msra.mxu0 %v1849
      %1881 = vmatprep.subr.mxu0 0.0
      %1882 = vmatpush1.msra.mxu0 %v1850
      %1883 = vmatprep.subr.mxu0 0.0
      %1884 = vmatpush1.msra.mxu0 %v1851
      %1885 = vmatprep.subr.mxu0 0.0
      %1886 = vmatpush1.msra.mxu0 %v1852
      %1887 = vmatprep.subr.mxu0 0.0
      %1888 = vmatpush1.msra.mxu0 %v1853
      %1889 = vmatprep.subr.mxu0 0.0
      %1890 = vmatpush1.msra.mxu0 %v1854
      %1891 = vmatprep.subr.mxu0 0.0
      %1892 = vmatpush1.msra.mxu0 0.0
      %1893 = vmatprep.subr.mxu0 0.0
      %1894 = vmatpush1.msra.mxu0 0.0
      %1895 = vmatprep.subr.mxu0 0.0
      %1896 = vmatpush1.msra.mxu0 0.0
      %1897 = vmatprep.subr.mxu0 0.0
      %1898 = vmatpush1.msra.mxu0 0.0
      %1899 = vmatprep.subr.mxu0 0.0
      %1900 = vmatpush1.msra.mxu0 0.0
      %1901 = vmatprep.subr.mxu0 0.0
      %1902 = vmatpush1.msra.mxu0 0.0
      %1903 = vmatprep.subr.mxu0 0.0
      %1904 = vmatpush1.msra.mxu0 0.0
      %1905 = vmatprep.subr.mxu0 0.0
      %1906 = vmatpush1.msra.mxu0 0.0
      %1907 = vmatprep.subr.mxu0 0.0
      %1908 = vmatpush1.msra.mxu0 0.0
      %1909 = vmatprep.subr.mxu0 0.0
      %1910 = vmatpush1.msra.mxu0 0.0
      %1911 = vmatprep.subr.mxu0 0.0
      %1912 = vmatpush1.msra.mxu0 0.0
      %1913 = vmatprep.subr.mxu0 0.0
      %1914 = vmatpush1.msra.mxu0 0.0
      %1915 = vmatprep.subr.mxu0 0.0
      %1916 = vmatpush1.msra.mxu0 0.0
      %1917 = vmatprep.subr.mxu0 0.0
      %1918 = vmatpush1.msra.mxu0 0.0
      %1919 = vmatprep.subr.mxu0 0.0
      %1920 = vmatpush1.msra.mxu0 0.0
      %1921 = vmatprep.subr.mxu0 0.0
      %1922 = vmatpush1.msra.mxu0 0.0
      %1923 = vmatprep.subr.mxu0 0.0
      %1924 = vmatpush1.msra.mxu0 0.0
      %1925 = vmatprep.subr.mxu0 0.0
      %1926 = vmatpush1.msra.mxu0 0.0
      %1927 = vmatprep.subr.mxu0 0.0
      %1928 = vmatpush1.msra.mxu0 0.0
      %1929 = vmatprep.subr.mxu0 0.0
      %1930 = vmatpush1.msra.mxu0 0.0
      %1931 = vmatprep.subr.mxu0 0.0
      %1932 = vmatpush1.msra.mxu0 0.0
      %1933 = vmatprep.subr.mxu0 0.0
      %1934 = vmatpush1.msra.mxu0 0.0
      %1935 = vmatprep.subr.mxu0 0.0
      %1936 = vmatpush1.msra.mxu0 0.0
      %1937 = vmatprep.subr.mxu0 0.0
      %1938 = vmatpush1.msra.mxu0 0.0
      %1939 = vmatprep.subr.mxu0 0.0
      %1940 = vmatpush1.msra.mxu0 0.0
      %1941 = vmatprep.subr.mxu0 0.0
      %1942 = vmatpush1.msra.mxu0 0.0
      %1943 = vmatprep.mubr.f32.mxu0 0.0
      %1944 = vmatmul.mubr.f32.gmra.mrb[0].mxu0 %v1856
      %v1945 = vpop.f32.mrb[0].mxu0
      %v1946 = vadd.f32 0.0, %v1945
      %v1947 = vpop.f32.mrb[0].mxu0
      %1948 = vmatprep.mubr.f32.mxu0 0.0
      %1949 = vmatmul.mubr.f32.gmra.mrb[0].mxu0 %v1859
      %v1950 = vpop.f32.mrb[0].mxu0
      %v1951 = vadd.f32 0.0, %v1950
      %v1952 = vpop.f32.mrb[0].mxu0
      %1953 = vmatprep.mubr.f32.mxu0 0.0
      %1954 = vmatmul.mubr.f32.gmra.mrb[0].mxu0 %v1862
      %v1955 = vpop.f32.mrb[0].mxu0
      %v1956 = vadd.f32 0.0, %v1955
      %v1957 = vpop.f32.mrb[0].mxu0
      %1958 = vmatprep.mubr.f32.mxu0 0.0
      %1959 = vmatmul.mubr.f32.gmra.mrb[0].mxu0 %v1865
      %v1960 = vpop.f32.mrb[0].mxu0
      %v1961 = vadd.f32 0.0, %v1960
      %v1962 = vpop.f32.mrb[0].mxu0
      %1963 = vmatprep.mubr.f32.mxu0 0.0
      %1964 = vmatmul.mubr.f32.gmra.mrb[0].mxu0 %v1868
      %v1965 = vpop.f32.mrb[0].mxu0
      %v1966 = vadd.f32 0.0, %v1965
      %v1967 = vpop.f32.mrb[0].mxu0
      %1968 = vmatprep.mubr.f32.mxu0 0.0
      %1969 = vmatmul.mubr.f32.gmra.mrb[0].mxu0 %v1871
      %v1970 = vpop.f32.mrb[0].mxu0
      %v1971 = vadd.f32 0.0, %v1970
      %v1972 = vpop.f32.mrb[0].mxu0
      %1973 = vmatprep.mubr.f32.mxu0 0.0
      %1974 = vmatmul.mubr.f32.gmra.mrb[0].mxu0 %v1874
      %v1975 = vpop.f32.mrb[0].mxu0
      %v1976 = vadd.f32 0.0, %v1975
      %v1977 = vpop.f32.mrb[0].mxu0
      %1978 = vmatprep.mubr.f32.mxu0 0.0
      %1979 = vmatmul.mubr.f32.gmra.mrb[0].mxu0 %v1877
      %v1980 = vpop.f32.mrb[0].mxu0
      %v1981 = vadd.f32 0.0, %v1980
      %v1982 = vpop.f32.mrb[0].mxu0
      %1983 = vdwg.mxu0
      %v1984 = vadd.f32 %v1832, %v1946
      %v1985 = vadd.f32 %v1833, %v1951
      %v1986 = vadd.f32 %v1834, %v1956
      %v1987 = vadd.f32 %v1835, %v1961
      %v1988 = vadd.f32 %v1836, %v1966
      %v1989 = vadd.f32 %v1837, %v1971
      %v1990 = vadd.f32 %v1838, %v1976
      %v1991 = vadd.f32 %v1839, %v1981
      %v1992 = vld [vmem:[%s1687 + $0x2] sm:$0xff]
      %v1993 = vld [vmem:[%s1687 + $0x12] sm:$0xff]
      %v1994 = vld [vmem:[%s1687 + $0x22] sm:$0xff]
      %v1995 = vld [vmem:[%s1687 + $0x32] sm:$0xff]
      %v1996 = vld [vmem:[%s1687 + $0x42] sm:$0xff]
      %v1997 = vld [vmem:[%s1687 + $0x52] sm:$0xff]
      %v1998 = vld [vmem:[%s1687 + $0x62] sm:$0xff]
      %v1999 = vld [vmem:[%s1687 + $0x72] sm:$0xff]
      %s2000 = scalar_lea.vmem %s1, 576
      %v2001 = vld [vmem:[%s2000] sm:$0xff]
      %v2002 = vld [vmem:[%s2000 + $0x8] sm:$0xff]
      %v2003 = vld [vmem:[%s2000 + $0x10] sm:$0xff]
      %v2004 = vld [vmem:[%s2000 + $0x18] sm:$0xff]
      %v2005 = vld [vmem:[%s2000 + $0x20] sm:$0xff]
      %v2006 = vld [vmem:[%s2000 + $0x28] sm:$0xff]
      %v2008 = vsel %vm211, %v1992, 0
      %v2011 = vsel %vm211, %v1993, 0
      %v2014 = vsel %vm211, %v1994, 0
      %v2017 = vsel %vm211, %v1995, 0
      %v2020 = vsel %vm211, %v1996, 0
      %v2023 = vsel %vm211, %v1997, 0
      %v2026 = vsel %vm211, %v1998, 0
      %v2029 = vsel %vm211, %v1999, 0
      %2031 = vmatprep.subr.mxu0 0.0
      %2032 = vmatpush1.msra.mxu0 %v2001
      %2033 = vmatprep.subr.mxu0 0.0
      %2034 = vmatpush1.msra.mxu0 %v2002
      %2035 = vmatprep.subr.mxu0 0.0
      %2036 = vmatpush1.msra.mxu0 %v2003
      %2037 = vmatprep.subr.mxu0 0.0
      %2038 = vmatpush1.msra.mxu0 %v2004
      %2039 = vmatprep.subr.mxu0 0.0
      %2040 = vmatpush1.msra.mxu0 %v2005
      %2041 = vmatprep.subr.mxu0 0.0
      %2042 = vmatpush1.msra.mxu0 %v2006
      %2043 = vmatprep.subr.mxu0 0.0
      %2044 = vmatpush1.msra.mxu0 0.0
      %2045 = vmatprep.subr.mxu0 0.0
      %2046 = vmatpush1.msra.mxu0 0.0
      %2047 = vmatprep.subr.mxu0 0.0
      %2048 = vmatpush1.msra.mxu0 0.0
      %2049 = vmatprep.subr.mxu0 0.0
      %2050 = vmatpush1.msra.mxu0 0.0
      %2051 = vmatprep.subr.mxu0 0.0
      %2052 = vmatpush1.msra.mxu0 0.0
      %2053 = vmatprep.subr.mxu0 0.0
      %2054 = vmatpush1.msra.mxu0 0.0
      %2055 = vmatprep.subr.mxu0 0.0
      %2056 = vmatpush1.msra.mxu0 0.0
      %2057 = vmatprep.subr.mxu0 0.0
      %2058 = vmatpush1.msra.mxu0 0.0
      %2059 = vmatprep.subr.mxu0 0.0
      %2060 = vmatpush1.msra.mxu0 0.0
      %2061 = vmatprep.subr.mxu0 0.0
      %2062 = vmatpush1.msra.mxu0 0.0
      %2063 = vmatprep.subr.mxu0 0.0
      %2064 = vmatpush1.msra.mxu0 0.0
      %2065 = vmatprep.subr.mxu0 0.0
      %2066 = vmatpush1.msra.mxu0 0.0
      %2067 = vmatprep.subr.mxu0 0.0
      %2068 = vmatpush1.msra.mxu0 0.0
      %2069 = vmatprep.subr.mxu0 0.0
      %2070 = vmatpush1.msra.mxu0 0.0
      %2071 = vmatprep.subr.mxu0 0.0
      %2072 = vmatpush1.msra.mxu0 0.0
      %2073 = vmatprep.subr.mxu0 0.0
      %2074 = vmatpush1.msra.mxu0 0.0
      %2075 = vmatprep.subr.mxu0 0.0
      %2076 = vmatpush1.msra.mxu0 0.0
      %2077 = vmatprep.subr.mxu0 0.0
      %2078 = vmatpush1.msra.mxu0 0.0
      %2079 = vmatprep.subr.mxu0 0.0
      %2080 = vmatpush1.msra.mxu0 0.0
      %2081 = vmatprep.subr.mxu0 0.0
      %2082 = vmatpush1.msra.mxu0 0.0
      %2083 = vmatprep.subr.mxu0 0.0
      %2084 = vmatpush1.msra.mxu0 0.0
      %2085 = vmatprep.subr.mxu0 0.0
      %2086 = vmatpush1.msra.mxu0 0.0
      %2087 = vmatprep.subr.mxu0 0.0
      %2088 = vmatpush1.msra.mxu0 0.0
      %2089 = vmatprep.subr.mxu0 0.0
      %2090 = vmatpush1.msra.mxu0 0.0
      %2091 = vmatprep.subr.mxu0 0.0
      %2092 = vmatpush1.msra.mxu0 0.0
      %2093 = vmatprep.subr.mxu0 0.0
      %2094 = vmatpush1.msra.mxu0 0.0
      %2095 = vmatprep.mubr.f32.mxu0 0.0
      %2096 = vmatmul.mubr.f32.gmra.mrb[0].mxu0 %v2008
      %v2097 = vpop.f32.mrb[0].mxu0
      %v2098 = vadd.f32 0.0, %v2097
      %v2099 = vpop.f32.mrb[0].mxu0
      %2100 = vmatprep.mubr.f32.mxu0 0.0
      %2101 = vmatmul.mubr.f32.gmra.mrb[0].mxu0 %v2011
      %v2102 = vpop.f32.mrb[0].mxu0
      %v2103 = vadd.f32 0.0, %v2102
      %v2104 = vpop.f32.mrb[0].mxu0
      %2105 = vmatprep.mubr.f32.mxu0 0.0
      %2106 = vmatmul.mubr.f32.gmra.mrb[0].mxu0 %v2014
      %v2107 = vpop.f32.mrb[0].mxu0
      %v2108 = vadd.f32 0.0, %v2107
      %v2109 = vpop.f32.mrb[0].mxu0
      %2110 = vmatprep.mubr.f32.mxu0 0.0
      %2111 = vmatmul.mubr.f32.gmra.mrb[0].mxu0 %v2017
      %v2112 = vpop.f32.mrb[0].mxu0
      %v2113 = vadd.f32 0.0, %v2112
      %v2114 = vpop.f32.mrb[0].mxu0
      %2115 = vmatprep.mubr.f32.mxu0 0.0
      %2116 = vmatmul.mubr.f32.gmra.mrb[0].mxu0 %v2020
      %v2117 = vpop.f32.mrb[0].mxu0
      %v2118 = vadd.f32 0.0, %v2117
      %v2119 = vpop.f32.mrb[0].mxu0
      %2120 = vmatprep.mubr.f32.mxu0 0.0
      %2121 = vmatmul.mubr.f32.gmra.mrb[0].mxu0 %v2023
      %v2122 = vpop.f32.mrb[0].mxu0
      %v2123 = vadd.f32 0.0, %v2122
      %v2124 = vpop.f32.mrb[0].mxu0
      %2125 = vmatprep.mubr.f32.mxu0 0.0
      %2126 = vmatmul.mubr.f32.gmra.mrb[0].mxu0 %v2026
      %v2127 = vpop.f32.mrb[0].mxu0
      %v2128 = vadd.f32 0.0, %v2127
      %v2129 = vpop.f32.mrb[0].mxu0
      %2130 = vmatprep.mubr.f32.mxu0 0.0
      %2131 = vmatmul.mubr.f32.gmra.mrb[0].mxu0 %v2029
      %v2132 = vpop.f32.mrb[0].mxu0
      %v2133 = vadd.f32 0.0, %v2132
      %v2134 = vpop.f32.mrb[0].mxu0
      %2135 = vdwg.mxu0
      %v2136 = vadd.f32 %v1984, %v2098
      %v2137 = vadd.f32 %v1985, %v2103
      %v2138 = vadd.f32 %v1986, %v2108
      %v2139 = vadd.f32 %v1987, %v2113
      %v2140 = vadd.f32 %v1988, %v2118
      %v2141 = vadd.f32 %v1989, %v2123
      %v2142 = vadd.f32 %v1990, %v2128
      %v2143 = vadd.f32 %v1991, %v2133
      %v2144 = vld [vmem:[%s1687 + $0x3] sm:$0xff]
      %v2145 = vld [vmem:[%s1687 + $0x13] sm:$0xff]
      %v2146 = vld [vmem:[%s1687 + $0x23] sm:$0xff]
      %v2147 = vld [vmem:[%s1687 + $0x33] sm:$0xff]
      %v2148 = vld [vmem:[%s1687 + $0x43] sm:$0xff]
      %v2149 = vld [vmem:[%s1687 + $0x53] sm:$0xff]
      %v2150 = vld [vmem:[%s1687 + $0x63] sm:$0xff]
      %v2151 = vld [vmem:[%s1687 + $0x73] sm:$0xff]
      %s2152 = scalar_lea.vmem %s1, 624
      %v2153 = vld [vmem:[%s2152] sm:$0xff]
      %v2154 = vld [vmem:[%s2152 + $0x8] sm:$0xff]
      %v2155 = vld [vmem:[%s2152 + $0x10] sm:$0xff]
      %v2156 = vld [vmem:[%s2152 + $0x18] sm:$0xff]
      %v2157 = vld [vmem:[%s2152 + $0x20] sm:$0xff]
      %v2158 = vld [vmem:[%s2152 + $0x28] sm:$0xff]
      %v2160 = vsel %vm211, %v2144, 0
      %v2163 = vsel %vm211, %v2145, 0
      %v2166 = vsel %vm211, %v2146, 0
      %v2169 = vsel %vm211, %v2147, 0
      %v2172 = vsel %vm211, %v2148, 0
      %v2175 = vsel %vm211, %v2149, 0
      %v2178 = vsel %vm211, %v2150, 0
      %v2181 = vsel %vm211, %v2151, 0
      %2183 = vmatprep.subr.mxu0 0.0
      %2184 = vmatpush1.msra.mxu0 %v2153
      %2185 = vmatprep.subr.mxu0 0.0
      %2186 = vmatpush1.msra.mxu0 %v2154
      %2187 = vmatprep.subr.mxu0 0.0
      %2188 = vmatpush1.msra.mxu0 %v2155
      %2189 = vmatprep.subr.mxu0 0.0
      %2190 = vmatpush1.msra.mxu0 %v2156
      %2191 = vmatprep.subr.mxu0 0.0
      %2192 = vmatpush1.msra.mxu0 %v2157
      %2193 = vmatprep.subr.mxu0 0.0
      %2194 = vmatpush1.msra.mxu0 %v2158
      %2195 = vmatprep.subr.mxu0 0.0
      %2196 = vmatpush1.msra.mxu0 0.0
      %2197 = vmatprep.subr.mxu0 0.0
      %2198 = vmatpush1.msra.mxu0 0.0
      %2199 = vmatprep.subr.mxu0 0.0
      %2200 = vmatpush1.msra.mxu0 0.0
      %2201 = vmatprep.subr.mxu0 0.0
      %2202 = vmatpush1.msra.mxu0 0.0
      %2203 = vmatprep.subr.mxu0 0.0
      %2204 = vmatpush1.msra.mxu0 0.0
      %2205 = vmatprep.subr.mxu0 0.0
      %2206 = vmatpush1.msra.mxu0 0.0
      %2207 = vmatprep.subr.mxu0 0.0
      %2208 = vmatpush1.msra.mxu0 0.0
      %2209 = vmatprep.subr.mxu0 0.0
      %2210 = vmatpush1.msra.mxu0 0.0
      %2211 = vmatprep.subr.mxu0 0.0
      %2212 = vmatpush1.msra.mxu0 0.0
      %2213 = vmatprep.subr.mxu0 0.0
      %2214 = vmatpush1.msra.mxu0 0.0
      %2215 = vmatprep.subr.mxu0 0.0
      %2216 = vmatpush1.msra.mxu0 0.0
      %2217 = vmatprep.subr.mxu0 0.0
      %2218 = vmatpush1.msra.mxu0 0.0
      %2219 = vmatprep.subr.mxu0 0.0
      %2220 = vmatpush1.msra.mxu0 0.0
      %2221 = vmatprep.subr.mxu0 0.0
      %2222 = vmatpush1.msra.mxu0 0.0
      %2223 = vmatprep.subr.mxu0 0.0
      %2224 = vmatpush1.msra.mxu0 0.0
      %2225 = vmatprep.subr.mxu0 0.0
      %2226 = vmatpush1.msra.mxu0 0.0
      %2227 = vmatprep.subr.mxu0 0.0
      %2228 = vmatpush1.msra.mxu0 0.0
      %2229 = vmatprep.subr.mxu0 0.0
      %2230 = vmatpush1.msra.mxu0 0.0
      %2231 = vmatprep.subr.mxu0 0.0
      %2232 = vmatpush1.msra.mxu0 0.0
      %2233 = vmatprep.subr.mxu0 0.0
      %2234 = vmatpush1.msra.mxu0 0.0
      %2235 = vmatprep.subr.mxu0 0.0
      %2236 = vmatpush1.msra.mxu0 0.0
      %2237 = vmatprep.subr.mxu0 0.0
      %2238 = vmatpush1.msra.mxu0 0.0
      %2239 = vmatprep.subr.mxu0 0.0
      %2240 = vmatpush1.msra.mxu0 0.0
      %2241 = vmatprep.subr.mxu0 0.0
      %2242 = vmatpush1.msra.mxu0 0.0
      %2243 = vmatprep.subr.mxu0 0.0
      %2244 = vmatpush1.msra.mxu0 0.0
      %2245 = vmatprep.subr.mxu0 0.0
      %2246 = vmatpush1.msra.mxu0 0.0
      %2247 = vmatprep.mubr.f32.mxu0 0.0
      %2248 = vmatmul.mubr.f32.gmra.mrb[0].mxu0 %v2160
      %v2249 = vpop.f32.mrb[0].mxu0
      %v2250 = vadd.f32 0.0, %v2249
      %v2251 = vpop.f32.mrb[0].mxu0
      %2252 = vmatprep.mubr.f32.mxu0 0.0
      %2253 = vmatmul.mubr.f32.gmra.mrb[0].mxu0 %v2163
      %v2254 = vpop.f32.mrb[0].mxu0
      %v2255 = vadd.f32 0.0, %v2254
      %v2256 = vpop.f32.mrb[0].mxu0
      %2257 = vmatprep.mubr.f32.mxu0 0.0
      %2258 = vmatmul.mubr.f32.gmra.mrb[0].mxu0 %v2166
      %v2259 = vpop.f32.mrb[0].mxu0
      %v2260 = vadd.f32 0.0, %v2259
      %v2261 = vpop.f32.mrb[0].mxu0
      %2262 = vmatprep.mubr.f32.mxu0 0.0
      %2263 = vmatmul.mubr.f32.gmra.mrb[0].mxu0 %v2169
      %v2264 = vpop.f32.mrb[0].mxu0
      %v2265 = vadd.f32 0.0, %v2264
      %v2266 = vpop.f32.mrb[0].mxu0
      %2267 = vmatprep.mubr.f32.mxu0 0.0
      %2268 = vmatmul.mubr.f32.gmra.mrb[0].mxu0 %v2172
      %v2269 = vpop.f32.mrb[0].mxu0
      %v2270 = vadd.f32 0.0, %v2269
      %v2271 = vpop.f32.mrb[0].mxu0
      %2272 = vmatprep.mubr.f32.mxu0 0.0
      %2273 = vmatmul.mubr.f32.gmra.mrb[0].mxu0 %v2175
      %v2274 = vpop.f32.mrb[0].mxu0
      %v2275 = vadd.f32 0.0, %v2274
      %v2276 = vpop.f32.mrb[0].mxu0
      %2277 = vmatprep.mubr.f32.mxu0 0.0
      %2278 = vmatmul.mubr.f32.gmra.mrb[0].mxu0 %v2178
      %v2279 = vpop.f32.mrb[0].mxu0
      %v2280 = vadd.f32 0.0, %v2279
      %v2281 = vpop.f32.mrb[0].mxu0
      %2282 = vmatprep.mubr.f32.mxu0 0.0
      %2283 = vmatmul.mubr.f32.gmra.mrb[0].mxu0 %v2181
      %v2284 = vpop.f32.mrb[0].mxu0
      %v2285 = vadd.f32 0.0, %v2284
      %v2286 = vpop.f32.mrb[0].mxu0
      %2287 = vdwg.mxu0
      %v2288 = vadd.f32 %v2136, %v2250
      %v2289 = vadd.f32 %v2137, %v2255
      %v2290 = vadd.f32 %v2138, %v2260
      %v2291 = vadd.f32 %v2139, %v2265
      %v2292 = vadd.f32 %v2140, %v2270
      %v2293 = vadd.f32 %v2141, %v2275
      %v2294 = vadd.f32 %v2142, %v2280
      %v2295 = vadd.f32 %v2143, %v2285
      %v2296 = vld [vmem:[%s1687 + $0x4] sm:$0xff]
      %v2297 = vld [vmem:[%s1687 + $0x14] sm:$0xff]
      %v2298 = vld [vmem:[%s1687 + $0x24] sm:$0xff]
      %v2299 = vld [vmem:[%s1687 + $0x34] sm:$0xff]
      %v2300 = vld [vmem:[%s1687 + $0x44] sm:$0xff]
      %v2301 = vld [vmem:[%s1687 + $0x54] sm:$0xff]
      %v2302 = vld [vmem:[%s1687 + $0x64] sm:$0xff]
      %v2303 = vld [vmem:[%s1687 + $0x74] sm:$0xff]
      %s2304 = scalar_lea.vmem %s1, 672
      %v2305 = vld [vmem:[%s2304] sm:$0xff]
      %v2306 = vld [vmem:[%s2304 + $0x8] sm:$0xff]
      %v2307 = vld [vmem:[%s2304 + $0x10] sm:$0xff]
      %v2308 = vld [vmem:[%s2304 + $0x18] sm:$0xff]
      %v2309 = vld [vmem:[%s2304 + $0x20] sm:$0xff]
      %v2310 = vld [vmem:[%s2304 + $0x28] sm:$0xff]
      %v2312 = vsel %vm211, %v2296, 0
      %v2315 = vsel %vm211, %v2297, 0
      %v2318 = vsel %vm211, %v2298, 0
      %v2321 = vsel %vm211, %v2299, 0
      %v2324 = vsel %vm211, %v2300, 0
      %v2327 = vsel %vm211, %v2301, 0
      %v2330 = vsel %vm211, %v2302, 0
      %v2333 = vsel %vm211, %v2303, 0
      %2335 = vmatprep.subr.mxu0 0.0
      %2336 = vmatpush1.msra.mxu0 %v2305
      %2337 = vmatprep.subr.mxu0 0.0
      %2338 = vmatpush1.msra.mxu0 %v2306
      %2339 = vmatprep.subr.mxu0 0.0
      %2340 = vmatpush1.msra.mxu0 %v2307
      %2341 = vmatprep.subr.mxu0 0.0
      %2342 = vmatpush1.msra.mxu0 %v2308
      %2343 = vmatprep.subr.mxu0 0.0
      %2344 = vmatpush1.msra.mxu0 %v2309
      %2345 = vmatprep.subr.mxu0 0.0
      %2346 = vmatpush1.msra.mxu0 %v2310
      %2347 = vmatprep.subr.mxu0 0.0
      %2348 = vmatpush1.msra.mxu0 0.0
      %2349 = vmatprep.subr.mxu0 0.0
      %2350 = vmatpush1.msra.mxu0 0.0
      %2351 = vmatprep.subr.mxu0 0.0
      %2352 = vmatpush1.msra.mxu0 0.0
      %2353 = vmatprep.subr.mxu0 0.0
      %2354 = vmatpush1.msra.mxu0 0.0
      %2355 = vmatprep.subr.mxu0 0.0
      %2356 = vmatpush1.msra.mxu0 0.0
      %2357 = vmatprep.subr.mxu0 0.0
      %2358 = vmatpush1.msra.mxu0 0.0
      %2359 = vmatprep.subr.mxu0 0.0
      %2360 = vmatpush1.msra.mxu0 0.0
      %2361 = vmatprep.subr.mxu0 0.0
      %2362 = vmatpush1.msra.mxu0 0.0
      %2363 = vmatprep.subr.mxu0 0.0
      %2364 = vmatpush1.msra.mxu0 0.0
      %2365 = vmatprep.subr.mxu0 0.0
      %2366 = vmatpush1.msra.mxu0 0.0
      %2367 = vmatprep.subr.mxu0 0.0
      %2368 = vmatpush1.msra.mxu0 0.0
      %2369 = vmatprep.subr.mxu0 0.0
      %2370 = vmatpush1.msra.mxu0 0.0
      %2371 = vmatprep.subr.mxu0 0.0
      %2372 = vmatpush1.msra.mxu0 0.0
      %2373 = vmatprep.subr.mxu0 0.0
      %2374 = vmatpush1.msra.mxu0 0.0
      %2375 = vmatprep.subr.mxu0 0.0
      %2376 = vmatpush1.msra.mxu0 0.0
      %2377 = vmatprep.subr.mxu0 0.0
      %2378 = vmatpush1.msra.mxu0 0.0
      %2379 = vmatprep.subr.mxu0 0.0
      %2380 = vmatpush1.msra.mxu0 0.0
      %2381 = vmatprep.subr.mxu0 0.0
      %2382 = vmatpush1.msra.mxu0 0.0
      %2383 = vmatprep.subr.mxu0 0.0
      %2384 = vmatpush1.msra.mxu0 0.0
      %2385 = vmatprep.subr.mxu0 0.0
      %2386 = vmatpush1.msra.mxu0 0.0
      %2387 = vmatprep.subr.mxu0 0.0
      %2388 = vmatpush1.msra.mxu0 0.0
      %2389 = vmatprep.subr.mxu0 0.0
      %2390 = vmatpush1.msra.mxu0 0.0
      %2391 = vmatprep.subr.mxu0 0.0
      %2392 = vmatpush1.msra.mxu0 0.0
      %2393 = vmatprep.subr.mxu0 0.0
      %2394 = vmatpush1.msra.mxu0 0.0
      %2395 = vmatprep.subr.mxu0 0.0
      %2396 = vmatpush1.msra.mxu0 0.0
      %2397 = vmatprep.subr.mxu0 0.0
      %2398 = vmatpush1.msra.mxu0 0.0
      %2399 = vmatprep.mubr.f32.mxu0 0.0
      %2400 = vmatmul.mubr.f32.gmra.mrb[0].mxu0 %v2312
      %v2401 = vpop.f32.mrb[0].mxu0
      %v2402 = vadd.f32 0.0, %v2401
      %v2403 = vpop.f32.mrb[0].mxu0
      %2404 = vmatprep.mubr.f32.mxu0 0.0
      %2405 = vmatmul.mubr.f32.gmra.mrb[0].mxu0 %v2315
      %v2406 = vpop.f32.mrb[0].mxu0
      %v2407 = vadd.f32 0.0, %v2406
      %v2408 = vpop.f32.mrb[0].mxu0
      %2409 = vmatprep.mubr.f32.mxu0 0.0
      %2410 = vmatmul.mubr.f32.gmra.mrb[0].mxu0 %v2318
      %v2411 = vpop.f32.mrb[0].mxu0
      %v2412 = vadd.f32 0.0, %v2411
      %v2413 = vpop.f32.mrb[0].mxu0
      %2414 = vmatprep.mubr.f32.mxu0 0.0
      %2415 = vmatmul.mubr.f32.gmra.mrb[0].mxu0 %v2321
      %v2416 = vpop.f32.mrb[0].mxu0
      %v2417 = vadd.f32 0.0, %v2416
      %v2418 = vpop.f32.mrb[0].mxu0
      %2419 = vmatprep.mubr.f32.mxu0 0.0
      %2420 = vmatmul.mubr.f32.gmra.mrb[0].mxu0 %v2324
      %v2421 = vpop.f32.mrb[0].mxu0
      %v2422 = vadd.f32 0.0, %v2421
      %v2423 = vpop.f32.mrb[0].mxu0
      %2424 = vmatprep.mubr.f32.mxu0 0.0
      %2425 = vmatmul.mubr.f32.gmra.mrb[0].mxu0 %v2327
      %v2426 = vpop.f32.mrb[0].mxu0
      %v2427 = vadd.f32 0.0, %v2426
      %v2428 = vpop.f32.mrb[0].mxu0
      %2429 = vmatprep.mubr.f32.mxu0 0.0
      %2430 = vmatmul.mubr.f32.gmra.mrb[0].mxu0 %v2330
      %v2431 = vpop.f32.mrb[0].mxu0
      %v2432 = vadd.f32 0.0, %v2431
      %v2433 = vpop.f32.mrb[0].mxu0
      %2434 = vmatprep.mubr.f32.mxu0 0.0
      %2435 = vmatmul.mubr.f32.gmra.mrb[0].mxu0 %v2333
      %v2436 = vpop.f32.mrb[0].mxu0
      %v2437 = vadd.f32 0.0, %v2436
      %v2438 = vpop.f32.mrb[0].mxu0
      %2439 = vdwg.mxu0
      %v2440 = vadd.f32 %v2288, %v2402
      %v2441 = vadd.f32 %v2289, %v2407
      %v2442 = vadd.f32 %v2290, %v2412
      %v2443 = vadd.f32 %v2291, %v2417
      %v2444 = vadd.f32 %v2292, %v2422
      %v2445 = vadd.f32 %v2293, %v2427
      %v2446 = vadd.f32 %v2294, %v2432
      %v2447 = vadd.f32 %v2295, %v2437
      %s2448 = scalar_lea.vmem %s172, 48
      %v2449 = vld [vmem:[%s2448] sm:$0xff]
      %v2450 = vld [vmem:[%s2448 + $0x10] sm:$0xff]
      %v2451 = vld [vmem:[%s2448 + $0x20] sm:$0xff]
      %v2452 = vld [vmem:[%s2448 + $0x30] sm:$0xff]
      %v2453 = vld [vmem:[%s2448 + $0x40] sm:$0xff]
      %v2454 = vld [vmem:[%s2448 + $0x50] sm:$0xff]
      %v2455 = vld [vmem:[%s2448 + $0x60] sm:$0xff]
      %v2456 = vld [vmem:[%s2448 + $0x70] sm:$0xff]
      %s2457 = scalar_lea.vmem %s1, 720
      %v2458 = vld [vmem:[%s2457] sm:$0xff]
      %v2459 = vld [vmem:[%s2457 + $0x8] sm:$0xff]
      %v2460 = vld [vmem:[%s2457 + $0x10] sm:$0xff]
      %v2461 = vld [vmem:[%s2457 + $0x18] sm:$0xff]
      %v2462 = vld [vmem:[%s2457 + $0x20] sm:$0xff]
      %v2463 = vld [vmem:[%s2457 + $0x28] sm:$0xff]
      %v2465 = vsel %vm211, %v2449, 0
      %v2468 = vsel %vm211, %v2450, 0
      %v2471 = vsel %vm211, %v2451, 0
      %v2474 = vsel %vm211, %v2452, 0
      %v2477 = vsel %vm211, %v2453, 0
      %v2480 = vsel %vm211, %v2454, 0
      %v2483 = vsel %vm211, %v2455, 0
      %v2486 = vsel %vm211, %v2456, 0
      %2488 = vmatprep.subr.mxu0 0.0
      %2489 = vmatpush1.msra.mxu0 %v2458
      %2490 = vmatprep.subr.mxu0 0.0
      %2491 = vmatpush1.msra.mxu0 %v2459
      %2492 = vmatprep.subr.mxu0 0.0
      %2493 = vmatpush1.msra.mxu0 %v2460
      %2494 = vmatprep.subr.mxu0 0.0
      %2495 = vmatpush1.msra.mxu0 %v2461
      %2496 = vmatprep.subr.mxu0 0.0
      %2497 = vmatpush1.msra.mxu0 %v2462
      %2498 = vmatprep.subr.mxu0 0.0
      %2499 = vmatpush1.msra.mxu0 %v2463
      %2500 = vmatprep.subr.mxu0 0.0
      %2501 = vmatpush1.msra.mxu0 0.0
      %2502 = vmatprep.subr.mxu0 0.0
      %2503 = vmatpush1.msra.mxu0 0.0
      %2504 = vmatprep.subr.mxu0 0.0
      %2505 = vmatpush1.msra.mxu0 0.0
      %2506 = vmatprep.subr.mxu0 0.0
      %2507 = vmatpush1.msra.mxu0 0.0
      %2508 = vmatprep.subr.mxu0 0.0
      %2509 = vmatpush1.msra.mxu0 0.0
      %2510 = vmatprep.subr.mxu0 0.0
      %2511 = vmatpush1.msra.mxu0 0.0
      %2512 = vmatprep.subr.mxu0 0.0
      %2513 = vmatpush1.msra.mxu0 0.0
      %2514 = vmatprep.subr.mxu0 0.0
      %2515 = vmatpush1.msra.mxu0 0.0
      %2516 = vmatprep.subr.mxu0 0.0
      %2517 = vmatpush1.msra.mxu0 0.0
      %2518 = vmatprep.subr.mxu0 0.0
      %2519 = vmatpush1.msra.mxu0 0.0
      %2520 = vmatprep.subr.mxu0 0.0
      %2521 = vmatpush1.msra.mxu0 0.0
      %2522 = vmatprep.subr.mxu0 0.0
      %2523 = vmatpush1.msra.mxu0 0.0
      %2524 = vmatprep.subr.mxu0 0.0
      %2525 = vmatpush1.msra.mxu0 0.0
      %2526 = vmatprep.subr.mxu0 0.0
      %2527 = vmatpush1.msra.mxu0 0.0
      %2528 = vmatprep.subr.mxu0 0.0
      %2529 = vmatpush1.msra.mxu0 0.0
      %2530 = vmatprep.subr.mxu0 0.0
      %2531 = vmatpush1.msra.mxu0 0.0
      %2532 = vmatprep.subr.mxu0 0.0
      %2533 = vmatpush1.msra.mxu0 0.0
      %2534 = vmatprep.subr.mxu0 0.0
      %2535 = vmatpush1.msra.mxu0 0.0
      %2536 = vmatprep.subr.mxu0 0.0
      %2537 = vmatpush1.msra.mxu0 0.0
      %2538 = vmatprep.subr.mxu0 0.0
      %2539 = vmatpush1.msra.mxu0 0.0
      %2540 = vmatprep.subr.mxu0 0.0
      %2541 = vmatpush1.msra.mxu0 0.0
      %2542 = vmatprep.subr.mxu0 0.0
      %2543 = vmatpush1.msra.mxu0 0.0
      %2544 = vmatprep.subr.mxu0 0.0
      %2545 = vmatpush1.msra.mxu0 0.0
      %2546 = vmatprep.subr.mxu0 0.0
      %2547 = vmatpush1.msra.mxu0 0.0
      %2548 = vmatprep.subr.mxu0 0.0
      %2549 = vmatpush1.msra.mxu0 0.0
      %2550 = vmatprep.subr.mxu0 0.0
      %2551 = vmatpush1.msra.mxu0 0.0
      %2552 = vmatprep.mubr.f32.mxu0 0.0
      %2553 = vmatmul.mubr.f32.gmra.mrb[0].mxu0 %v2465
      %v2554 = vpop.f32.mrb[0].mxu0
      %v2555 = vadd.f32 0.0, %v2554
      %v2556 = vpop.f32.mrb[0].mxu0
      %2557 = vmatprep.mubr.f32.mxu0 0.0
      %2558 = vmatmul.mubr.f32.gmra.mrb[0].mxu0 %v2468
      %v2559 = vpop.f32.mrb[0].mxu0
      %v2560 = vadd.f32 0.0, %v2559
      %v2561 = vpop.f32.mrb[0].mxu0
      %2562 = vmatprep.mubr.f32.mxu0 0.0
      %2563 = vmatmul.mubr.f32.gmra.mrb[0].mxu0 %v2471
      %v2564 = vpop.f32.mrb[0].mxu0
      %v2565 = vadd.f32 0.0, %v2564
      %v2566 = vpop.f32.mrb[0].mxu0
      %2567 = vmatprep.mubr.f32.mxu0 0.0
      %2568 = vmatmul.mubr.f32.gmra.mrb[0].mxu0 %v2474
      %v2569 = vpop.f32.mrb[0].mxu0
      %v2570 = vadd.f32 0.0, %v2569
      %v2571 = vpop.f32.mrb[0].mxu0
      %2572 = vmatprep.mubr.f32.mxu0 0.0
      %2573 = vmatmul.mubr.f32.gmra.mrb[0].mxu0 %v2477
      %v2574 = vpop.f32.mrb[0].mxu0
      %v2575 = vadd.f32 0.0, %v2574
      %v2576 = vpop.f32.mrb[0].mxu0
      %2577 = vmatprep.mubr.f32.mxu0 0.0
      %2578 = vmatmul.mubr.f32.gmra.mrb[0].mxu0 %v2480
      %v2579 = vpop.f32.mrb[0].mxu0
      %v2580 = vadd.f32 0.0, %v2579
      %v2581 = vpop.f32.mrb[0].mxu0
      %2582 = vmatprep.mubr.f32.mxu0 0.0
      %2583 = vmatmul.mubr.f32.gmra.mrb[0].mxu0 %v2483
      %v2584 = vpop.f32.mrb[0].mxu0
      %v2585 = vadd.f32 0.0, %v2584
      %v2586 = vpop.f32.mrb[0].mxu0
      %2587 = vmatprep.mubr.f32.mxu0 0.0
      %2588 = vmatmul.mubr.f32.gmra.mrb[0].mxu0 %v2486
      %v2589 = vpop.f32.mrb[0].mxu0
      %v2590 = vadd.f32 0.0, %v2589
      %v2591 = vpop.f32.mrb[0].mxu0
      %2592 = vdwg.mxu0
      %v2593 = vadd.f32 %v2440, %v2555
      %v2594 = vadd.f32 %v2441, %v2560
      %v2595 = vadd.f32 %v2442, %v2565
      %v2596 = vadd.f32 %v2443, %v2570
      %v2597 = vadd.f32 %v2444, %v2575
      %v2598 = vadd.f32 %v2445, %v2580
      %v2599 = vadd.f32 %v2446, %v2585
      %v2600 = vadd.f32 %v2447, %v2590
      %v2601 = vld [vmem:[%s2448 + $0x1] sm:$0xff]
      %v2602 = vld [vmem:[%s2448 + $0x11] sm:$0xff]
      %v2603 = vld [vmem:[%s2448 + $0x21] sm:$0xff]
      %v2604 = vld [vmem:[%s2448 + $0x31] sm:$0xff]
      %v2605 = vld [vmem:[%s2448 + $0x41] sm:$0xff]
      %v2606 = vld [vmem:[%s2448 + $0x51] sm:$0xff]
      %v2607 = vld [vmem:[%s2448 + $0x61] sm:$0xff]
      %v2608 = vld [vmem:[%s2448 + $0x71] sm:$0xff]
      %s2609 = scalar_lea.vmem %s1, 768
      %v2610 = vld [vmem:[%s2609] sm:$0xff]
      %v2611 = vld [vmem:[%s2609 + $0x8] sm:$0xff]
      %v2612 = vld [vmem:[%s2609 + $0x10] sm:$0xff]
      %v2613 = vld [vmem:[%s2609 + $0x18] sm:$0xff]
      %v2614 = vld [vmem:[%s2609 + $0x20] sm:$0xff]
      %v2615 = vld [vmem:[%s2609 + $0x28] sm:$0xff]
      %v2617 = vsel %vm211, %v2601, 0
      %v2620 = vsel %vm211, %v2602, 0
      %v2623 = vsel %vm211, %v2603, 0
      %v2626 = vsel %vm211, %v2604, 0
      %v2629 = vsel %vm211, %v2605, 0
      %v2632 = vsel %vm211, %v2606, 0
      %v2635 = vsel %vm211, %v2607, 0
      %v2638 = vsel %vm211, %v2608, 0
      %2640 = vmatprep.subr.mxu0 0.0
      %2641 = vmatpush1.msra.mxu0 %v2610
      %2642 = vmatprep.subr.mxu0 0.0
      %2643 = vmatpush1.msra.mxu0 %v2611
      %2644 = vmatprep.subr.mxu0 0.0
      %2645 = vmatpush1.msra.mxu0 %v2612
      %2646 = vmatprep.subr.mxu0 0.0
      %2647 = vmatpush1.msra.mxu0 %v2613
      %2648 = vmatprep.subr.mxu0 0.0
      %2649 = vmatpush1.msra.mxu0 %v2614
      %2650 = vmatprep.subr.mxu0 0.0
      %2651 = vmatpush1.msra.mxu0 %v2615
      %2652 = vmatprep.subr.mxu0 0.0
      %2653 = vmatpush1.msra.mxu0 0.0
      %2654 = vmatprep.subr.mxu0 0.0
      %2655 = vmatpush1.msra.mxu0 0.0
      %2656 = vmatprep.subr.mxu0 0.0
      %2657 = vmatpush1.msra.mxu0 0.0
      %2658 = vmatprep.subr.mxu0 0.0
      %2659 = vmatpush1.msra.mxu0 0.0
      %2660 = vmatprep.subr.mxu0 0.0
      %2661 = vmatpush1.msra.mxu0 0.0
      %2662 = vmatprep.subr.mxu0 0.0
      %2663 = vmatpush1.msra.mxu0 0.0
      %2664 = vmatprep.subr.mxu0 0.0
      %2665 = vmatpush1.msra.mxu0 0.0
      %2666 = vmatprep.subr.mxu0 0.0
      %2667 = vmatpush1.msra.mxu0 0.0
      %2668 = vmatprep.subr.mxu0 0.0
      %2669 = vmatpush1.msra.mxu0 0.0
      %2670 = vmatprep.subr.mxu0 0.0
      %2671 = vmatpush1.msra.mxu0 0.0
      %2672 = vmatprep.subr.mxu0 0.0
      %2673 = vmatpush1.msra.mxu0 0.0
      %2674 = vmatprep.subr.mxu0 0.0
      %2675 = vmatpush1.msra.mxu0 0.0
      %2676 = vmatprep.subr.mxu0 0.0
      %2677 = vmatpush1.msra.mxu0 0.0
      %2678 = vmatprep.subr.mxu0 0.0
      %2679 = vmatpush1.msra.mxu0 0.0
      %2680 = vmatprep.subr.mxu0 0.0
      %2681 = vmatpush1.msra.mxu0 0.0
      %2682 = vmatprep.subr.mxu0 0.0
      %2683 = vmatpush1.msra.mxu0 0.0
      %2684 = vmatprep.subr.mxu0 0.0
      %2685 = vmatpush1.msra.mxu0 0.0
      %2686 = vmatprep.subr.mxu0 0.0
      %2687 = vmatpush1.msra.mxu0 0.0
      %2688 = vmatprep.subr.mxu0 0.0
      %2689 = vmatpush1.msra.mxu0 0.0
      %2690 = vmatprep.subr.mxu0 0.0
      %2691 = vmatpush1.msra.mxu0 0.0
      %2692 = vmatprep.subr.mxu0 0.0
      %2693 = vmatpush1.msra.mxu0 0.0
      %2694 = vmatprep.subr.mxu0 0.0
      %2695 = vmatpush1.msra.mxu0 0.0
      %2696 = vmatprep.subr.mxu0 0.0
      %2697 = vmatpush1.msra.mxu0 0.0
      %2698 = vmatprep.subr.mxu0 0.0
      %2699 = vmatpush1.msra.mxu0 0.0
      %2700 = vmatprep.subr.mxu0 0.0
      %2701 = vmatpush1.msra.mxu0 0.0
      %2702 = vmatprep.subr.mxu0 0.0
      %2703 = vmatpush1.msra.mxu0 0.0
      %2704 = vmatprep.mubr.f32.mxu0 0.0
      %2705 = vmatmul.mubr.f32.gmra.mrb[0].mxu0 %v2617
      %v2706 = vpop.f32.mrb[0].mxu0
      %v2707 = vadd.f32 0.0, %v2706
      %v2708 = vpop.f32.mrb[0].mxu0
      %2709 = vmatprep.mubr.f32.mxu0 0.0
      %2710 = vmatmul.mubr.f32.gmra.mrb[0].mxu0 %v2620
      %v2711 = vpop.f32.mrb[0].mxu0
      %v2712 = vadd.f32 0.0, %v2711
      %v2713 = vpop.f32.mrb[0].mxu0
      %2714 = vmatprep.mubr.f32.mxu0 0.0
      %2715 = vmatmul.mubr.f32.gmra.mrb[0].mxu0 %v2623
      %v2716 = vpop.f32.mrb[0].mxu0
      %v2717 = vadd.f32 0.0, %v2716
      %v2718 = vpop.f32.mrb[0].mxu0
      %2719 = vmatprep.mubr.f32.mxu0 0.0
      %2720 = vmatmul.mubr.f32.gmra.mrb[0].mxu0 %v2626
      %v2721 = vpop.f32.mrb[0].mxu0
      %v2722 = vadd.f32 0.0, %v2721
      %v2723 = vpop.f32.mrb[0].mxu0
      %2724 = vmatprep.mubr.f32.mxu0 0.0
      %2725 = vmatmul.mubr.f32.gmra.mrb[0].mxu0 %v2629
      %v2726 = vpop.f32.mrb[0].mxu0
      %v2727 = vadd.f32 0.0, %v2726
      %v2728 = vpop.f32.mrb[0].mxu0
      %2729 = vmatprep.mubr.f32.mxu0 0.0
      %2730 = vmatmul.mubr.f32.gmra.mrb[0].mxu0 %v2632
      %v2731 = vpop.f32.mrb[0].mxu0
      %v2732 = vadd.f32 0.0, %v2731
      %v2733 = vpop.f32.mrb[0].mxu0
      %2734 = vmatprep.mubr.f32.mxu0 0.0
      %2735 = vmatmul.mubr.f32.gmra.mrb[0].mxu0 %v2635
      %v2736 = vpop.f32.mrb[0].mxu0
      %v2737 = vadd.f32 0.0, %v2736
      %v2738 = vpop.f32.mrb[0].mxu0
      %2739 = vmatprep.mubr.f32.mxu0 0.0
      %2740 = vmatmul.mubr.f32.gmra.mrb[0].mxu0 %v2638
      %v2741 = vpop.f32.mrb[0].mxu0
      %v2742 = vadd.f32 0.0, %v2741
      %v2743 = vpop.f32.mrb[0].mxu0
      %2744 = vdwg.mxu0
      %v2745 = vadd.f32 %v2593, %v2707
      %v2746 = vadd.f32 %v2594, %v2712
      %v2747 = vadd.f32 %v2595, %v2717
      %v2748 = vadd.f32 %v2596, %v2722
      %v2749 = vadd.f32 %v2597, %v2727
      %v2750 = vadd.f32 %v2598, %v2732
      %v2751 = vadd.f32 %v2599, %v2737
      %v2752 = vadd.f32 %v2600, %v2742
      %v2753 = vld [vmem:[%s2448 + $0x2] sm:$0xff]
      %v2754 = vld [vmem:[%s2448 + $0x12] sm:$0xff]
      %v2755 = vld [vmem:[%s2448 + $0x22] sm:$0xff]
      %v2756 = vld [vmem:[%s2448 + $0x32] sm:$0xff]
      %v2757 = vld [vmem:[%s2448 + $0x42] sm:$0xff]
      %v2758 = vld [vmem:[%s2448 + $0x52] sm:$0xff]
      %v2759 = vld [vmem:[%s2448 + $0x62] sm:$0xff]
      %v2760 = vld [vmem:[%s2448 + $0x72] sm:$0xff]
      %s2761 = scalar_lea.vmem %s1, 816
      %v2762 = vld [vmem:[%s2761] sm:$0xff]
      %v2763 = vld [vmem:[%s2761 + $0x8] sm:$0xff]
      %v2764 = vld [vmem:[%s2761 + $0x10] sm:$0xff]
      %v2765 = vld [vmem:[%s2761 + $0x18] sm:$0xff]
      %v2766 = vld [vmem:[%s2761 + $0x20] sm:$0xff]
      %v2767 = vld [vmem:[%s2761 + $0x28] sm:$0xff]
      %v2769 = vsel %vm211, %v2753, 0
      %v2772 = vsel %vm211, %v2754, 0
      %v2775 = vsel %vm211, %v2755, 0
      %v2778 = vsel %vm211, %v2756, 0
      %v2781 = vsel %vm211, %v2757, 0
      %v2784 = vsel %vm211, %v2758, 0
      %v2787 = vsel %vm211, %v2759, 0
      %v2790 = vsel %vm211, %v2760, 0
      %2792 = vmatprep.subr.mxu0 0.0
      %2793 = vmatpush1.msra.mxu0 %v2762
      %2794 = vmatprep.subr.mxu0 0.0
      %2795 = vmatpush1.msra.mxu0 %v2763
      %2796 = vmatprep.subr.mxu0 0.0
      %2797 = vmatpush1.msra.mxu0 %v2764
      %2798 = vmatprep.subr.mxu0 0.0
      %2799 = vmatpush1.msra.mxu0 %v2765
      %2800 = vmatprep.subr.mxu0 0.0
      %2801 = vmatpush1.msra.mxu0 %v2766
      %2802 = vmatprep.subr.mxu0 0.0
      %2803 = vmatpush1.msra.mxu0 %v2767
      %2804 = vmatprep.subr.mxu0 0.0
      %2805 = vmatpush1.msra.mxu0 0.0
      %2806 = vmatprep.subr.mxu0 0.0
      %2807 = vmatpush1.msra.mxu0 0.0
      %2808 = vmatprep.subr.mxu0 0.0
      %2809 = vmatpush1.msra.mxu0 0.0
      %2810 = vmatprep.subr.mxu0 0.0
      %2811 = vmatpush1.msra.mxu0 0.0
      %2812 = vmatprep.subr.mxu0 0.0
      %2813 = vmatpush1.msra.mxu0 0.0
      %2814 = vmatprep.subr.mxu0 0.0
      %2815 = vmatpush1.msra.mxu0 0.0
      %2816 = vmatprep.subr.mxu0 0.0
      %2817 = vmatpush1.msra.mxu0 0.0
      %2818 = vmatprep.subr.mxu0 0.0
      %2819 = vmatpush1.msra.mxu0 0.0
      %2820 = vmatprep.subr.mxu0 0.0
      %2821 = vmatpush1.msra.mxu0 0.0
      %2822 = vmatprep.subr.mxu0 0.0
      %2823 = vmatpush1.msra.mxu0 0.0
      %2824 = vmatprep.subr.mxu0 0.0
      %2825 = vmatpush1.msra.mxu0 0.0
      %2826 = vmatprep.subr.mxu0 0.0
      %2827 = vmatpush1.msra.mxu0 0.0
      %2828 = vmatprep.subr.mxu0 0.0
      %2829 = vmatpush1.msra.mxu0 0.0
      %2830 = vmatprep.subr.mxu0 0.0
      %2831 = vmatpush1.msra.mxu0 0.0
      %2832 = vmatprep.subr.mxu0 0.0
      %2833 = vmatpush1.msra.mxu0 0.0
      %2834 = vmatprep.subr.mxu0 0.0
      %2835 = vmatpush1.msra.mxu0 0.0
      %2836 = vmatprep.subr.mxu0 0.0
      %2837 = vmatpush1.msra.mxu0 0.0
      %2838 = vmatprep.subr.mxu0 0.0
      %2839 = vmatpush1.msra.mxu0 0.0
      %2840 = vmatprep.subr.mxu0 0.0
      %2841 = vmatpush1.msra.mxu0 0.0
      %2842 = vmatprep.subr.mxu0 0.0
      %2843 = vmatpush1.msra.mxu0 0.0
      %2844 = vmatprep.subr.mxu0 0.0
      %2845 = vmatpush1.msra.mxu0 0.0
      %2846 = vmatprep.subr.mxu0 0.0
      %2847 = vmatpush1.msra.mxu0 0.0
      %2848 = vmatprep.subr.mxu0 0.0
      %2849 = vmatpush1.msra.mxu0 0.0
      %2850 = vmatprep.subr.mxu0 0.0
      %2851 = vmatpush1.msra.mxu0 0.0
      %2852 = vmatprep.subr.mxu0 0.0
      %2853 = vmatpush1.msra.mxu0 0.0
      %2854 = vmatprep.subr.mxu0 0.0
      %2855 = vmatpush1.msra.mxu0 0.0
      %2856 = vmatprep.mubr.f32.mxu0 0.0
      %2857 = vmatmul.mubr.f32.gmra.mrb[0].mxu0 %v2769
      %v2858 = vpop.f32.mrb[0].mxu0
      %v2859 = vadd.f32 0.0, %v2858
      %v2860 = vpop.f32.mrb[0].mxu0
      %2861 = vmatprep.mubr.f32.mxu0 0.0
      %2862 = vmatmul.mubr.f32.gmra.mrb[0].mxu0 %v2772
      %v2863 = vpop.f32.mrb[0].mxu0
      %v2864 = vadd.f32 0.0, %v2863
      %v2865 = vpop.f32.mrb[0].mxu0
      %2866 = vmatprep.mubr.f32.mxu0 0.0
      %2867 = vmatmul.mubr.f32.gmra.mrb[0].mxu0 %v2775
      %v2868 = vpop.f32.mrb[0].mxu0
      %v2869 = vadd.f32 0.0, %v2868
      %v2870 = vpop.f32.mrb[0].mxu0
      %2871 = vmatprep.mubr.f32.mxu0 0.0
      %2872 = vmatmul.mubr.f32.gmra.mrb[0].mxu0 %v2778
      %v2873 = vpop.f32.mrb[0].mxu0
      %v2874 = vadd.f32 0.0, %v2873
      %v2875 = vpop.f32.mrb[0].mxu0
      %2876 = vmatprep.mubr.f32.mxu0 0.0
      %2877 = vmatmul.mubr.f32.gmra.mrb[0].mxu0 %v2781
      %v2878 = vpop.f32.mrb[0].mxu0
      %v2879 = vadd.f32 0.0, %v2878
      %v2880 = vpop.f32.mrb[0].mxu0
      %2881 = vmatprep.mubr.f32.mxu0 0.0
      %2882 = vmatmul.mubr.f32.gmra.mrb[0].mxu0 %v2784
      %v2883 = vpop.f32.mrb[0].mxu0
      %v2884 = vadd.f32 0.0, %v2883
      %v2885 = vpop.f32.mrb[0].mxu0
      %2886 = vmatprep.mubr.f32.mxu0 0.0
      %2887 = vmatmul.mubr.f32.gmra.mrb[0].mxu0 %v2787
      %v2888 = vpop.f32.mrb[0].mxu0
      %v2889 = vadd.f32 0.0, %v2888
      %v2890 = vpop.f32.mrb[0].mxu0
      %2891 = vmatprep.mubr.f32.mxu0 0.0
      %2892 = vmatmul.mubr.f32.gmra.mrb[0].mxu0 %v2790
      %v2893 = vpop.f32.mrb[0].mxu0
      %v2894 = vadd.f32 0.0, %v2893
      %v2895 = vpop.f32.mrb[0].mxu0
      %2896 = vdwg.mxu0
      %v2897 = vadd.f32 %v2745, %v2859
      %v2898 = vadd.f32 %v2746, %v2864
      %v2899 = vadd.f32 %v2747, %v2869
      %v2900 = vadd.f32 %v2748, %v2874
      %v2901 = vadd.f32 %v2749, %v2879
      %v2902 = vadd.f32 %v2750, %v2884
      %v2903 = vadd.f32 %v2751, %v2889
      %v2904 = vadd.f32 %v2752, %v2894
      %v2905 = vld [vmem:[%s2448 + $0x3] sm:$0xff]
      %v2906 = vld [vmem:[%s2448 + $0x13] sm:$0xff]
      %v2907 = vld [vmem:[%s2448 + $0x23] sm:$0xff]
      %v2908 = vld [vmem:[%s2448 + $0x33] sm:$0xff]
      %v2909 = vld [vmem:[%s2448 + $0x43] sm:$0xff]
      %v2910 = vld [vmem:[%s2448 + $0x53] sm:$0xff]
      %v2911 = vld [vmem:[%s2448 + $0x63] sm:$0xff]
      %v2912 = vld [vmem:[%s2448 + $0x73] sm:$0xff]
      %s2913 = scalar_lea.vmem %s1, 864
      %v2914 = vld [vmem:[%s2913] sm:$0xff]
      %v2915 = vld [vmem:[%s2913 + $0x8] sm:$0xff]
      %v2916 = vld [vmem:[%s2913 + $0x10] sm:$0xff]
      %v2917 = vld [vmem:[%s2913 + $0x18] sm:$0xff]
      %v2918 = vld [vmem:[%s2913 + $0x20] sm:$0xff]
      %v2919 = vld [vmem:[%s2913 + $0x28] sm:$0xff]
      %v2921 = vsel %vm211, %v2905, 0
      %v2924 = vsel %vm211, %v2906, 0
      %v2927 = vsel %vm211, %v2907, 0
      %v2930 = vsel %vm211, %v2908, 0
      %v2933 = vsel %vm211, %v2909, 0
      %v2936 = vsel %vm211, %v2910, 0
      %v2939 = vsel %vm211, %v2911, 0
      %v2942 = vsel %vm211, %v2912, 0
      %2944 = vmatprep.subr.mxu0 0.0
      %2945 = vmatpush1.msra.mxu0 %v2914
      %2946 = vmatprep.subr.mxu0 0.0
      %2947 = vmatpush1.msra.mxu0 %v2915
      %2948 = vmatprep.subr.mxu0 0.0
      %2949 = vmatpush1.msra.mxu0 %v2916
      %2950 = vmatprep.subr.mxu0 0.0
      %2951 = vmatpush1.msra.mxu0 %v2917
      %2952 = vmatprep.subr.mxu0 0.0
      %2953 = vmatpush1.msra.mxu0 %v2918
      %2954 = vmatprep.subr.mxu0 0.0
      %2955 = vmatpush1.msra.mxu0 %v2919
      %2956 = vmatprep.subr.mxu0 0.0
      %2957 = vmatpush1.msra.mxu0 0.0
      %2958 = vmatprep.subr.mxu0 0.0
      %2959 = vmatpush1.msra.mxu0 0.0
      %2960 = vmatprep.subr.mxu0 0.0
      %2961 = vmatpush1.msra.mxu0 0.0
      %2962 = vmatprep.subr.mxu0 0.0
      %2963 = vmatpush1.msra.mxu0 0.0
      %2964 = vmatprep.subr.mxu0 0.0
      %2965 = vmatpush1.msra.mxu0 0.0
      %2966 = vmatprep.subr.mxu0 0.0
      %2967 = vmatpush1.msra.mxu0 0.0
      %2968 = vmatprep.subr.mxu0 0.0
      %2969 = vmatpush1.msra.mxu0 0.0
      %2970 = vmatprep.subr.mxu0 0.0
      %2971 = vmatpush1.msra.mxu0 0.0
      %2972 = vmatprep.subr.mxu0 0.0
      %2973 = vmatpush1.msra.mxu0 0.0
      %2974 = vmatprep.subr.mxu0 0.0
      %2975 = vmatpush1.msra.mxu0 0.0
      %2976 = vmatprep.subr.mxu0 0.0
      %2977 = vmatpush1.msra.mxu0 0.0
      %2978 = vmatprep.subr.mxu0 0.0
      %2979 = vmatpush1.msra.mxu0 0.0
      %2980 = vmatprep.subr.mxu0 0.0
      %2981 = vmatpush1.msra.mxu0 0.0
      %2982 = vmatprep.subr.mxu0 0.0
      %2983 = vmatpush1.msra.mxu0 0.0
      %2984 = vmatprep.subr.mxu0 0.0
      %2985 = vmatpush1.msra.mxu0 0.0
      %2986 = vmatprep.subr.mxu0 0.0
      %2987 = vmatpush1.msra.mxu0 0.0
      %2988 = vmatprep.subr.mxu0 0.0
      %2989 = vmatpush1.msra.mxu0 0.0
      %2990 = vmatprep.subr.mxu0 0.0
      %2991 = vmatpush1.msra.mxu0 0.0
      %2992 = vmatprep.subr.mxu0 0.0
      %2993 = vmatpush1.msra.mxu0 0.0
      %2994 = vmatprep.subr.mxu0 0.0
      %2995 = vmatpush1.msra.mxu0 0.0
      %2996 = vmatprep.subr.mxu0 0.0
      %2997 = vmatpush1.msra.mxu0 0.0
      %2998 = vmatprep.subr.mxu0 0.0
      %2999 = vmatpush1.msra.mxu0 0.0
      %3000 = vmatprep.subr.mxu0 0.0
      %3001 = vmatpush1.msra.mxu0 0.0
      %3002 = vmatprep.subr.mxu0 0.0
      %3003 = vmatpush1.msra.mxu0 0.0
      %3004 = vmatprep.subr.mxu0 0.0
      %3005 = vmatpush1.msra.mxu0 0.0
      %3006 = vmatprep.subr.mxu0 0.0
      %3007 = vmatpush1.msra.mxu0 0.0
      %3008 = vmatprep.mubr.f32.mxu0 0.0
      %3009 = vmatmul.mubr.f32.gmra.mrb[0].mxu0 %v2921
      %v3010 = vpop.f32.mrb[0].mxu0
      %v3011 = vadd.f32 0.0, %v3010
      %v3012 = vpop.f32.mrb[0].mxu0
      %3013 = vmatprep.mubr.f32.mxu0 0.0
      %3014 = vmatmul.mubr.f32.gmra.mrb[0].mxu0 %v2924
      %v3015 = vpop.f32.mrb[0].mxu0
      %v3016 = vadd.f32 0.0, %v3015
      %v3017 = vpop.f32.mrb[0].mxu0
      %3018 = vmatprep.mubr.f32.mxu0 0.0
      %3019 = vmatmul.mubr.f32.gmra.mrb[0].mxu0 %v2927
      %v3020 = vpop.f32.mrb[0].mxu0
      %v3021 = vadd.f32 0.0, %v3020
      %v3022 = vpop.f32.mrb[0].mxu0
      %3023 = vmatprep.mubr.f32.mxu0 0.0
      %3024 = vmatmul.mubr.f32.gmra.mrb[0].mxu0 %v2930
      %v3025 = vpop.f32.mrb[0].mxu0
      %v3026 = vadd.f32 0.0, %v3025
      %v3027 = vpop.f32.mrb[0].mxu0
      %3028 = vmatprep.mubr.f32.mxu0 0.0
      %3029 = vmatmul.mubr.f32.gmra.mrb[0].mxu0 %v2933
      %v3030 = vpop.f32.mrb[0].mxu0
      %v3031 = vadd.f32 0.0, %v3030
      %v3032 = vpop.f32.mrb[0].mxu0
      %3033 = vmatprep.mubr.f32.mxu0 0.0
      %3034 = vmatmul.mubr.f32.gmra.mrb[0].mxu0 %v2936
      %v3035 = vpop.f32.mrb[0].mxu0
      %v3036 = vadd.f32 0.0, %v3035
      %v3037 = vpop.f32.mrb[0].mxu0
      %3038 = vmatprep.mubr.f32.mxu0 0.0
      %3039 = vmatmul.mubr.f32.gmra.mrb[0].mxu0 %v2939
      %v3040 = vpop.f32.mrb[0].mxu0
      %v3041 = vadd.f32 0.0, %v3040
      %v3042 = vpop.f32.mrb[0].mxu0
      %3043 = vmatprep.mubr.f32.mxu0 0.0
      %3044 = vmatmul.mubr.f32.gmra.mrb[0].mxu0 %v2942
      %v3045 = vpop.f32.mrb[0].mxu0
      %v3046 = vadd.f32 0.0, %v3045
      %v3047 = vpop.f32.mrb[0].mxu0
      %3048 = vdwg.mxu0
      %v3049 = vadd.f32 %v2897, %v3011
      %v3050 = vadd.f32 %v2898, %v3016
      %v3051 = vadd.f32 %v2899, %v3021
      %v3052 = vadd.f32 %v2900, %v3026
      %v3053 = vadd.f32 %v2901, %v3031
      %v3054 = vadd.f32 %v2902, %v3036
      %v3055 = vadd.f32 %v2903, %v3041
      %v3056 = vadd.f32 %v2904, %v3046
      %v3057 = vld [vmem:[%s2448 + $0x4] sm:$0xff]
      %v3058 = vld [vmem:[%s2448 + $0x14] sm:$0xff]
      %v3059 = vld [vmem:[%s2448 + $0x24] sm:$0xff]
      %v3060 = vld [vmem:[%s2448 + $0x34] sm:$0xff]
      %v3061 = vld [vmem:[%s2448 + $0x44] sm:$0xff]
      %v3062 = vld [vmem:[%s2448 + $0x54] sm:$0xff]
      %v3063 = vld [vmem:[%s2448 + $0x64] sm:$0xff]
      %v3064 = vld [vmem:[%s2448 + $0x74] sm:$0xff]
      %s3065 = scalar_lea.vmem %s1, 912
      %v3066 = vld [vmem:[%s3065] sm:$0xff]
      %v3067 = vld [vmem:[%s3065 + $0x8] sm:$0xff]
      %v3068 = vld [vmem:[%s3065 + $0x10] sm:$0xff]
      %v3069 = vld [vmem:[%s3065 + $0x18] sm:$0xff]
      %v3070 = vld [vmem:[%s3065 + $0x20] sm:$0xff]
      %v3071 = vld [vmem:[%s3065 + $0x28] sm:$0xff]
      %v3073 = vsel %vm211, %v3057, 0
      %v3076 = vsel %vm211, %v3058, 0
      %v3079 = vsel %vm211, %v3059, 0
      %v3082 = vsel %vm211, %v3060, 0
      %v3085 = vsel %vm211, %v3061, 0
      %v3088 = vsel %vm211, %v3062, 0
      %v3091 = vsel %vm211, %v3063, 0
      %v3094 = vsel %vm211, %v3064, 0
      %3096 = vmatprep.subr.mxu0 0.0
      %3097 = vmatpush1.msra.mxu0 %v3066
      %3098 = vmatprep.subr.mxu0 0.0
      %3099 = vmatpush1.msra.mxu0 %v3067
      %3100 = vmatprep.subr.mxu0 0.0
      %3101 = vmatpush1.msra.mxu0 %v3068
      %3102 = vmatprep.subr.mxu0 0.0
      %3103 = vmatpush1.msra.mxu0 %v3069
      %3104 = vmatprep.subr.mxu0 0.0
      %3105 = vmatpush1.msra.mxu0 %v3070
      %3106 = vmatprep.subr.mxu0 0.0
      %3107 = vmatpush1.msra.mxu0 %v3071
      %3108 = vmatprep.subr.mxu0 0.0
      %3109 = vmatpush1.msra.mxu0 0.0
      %3110 = vmatprep.subr.mxu0 0.0
      %3111 = vmatpush1.msra.mxu0 0.0
      %3112 = vmatprep.subr.mxu0 0.0
      %3113 = vmatpush1.msra.mxu0 0.0
      %3114 = vmatprep.subr.mxu0 0.0
      %3115 = vmatpush1.msra.mxu0 0.0
      %3116 = vmatprep.subr.mxu0 0.0
      %3117 = vmatpush1.msra.mxu0 0.0
      %3118 = vmatprep.subr.mxu0 0.0
      %3119 = vmatpush1.msra.mxu0 0.0
      %3120 = vmatprep.subr.mxu0 0.0
      %3121 = vmatpush1.msra.mxu0 0.0
      %3122 = vmatprep.subr.mxu0 0.0
      %3123 = vmatpush1.msra.mxu0 0.0
      %3124 = vmatprep.subr.mxu0 0.0
      %3125 = vmatpush1.msra.mxu0 0.0
      %3126 = vmatprep.subr.mxu0 0.0
      %3127 = vmatpush1.msra.mxu0 0.0
      %3128 = vmatprep.subr.mxu0 0.0
      %3129 = vmatpush1.msra.mxu0 0.0
      %3130 = vmatprep.subr.mxu0 0.0
      %3131 = vmatpush1.msra.mxu0 0.0
      %3132 = vmatprep.subr.mxu0 0.0
      %3133 = vmatpush1.msra.mxu0 0.0
      %3134 = vmatprep.subr.mxu0 0.0
      %3135 = vmatpush1.msra.mxu0 0.0
      %3136 = vmatprep.subr.mxu0 0.0
      %3137 = vmatpush1.msra.mxu0 0.0
      %3138 = vmatprep.subr.mxu0 0.0
      %3139 = vmatpush1.msra.mxu0 0.0
      %3140 = vmatprep.subr.mxu0 0.0
      %3141 = vmatpush1.msra.mxu0 0.0
      %3142 = vmatprep.subr.mxu0 0.0
      %3143 = vmatpush1.msra.mxu0 0.0
      %3144 = vmatprep.subr.mxu0 0.0
      %3145 = vmatpush1.msra.mxu0 0.0
      %3146 = vmatprep.subr.mxu0 0.0
      %3147 = vmatpush1.msra.mxu0 0.0
      %3148 = vmatprep.subr.mxu0 0.0
      %3149 = vmatpush1.msra.mxu0 0.0
      %3150 = vmatprep.subr.mxu0 0.0
      %3151 = vmatpush1.msra.mxu0 0.0
      %3152 = vmatprep.subr.mxu0 0.0
      %3153 = vmatpush1.msra.mxu0 0.0
      %3154 = vmatprep.subr.mxu0 0.0
      %3155 = vmatpush1.msra.mxu0 0.0
      %3156 = vmatprep.subr.mxu0 0.0
      %3157 = vmatpush1.msra.mxu0 0.0
      %3158 = vmatprep.subr.mxu0 0.0
      %3159 = vmatpush1.msra.mxu0 0.0
      %3160 = vmatprep.mubr.f32.mxu0 0.0
      %3161 = vmatmul.mubr.f32.gmra.mrb[0].mxu0 %v3073
      %v3162 = vpop.f32.mrb[0].mxu0
      %v3163 = vadd.f32 0.0, %v3162
      %v3164 = vpop.f32.mrb[0].mxu0
      %3165 = vmatprep.mubr.f32.mxu0 0.0
      %3166 = vmatmul.mubr.f32.gmra.mrb[0].mxu0 %v3076
      %v3167 = vpop.f32.mrb[0].mxu0
      %v3168 = vadd.f32 0.0, %v3167
      %v3169 = vpop.f32.mrb[0].mxu0
      %3170 = vmatprep.mubr.f32.mxu0 0.0
      %3171 = vmatmul.mubr.f32.gmra.mrb[0].mxu0 %v3079
      %v3172 = vpop.f32.mrb[0].mxu0
      %v3173 = vadd.f32 0.0, %v3172
      %v3174 = vpop.f32.mrb[0].mxu0
      %3175 = vmatprep.mubr.f32.mxu0 0.0
      %3176 = vmatmul.mubr.f32.gmra.mrb[0].mxu0 %v3082
      %v3177 = vpop.f32.mrb[0].mxu0
      %v3178 = vadd.f32 0.0, %v3177
      %v3179 = vpop.f32.mrb[0].mxu0
      %3180 = vmatprep.mubr.f32.mxu0 0.0
      %3181 = vmatmul.mubr.f32.gmra.mrb[0].mxu0 %v3085
      %v3182 = vpop.f32.mrb[0].mxu0
      %v3183 = vadd.f32 0.0, %v3182
      %v3184 = vpop.f32.mrb[0].mxu0
      %3185 = vmatprep.mubr.f32.mxu0 0.0
      %3186 = vmatmul.mubr.f32.gmra.mrb[0].mxu0 %v3088
      %v3187 = vpop.f32.mrb[0].mxu0
      %v3188 = vadd.f32 0.0, %v3187
      %v3189 = vpop.f32.mrb[0].mxu0
      %3190 = vmatprep.mubr.f32.mxu0 0.0
      %3191 = vmatmul.mubr.f32.gmra.mrb[0].mxu0 %v3091
      %v3192 = vpop.f32.mrb[0].mxu0
      %v3193 = vadd.f32 0.0, %v3192
      %v3194 = vpop.f32.mrb[0].mxu0
      %3195 = vmatprep.mubr.f32.mxu0 0.0
      %3196 = vmatmul.mubr.f32.gmra.mrb[0].mxu0 %v3094
      %v3197 = vpop.f32.mrb[0].mxu0
      %v3198 = vadd.f32 0.0, %v3197
      %v3199 = vpop.f32.mrb[0].mxu0
      %3200 = vdwg.mxu0
      %v3201 = vadd.f32 %v3049, %v3163
      %v3202 = vadd.f32 %v3050, %v3168
      %v3203 = vadd.f32 %v3051, %v3173
      %v3204 = vadd.f32 %v3052, %v3178
      %v3205 = vadd.f32 %v3053, %v3183
      %v3206 = vadd.f32 %v3054, %v3188
      %v3207 = vadd.f32 %v3055, %v3193
      %v3208 = vadd.f32 %v3056, %v3198
      %s3209 = scalar_lea.vmem %s172, 64
      %v3210 = vld [vmem:[%s3209] sm:$0xff]
      %v3211 = vld [vmem:[%s3209 + $0x10] sm:$0xff]
      %v3212 = vld [vmem:[%s3209 + $0x20] sm:$0xff]
      %v3213 = vld [vmem:[%s3209 + $0x30] sm:$0xff]
      %v3214 = vld [vmem:[%s3209 + $0x40] sm:$0xff]
      %v3215 = vld [vmem:[%s3209 + $0x50] sm:$0xff]
      %v3216 = vld [vmem:[%s3209 + $0x60] sm:$0xff]
      %v3217 = vld [vmem:[%s3209 + $0x70] sm:$0xff]
      %s3218 = scalar_lea.vmem %s1, 960
      %v3219 = vld [vmem:[%s3218] sm:$0xff]
      %v3220 = vld [vmem:[%s3218 + $0x8] sm:$0xff]
      %v3221 = vld [vmem:[%s3218 + $0x10] sm:$0xff]
      %v3222 = vld [vmem:[%s3218 + $0x18] sm:$0xff]
      %v3223 = vld [vmem:[%s3218 + $0x20] sm:$0xff]
      %v3224 = vld [vmem:[%s3218 + $0x28] sm:$0xff]
      %v3226 = vsel %vm211, %v3210, 0
      %v3229 = vsel %vm211, %v3211, 0
      %v3232 = vsel %vm211, %v3212, 0
      %v3235 = vsel %vm211, %v3213, 0
      %v3238 = vsel %vm211, %v3214, 0
      %v3241 = vsel %vm211, %v3215, 0
      %v3244 = vsel %vm211, %v3216, 0
      %v3247 = vsel %vm211, %v3217, 0
      %3249 = vmatprep.subr.mxu0 0.0
      %3250 = vmatpush1.msra.mxu0 %v3219
      %3251 = vmatprep.subr.mxu0 0.0
      %3252 = vmatpush1.msra.mxu0 %v3220
      %3253 = vmatprep.subr.mxu0 0.0
      %3254 = vmatpush1.msra.mxu0 %v3221
      %3255 = vmatprep.subr.mxu0 0.0
      %3256 = vmatpush1.msra.mxu0 %v3222
      %3257 = vmatprep.subr.mxu0 0.0
      %3258 = vmatpush1.msra.mxu0 %v3223
      %3259 = vmatprep.subr.mxu0 0.0
      %3260 = vmatpush1.msra.mxu0 %v3224
      %3261 = vmatprep.subr.mxu0 0.0
      %3262 = vmatpush1.msra.mxu0 0.0
      %3263 = vmatprep.subr.mxu0 0.0
      %3264 = vmatpush1.msra.mxu0 0.0
      %3265 = vmatprep.subr.mxu0 0.0
      %3266 = vmatpush1.msra.mxu0 0.0
      %3267 = vmatprep.subr.mxu0 0.0
      %3268 = vmatpush1.msra.mxu0 0.0
      %3269 = vmatprep.subr.mxu0 0.0
      %3270 = vmatpush1.msra.mxu0 0.0
      %3271 = vmatprep.subr.mxu0 0.0
      %3272 = vmatpush1.msra.mxu0 0.0
      %3273 = vmatprep.subr.mxu0 0.0
      %3274 = vmatpush1.msra.mxu0 0.0
      %3275 = vmatprep.subr.mxu0 0.0
      %3276 = vmatpush1.msra.mxu0 0.0
      %3277 = vmatprep.subr.mxu0 0.0
      %3278 = vmatpush1.msra.mxu0 0.0
      %3279 = vmatprep.subr.mxu0 0.0
      %3280 = vmatpush1.msra.mxu0 0.0
      %3281 = vmatprep.subr.mxu0 0.0
      %3282 = vmatpush1.msra.mxu0 0.0
      %3283 = vmatprep.subr.mxu0 0.0
      %3284 = vmatpush1.msra.mxu0 0.0
      %3285 = vmatprep.subr.mxu0 0.0
      %3286 = vmatpush1.msra.mxu0 0.0
      %3287 = vmatprep.subr.mxu0 0.0
      %3288 = vmatpush1.msra.mxu0 0.0
      %3289 = vmatprep.subr.mxu0 0.0
      %3290 = vmatpush1.msra.mxu0 0.0
      %3291 = vmatprep.subr.mxu0 0.0
      %3292 = vmatpush1.msra.mxu0 0.0
      %3293 = vmatprep.subr.mxu0 0.0
      %3294 = vmatpush1.msra.mxu0 0.0
      %3295 = vmatprep.subr.mxu0 0.0
      %3296 = vmatpush1.msra.mxu0 0.0
      %3297 = vmatprep.subr.mxu0 0.0
      %3298 = vmatpush1.msra.mxu0 0.0
      %3299 = vmatprep.subr.mxu0 0.0
      %3300 = vmatpush1.msra.mxu0 0.0
      %3301 = vmatprep.subr.mxu0 0.0
      %3302 = vmatpush1.msra.mxu0 0.0
      %3303 = vmatprep.subr.mxu0 0.0
      %3304 = vmatpush1.msra.mxu0 0.0
      %3305 = vmatprep.subr.mxu0 0.0
      %3306 = vmatpush1.msra.mxu0 0.0
      %3307 = vmatprep.subr.mxu0 0.0
      %3308 = vmatpush1.msra.mxu0 0.0
      %3309 = vmatprep.subr.mxu0 0.0
      %3310 = vmatpush1.msra.mxu0 0.0
      %3311 = vmatprep.subr.mxu0 0.0
      %3312 = vmatpush1.msra.mxu0 0.0
      %3313 = vmatprep.mubr.f32.mxu0 0.0
      %3314 = vmatmul.mubr.f32.gmra.mrb[0].mxu0 %v3226
      %v3315 = vpop.f32.mrb[0].mxu0
      %v3316 = vadd.f32 0.0, %v3315
      %v3317 = vpop.f32.mrb[0].mxu0
      %3318 = vmatprep.mubr.f32.mxu0 0.0
      %3319 = vmatmul.mubr.f32.gmra.mrb[0].mxu0 %v3229
      %v3320 = vpop.f32.mrb[0].mxu0
      %v3321 = vadd.f32 0.0, %v3320
      %v3322 = vpop.f32.mrb[0].mxu0
      %3323 = vmatprep.mubr.f32.mxu0 0.0
      %3324 = vmatmul.mubr.f32.gmra.mrb[0].mxu0 %v3232
      %v3325 = vpop.f32.mrb[0].mxu0
      %v3326 = vadd.f32 0.0, %v3325
      %v3327 = vpop.f32.mrb[0].mxu0
      %3328 = vmatprep.mubr.f32.mxu0 0.0
      %3329 = vmatmul.mubr.f32.gmra.mrb[0].mxu0 %v3235
      %v3330 = vpop.f32.mrb[0].mxu0
      %v3331 = vadd.f32 0.0, %v3330
      %v3332 = vpop.f32.mrb[0].mxu0
      %3333 = vmatprep.mubr.f32.mxu0 0.0
      %3334 = vmatmul.mubr.f32.gmra.mrb[0].mxu0 %v3238
      %v3335 = vpop.f32.mrb[0].mxu0
      %v3336 = vadd.f32 0.0, %v3335
      %v3337 = vpop.f32.mrb[0].mxu0
      %3338 = vmatprep.mubr.f32.mxu0 0.0
      %3339 = vmatmul.mubr.f32.gmra.mrb[0].mxu0 %v3241
      %v3340 = vpop.f32.mrb[0].mxu0
      %v3341 = vadd.f32 0.0, %v3340
      %v3342 = vpop.f32.mrb[0].mxu0
      %3343 = vmatprep.mubr.f32.mxu0 0.0
      %3344 = vmatmul.mubr.f32.gmra.mrb[0].mxu0 %v3244
      %v3345 = vpop.f32.mrb[0].mxu0
      %v3346 = vadd.f32 0.0, %v3345
      %v3347 = vpop.f32.mrb[0].mxu0
      %3348 = vmatprep.mubr.f32.mxu0 0.0
      %3349 = vmatmul.mubr.f32.gmra.mrb[0].mxu0 %v3247
      %v3350 = vpop.f32.mrb[0].mxu0
      %v3351 = vadd.f32 0.0, %v3350
      %v3352 = vpop.f32.mrb[0].mxu0
      %3353 = vdwg.mxu0
      %v3354 = vadd.f32 %v3201, %v3316
      %v3355 = vadd.f32 %v3202, %v3321
      %v3356 = vadd.f32 %v3203, %v3326
      %v3357 = vadd.f32 %v3204, %v3331
      %v3358 = vadd.f32 %v3205, %v3336
      %v3359 = vadd.f32 %v3206, %v3341
      %v3360 = vadd.f32 %v3207, %v3346
      %v3361 = vadd.f32 %v3208, %v3351
      %v3362 = vld [vmem:[%s3209 + $0x1] sm:$0xff]
      %v3363 = vld [vmem:[%s3209 + $0x11] sm:$0xff]
      %v3364 = vld [vmem:[%s3209 + $0x21] sm:$0xff]
      %v3365 = vld [vmem:[%s3209 + $0x31] sm:$0xff]
      %v3366 = vld [vmem:[%s3209 + $0x41] sm:$0xff]
      %v3367 = vld [vmem:[%s3209 + $0x51] sm:$0xff]
      %v3368 = vld [vmem:[%s3209 + $0x61] sm:$0xff]
      %v3369 = vld [vmem:[%s3209 + $0x71] sm:$0xff]
      %s3370 = scalar_lea.vmem %s1, 1008
      %v3371 = vld [vmem:[%s3370] sm:$0xff]
      %v3372 = vld [vmem:[%s3370 + $0x8] sm:$0xff]
      %v3373 = vld [vmem:[%s3370 + $0x10] sm:$0xff]
      %v3374 = vld [vmem:[%s3370 + $0x18] sm:$0xff]
      %v3375 = vld [vmem:[%s3370 + $0x20] sm:$0xff]
      %v3376 = vld [vmem:[%s3370 + $0x28] sm:$0xff]
      %v3378 = vsel %vm211, %v3362, 0
      %v3381 = vsel %vm211, %v3363, 0
      %v3384 = vsel %vm211, %v3364, 0
      %v3387 = vsel %vm211, %v3365, 0
      %v3390 = vsel %vm211, %v3366, 0
      %v3393 = vsel %vm211, %v3367, 0
      %v3396 = vsel %vm211, %v3368, 0
      %v3399 = vsel %vm211, %v3369, 0
      %3401 = vmatprep.subr.mxu0 0.0
      %3402 = vmatpush1.msra.mxu0 %v3371
      %3403 = vmatprep.subr.mxu0 0.0
      %3404 = vmatpush1.msra.mxu0 %v3372
      %3405 = vmatprep.subr.mxu0 0.0
      %3406 = vmatpush1.msra.mxu0 %v3373
      %3407 = vmatprep.subr.mxu0 0.0
      %3408 = vmatpush1.msra.mxu0 %v3374
      %3409 = vmatprep.subr.mxu0 0.0
      %3410 = vmatpush1.msra.mxu0 %v3375
      %3411 = vmatprep.subr.mxu0 0.0
      %3412 = vmatpush1.msra.mxu0 %v3376
      %3413 = vmatprep.subr.mxu0 0.0
      %3414 = vmatpush1.msra.mxu0 0.0
      %3415 = vmatprep.subr.mxu0 0.0
      %3416 = vmatpush1.msra.mxu0 0.0
      %3417 = vmatprep.subr.mxu0 0.0
      %3418 = vmatpush1.msra.mxu0 0.0
      %3419 = vmatprep.subr.mxu0 0.0
      %3420 = vmatpush1.msra.mxu0 0.0
      %3421 = vmatprep.subr.mxu0 0.0
      %3422 = vmatpush1.msra.mxu0 0.0
      %3423 = vmatprep.subr.mxu0 0.0
      %3424 = vmatpush1.msra.mxu0 0.0
      %3425 = vmatprep.subr.mxu0 0.0
      %3426 = vmatpush1.msra.mxu0 0.0
      %3427 = vmatprep.subr.mxu0 0.0
      %3428 = vmatpush1.msra.mxu0 0.0
      %3429 = vmatprep.subr.mxu0 0.0
      %3430 = vmatpush1.msra.mxu0 0.0
      %3431 = vmatprep.subr.mxu0 0.0
      %3432 = vmatpush1.msra.mxu0 0.0
      %3433 = vmatprep.subr.mxu0 0.0
      %3434 = vmatpush1.msra.mxu0 0.0
      %3435 = vmatprep.subr.mxu0 0.0
      %3436 = vmatpush1.msra.mxu0 0.0
      %3437 = vmatprep.subr.mxu0 0.0
      %3438 = vmatpush1.msra.mxu0 0.0
      %3439 = vmatprep.subr.mxu0 0.0
      %3440 = vmatpush1.msra.mxu0 0.0
      %3441 = vmatprep.subr.mxu0 0.0
      %3442 = vmatpush1.msra.mxu0 0.0
      %3443 = vmatprep.subr.mxu0 0.0
      %3444 = vmatpush1.msra.mxu0 0.0
      %3445 = vmatprep.subr.mxu0 0.0
      %3446 = vmatpush1.msra.mxu0 0.0
      %3447 = vmatprep.subr.mxu0 0.0
      %3448 = vmatpush1.msra.mxu0 0.0
      %3449 = vmatprep.subr.mxu0 0.0
      %3450 = vmatpush1.msra.mxu0 0.0
      %3451 = vmatprep.subr.mxu0 0.0
      %3452 = vmatpush1.msra.mxu0 0.0
      %3453 = vmatprep.subr.mxu0 0.0
      %3454 = vmatpush1.msra.mxu0 0.0
      %3455 = vmatprep.subr.mxu0 0.0
      %3456 = vmatpush1.msra.mxu0 0.0
      %3457 = vmatprep.subr.mxu0 0.0
      %3458 = vmatpush1.msra.mxu0 0.0
      %3459 = vmatprep.subr.mxu0 0.0
      %3460 = vmatpush1.msra.mxu0 0.0
      %3461 = vmatprep.subr.mxu0 0.0
      %3462 = vmatpush1.msra.mxu0 0.0
      %3463 = vmatprep.subr.mxu0 0.0
      %3464 = vmatpush1.msra.mxu0 0.0
      %3465 = vmatprep.mubr.f32.mxu0 0.0
      %3466 = vmatmul.mubr.f32.gmra.mrb[0].mxu0 %v3378
      %v3467 = vpop.f32.mrb[0].mxu0
      %v3468 = vadd.f32 0.0, %v3467
      %v3469 = vpop.f32.mrb[0].mxu0
      %3470 = vmatprep.mubr.f32.mxu0 0.0
      %3471 = vmatmul.mubr.f32.gmra.mrb[0].mxu0 %v3381
      %v3472 = vpop.f32.mrb[0].mxu0
      %v3473 = vadd.f32 0.0, %v3472
      %v3474 = vpop.f32.mrb[0].mxu0
      %3475 = vmatprep.mubr.f32.mxu0 0.0
      %3476 = vmatmul.mubr.f32.gmra.mrb[0].mxu0 %v3384
      %v3477 = vpop.f32.mrb[0].mxu0
      %v3478 = vadd.f32 0.0, %v3477
      %v3479 = vpop.f32.mrb[0].mxu0
      %3480 = vmatprep.mubr.f32.mxu0 0.0
      %3481 = vmatmul.mubr.f32.gmra.mrb[0].mxu0 %v3387
      %v3482 = vpop.f32.mrb[0].mxu0
      %v3483 = vadd.f32 0.0, %v3482
      %v3484 = vpop.f32.mrb[0].mxu0
      %3485 = vmatprep.mubr.f32.mxu0 0.0
      %3486 = vmatmul.mubr.f32.gmra.mrb[0].mxu0 %v3390
      %v3487 = vpop.f32.mrb[0].mxu0
      %v3488 = vadd.f32 0.0, %v3487
      %v3489 = vpop.f32.mrb[0].mxu0
      %3490 = vmatprep.mubr.f32.mxu0 0.0
      %3491 = vmatmul.mubr.f32.gmra.mrb[0].mxu0 %v3393
      %v3492 = vpop.f32.mrb[0].mxu0
      %v3493 = vadd.f32 0.0, %v3492
      %v3494 = vpop.f32.mrb[0].mxu0
      %3495 = vmatprep.mubr.f32.mxu0 0.0
      %3496 = vmatmul.mubr.f32.gmra.mrb[0].mxu0 %v3396
      %v3497 = vpop.f32.mrb[0].mxu0
      %v3498 = vadd.f32 0.0, %v3497
      %v3499 = vpop.f32.mrb[0].mxu0
      %3500 = vmatprep.mubr.f32.mxu0 0.0
      %3501 = vmatmul.mubr.f32.gmra.mrb[0].mxu0 %v3399
      %v3502 = vpop.f32.mrb[0].mxu0
      %v3503 = vadd.f32 0.0, %v3502
      %v3504 = vpop.f32.mrb[0].mxu0
      %3505 = vdwg.mxu0
      %v3506 = vadd.f32 %v3354, %v3468
      %v3507 = vadd.f32 %v3355, %v3473
      %v3508 = vadd.f32 %v3356, %v3478
      %v3509 = vadd.f32 %v3357, %v3483
      %v3510 = vadd.f32 %v3358, %v3488
      %v3511 = vadd.f32 %v3359, %v3493
      %v3512 = vadd.f32 %v3360, %v3498
      %v3513 = vadd.f32 %v3361, %v3503
      %v3514 = vld [vmem:[%s3209 + $0x2] sm:$0xff]
      %v3515 = vld [vmem:[%s3209 + $0x12] sm:$0xff]
      %v3516 = vld [vmem:[%s3209 + $0x22] sm:$0xff]
      %v3517 = vld [vmem:[%s3209 + $0x32] sm:$0xff]
      %v3518 = vld [vmem:[%s3209 + $0x42] sm:$0xff]
      %v3519 = vld [vmem:[%s3209 + $0x52] sm:$0xff]
      %v3520 = vld [vmem:[%s3209 + $0x62] sm:$0xff]
      %v3521 = vld [vmem:[%s3209 + $0x72] sm:$0xff]
      %s3522 = scalar_lea.vmem %s1, 1056
      %v3523 = vld [vmem:[%s3522] sm:$0xff]
      %v3524 = vld [vmem:[%s3522 + $0x8] sm:$0xff]
      %v3525 = vld [vmem:[%s3522 + $0x10] sm:$0xff]
      %v3526 = vld [vmem:[%s3522 + $0x18] sm:$0xff]
      %v3527 = vld [vmem:[%s3522 + $0x20] sm:$0xff]
      %v3528 = vld [vmem:[%s3522 + $0x28] sm:$0xff]
      %v3530 = vsel %vm211, %v3514, 0
      %v3533 = vsel %vm211, %v3515, 0
      %v3536 = vsel %vm211, %v3516, 0
      %v3539 = vsel %vm211, %v3517, 0
      %v3542 = vsel %vm211, %v3518, 0
      %v3545 = vsel %vm211, %v3519, 0
      %v3548 = vsel %vm211, %v3520, 0
      %v3551 = vsel %vm211, %v3521, 0
      %3553 = vmatprep.subr.mxu0 0.0
      %3554 = vmatpush1.msra.mxu0 %v3523
      %3555 = vmatprep.subr.mxu0 0.0
      %3556 = vmatpush1.msra.mxu0 %v3524
      %3557 = vmatprep.subr.mxu0 0.0
      %3558 = vmatpush1.msra.mxu0 %v3525
      %3559 = vmatprep.subr.mxu0 0.0
      %3560 = vmatpush1.msra.mxu0 %v3526
      %3561 = vmatprep.subr.mxu0 0.0
      %3562 = vmatpush1.msra.mxu0 %v3527
      %3563 = vmatprep.subr.mxu0 0.0
      %3564 = vmatpush1.msra.mxu0 %v3528
      %3565 = vmatprep.subr.mxu0 0.0
      %3566 = vmatpush1.msra.mxu0 0.0
      %3567 = vmatprep.subr.mxu0 0.0
      %3568 = vmatpush1.msra.mxu0 0.0
      %3569 = vmatprep.subr.mxu0 0.0
      %3570 = vmatpush1.msra.mxu0 0.0
      %3571 = vmatprep.subr.mxu0 0.0
      %3572 = vmatpush1.msra.mxu0 0.0
      %3573 = vmatprep.subr.mxu0 0.0
      %3574 = vmatpush1.msra.mxu0 0.0
      %3575 = vmatprep.subr.mxu0 0.0
      %3576 = vmatpush1.msra.mxu0 0.0
      %3577 = vmatprep.subr.mxu0 0.0
      %3578 = vmatpush1.msra.mxu0 0.0
      %3579 = vmatprep.subr.mxu0 0.0
      %3580 = vmatpush1.msra.mxu0 0.0
      %3581 = vmatprep.subr.mxu0 0.0
      %3582 = vmatpush1.msra.mxu0 0.0
      %3583 = vmatprep.subr.mxu0 0.0
      %3584 = vmatpush1.msra.mxu0 0.0
      %3585 = vmatprep.subr.mxu0 0.0
      %3586 = vmatpush1.msra.mxu0 0.0
      %3587 = vmatprep.subr.mxu0 0.0
      %3588 = vmatpush1.msra.mxu0 0.0
      %3589 = vmatprep.subr.mxu0 0.0
      %3590 = vmatpush1.msra.mxu0 0.0
      %3591 = vmatprep.subr.mxu0 0.0
      %3592 = vmatpush1.msra.mxu0 0.0
      %3593 = vmatprep.subr.mxu0 0.0
      %3594 = vmatpush1.msra.mxu0 0.0
      %3595 = vmatprep.subr.mxu0 0.0
      %3596 = vmatpush1.msra.mxu0 0.0
      %3597 = vmatprep.subr.mxu0 0.0
      %3598 = vmatpush1.msra.mxu0 0.0
      %3599 = vmatprep.subr.mxu0 0.0
      %3600 = vmatpush1.msra.mxu0 0.0
      %3601 = vmatprep.subr.mxu0 0.0
      %3602 = vmatpush1.msra.mxu0 0.0
      %3603 = vmatprep.subr.mxu0 0.0
      %3604 = vmatpush1.msra.mxu0 0.0
      %3605 = vmatprep.subr.mxu0 0.0
      %3606 = vmatpush1.msra.mxu0 0.0
      %3607 = vmatprep.subr.mxu0 0.0
      %3608 = vmatpush1.msra.mxu0 0.0
      %3609 = vmatprep.subr.mxu0 0.0
      %3610 = vmatpush1.msra.mxu0 0.0
      %3611 = vmatprep.subr.mxu0 0.0
      %3612 = vmatpush1.msra.mxu0 0.0
      %3613 = vmatprep.subr.mxu0 0.0
      %3614 = vmatpush1.msra.mxu0 0.0
      %3615 = vmatprep.subr.mxu0 0.0
      %3616 = vmatpush1.msra.mxu0 0.0
      %3617 = vmatprep.mubr.f32.mxu0 0.0
      %3618 = vmatmul.mubr.f32.gmra.mrb[0].mxu0 %v3530
      %v3619 = vpop.f32.mrb[0].mxu0
      %v3620 = vadd.f32 0.0, %v3619
      %v3621 = vpop.f32.mrb[0].mxu0
      %3622 = vmatprep.mubr.f32.mxu0 0.0
      %3623 = vmatmul.mubr.f32.gmra.mrb[0].mxu0 %v3533
      %v3624 = vpop.f32.mrb[0].mxu0
      %v3625 = vadd.f32 0.0, %v3624
      %v3626 = vpop.f32.mrb[0].mxu0
      %3627 = vmatprep.mubr.f32.mxu0 0.0
      %3628 = vmatmul.mubr.f32.gmra.mrb[0].mxu0 %v3536
      %v3629 = vpop.f32.mrb[0].mxu0
      %v3630 = vadd.f32 0.0, %v3629
      %v3631 = vpop.f32.mrb[0].mxu0
      %3632 = vmatprep.mubr.f32.mxu0 0.0
      %3633 = vmatmul.mubr.f32.gmra.mrb[0].mxu0 %v3539
      %v3634 = vpop.f32.mrb[0].mxu0
      %v3635 = vadd.f32 0.0, %v3634
      %v3636 = vpop.f32.mrb[0].mxu0
      %3637 = vmatprep.mubr.f32.mxu0 0.0
      %3638 = vmatmul.mubr.f32.gmra.mrb[0].mxu0 %v3542
      %v3639 = vpop.f32.mrb[0].mxu0
      %v3640 = vadd.f32 0.0, %v3639
      %v3641 = vpop.f32.mrb[0].mxu0
      %3642 = vmatprep.mubr.f32.mxu0 0.0
      %3643 = vmatmul.mubr.f32.gmra.mrb[0].mxu0 %v3545
      %v3644 = vpop.f32.mrb[0].mxu0
      %v3645 = vadd.f32 0.0, %v3644
      %v3646 = vpop.f32.mrb[0].mxu0
      %3647 = vmatprep.mubr.f32.mxu0 0.0
      %3648 = vmatmul.mubr.f32.gmra.mrb[0].mxu0 %v3548
      %v3649 = vpop.f32.mrb[0].mxu0
      %v3650 = vadd.f32 0.0, %v3649
      %v3651 = vpop.f32.mrb[0].mxu0
      %3652 = vmatprep.mubr.f32.mxu0 0.0
      %3653 = vmatmul.mubr.f32.gmra.mrb[0].mxu0 %v3551
      %v3654 = vpop.f32.mrb[0].mxu0
      %v3655 = vadd.f32 0.0, %v3654
      %v3656 = vpop.f32.mrb[0].mxu0
      %3657 = vdwg.mxu0
      %v3658 = vadd.f32 %v3506, %v3620
      %v3659 = vadd.f32 %v3507, %v3625
      %v3660 = vadd.f32 %v3508, %v3630
      %v3661 = vadd.f32 %v3509, %v3635
      %v3662 = vadd.f32 %v3510, %v3640
      %v3663 = vadd.f32 %v3511, %v3645
      %v3664 = vadd.f32 %v3512, %v3650
      %v3665 = vadd.f32 %v3513, %v3655
      %v3666 = vld [vmem:[%s3209 + $0x3] sm:$0xff]
      %v3667 = vld [vmem:[%s3209 + $0x13] sm:$0xff]
      %v3668 = vld [vmem:[%s3209 + $0x23] sm:$0xff]
      %v3669 = vld [vmem:[%s3209 + $0x33] sm:$0xff]
      %v3670 = vld [vmem:[%s3209 + $0x43] sm:$0xff]
      %v3671 = vld [vmem:[%s3209 + $0x53] sm:$0xff]
      %v3672 = vld [vmem:[%s3209 + $0x63] sm:$0xff]
      %v3673 = vld [vmem:[%s3209 + $0x73] sm:$0xff]
      %s3674 = scalar_lea.vmem %s1, 1104
      %v3675 = vld [vmem:[%s3674] sm:$0xff]
      %v3676 = vld [vmem:[%s3674 + $0x8] sm:$0xff]
      %v3677 = vld [vmem:[%s3674 + $0x10] sm:$0xff]
      %v3678 = vld [vmem:[%s3674 + $0x18] sm:$0xff]
      %v3679 = vld [vmem:[%s3674 + $0x20] sm:$0xff]
      %v3680 = vld [vmem:[%s3674 + $0x28] sm:$0xff]
      %v3682 = vsel %vm211, %v3666, 0
      %v3685 = vsel %vm211, %v3667, 0
      %v3688 = vsel %vm211, %v3668, 0
      %v3691 = vsel %vm211, %v3669, 0
      %v3694 = vsel %vm211, %v3670, 0
      %v3697 = vsel %vm211, %v3671, 0
      %v3700 = vsel %vm211, %v3672, 0
      %v3703 = vsel %vm211, %v3673, 0
      %3705 = vmatprep.subr.mxu0 0.0
      %3706 = vmatpush1.msra.mxu0 %v3675
      %3707 = vmatprep.subr.mxu0 0.0
      %3708 = vmatpush1.msra.mxu0 %v3676
      %3709 = vmatprep.subr.mxu0 0.0
      %3710 = vmatpush1.msra.mxu0 %v3677
      %3711 = vmatprep.subr.mxu0 0.0
      %3712 = vmatpush1.msra.mxu0 %v3678
      %3713 = vmatprep.subr.mxu0 0.0
      %3714 = vmatpush1.msra.mxu0 %v3679
      %3715 = vmatprep.subr.mxu0 0.0
      %3716 = vmatpush1.msra.mxu0 %v3680
      %3717 = vmatprep.subr.mxu0 0.0
      %3718 = vmatpush1.msra.mxu0 0.0
      %3719 = vmatprep.subr.mxu0 0.0
      %3720 = vmatpush1.msra.mxu0 0.0
      %3721 = vmatprep.subr.mxu0 0.0
      %3722 = vmatpush1.msra.mxu0 0.0
      %3723 = vmatprep.subr.mxu0 0.0
      %3724 = vmatpush1.msra.mxu0 0.0
      %3725 = vmatprep.subr.mxu0 0.0
      %3726 = vmatpush1.msra.mxu0 0.0
      %3727 = vmatprep.subr.mxu0 0.0
      %3728 = vmatpush1.msra.mxu0 0.0
      %3729 = vmatprep.subr.mxu0 0.0
      %3730 = vmatpush1.msra.mxu0 0.0
      %3731 = vmatprep.subr.mxu0 0.0
      %3732 = vmatpush1.msra.mxu0 0.0
      %3733 = vmatprep.subr.mxu0 0.0
      %3734 = vmatpush1.msra.mxu0 0.0
      %3735 = vmatprep.subr.mxu0 0.0
      %3736 = vmatpush1.msra.mxu0 0.0
      %3737 = vmatprep.subr.mxu0 0.0
      %3738 = vmatpush1.msra.mxu0 0.0
      %3739 = vmatprep.subr.mxu0 0.0
      %3740 = vmatpush1.msra.mxu0 0.0
      %3741 = vmatprep.subr.mxu0 0.0
      %3742 = vmatpush1.msra.mxu0 0.0
      %3743 = vmatprep.subr.mxu0 0.0
      %3744 = vmatpush1.msra.mxu0 0.0
      %3745 = vmatprep.subr.mxu0 0.0
      %3746 = vmatpush1.msra.mxu0 0.0
      %3747 = vmatprep.subr.mxu0 0.0
      %3748 = vmatpush1.msra.mxu0 0.0
      %3749 = vmatprep.subr.mxu0 0.0
      %3750 = vmatpush1.msra.mxu0 0.0
      %3751 = vmatprep.subr.mxu0 0.0
      %3752 = vmatpush1.msra.mxu0 0.0
      %3753 = vmatprep.subr.mxu0 0.0
      %3754 = vmatpush1.msra.mxu0 0.0
      %3755 = vmatprep.subr.mxu0 0.0
      %3756 = vmatpush1.msra.mxu0 0.0
      %3757 = vmatprep.subr.mxu0 0.0
      %3758 = vmatpush1.msra.mxu0 0.0
      %3759 = vmatprep.subr.mxu0 0.0
      %3760 = vmatpush1.msra.mxu0 0.0
      %3761 = vmatprep.subr.mxu0 0.0
      %3762 = vmatpush1.msra.mxu0 0.0
      %3763 = vmatprep.subr.mxu0 0.0
      %3764 = vmatpush1.msra.mxu0 0.0
      %3765 = vmatprep.subr.mxu0 0.0
      %3766 = vmatpush1.msra.mxu0 0.0
      %3767 = vmatprep.subr.mxu0 0.0
      %3768 = vmatpush1.msra.mxu0 0.0
      %3769 = vmatprep.mubr.f32.mxu0 0.0
      %3770 = vmatmul.mubr.f32.gmra.mrb[0].mxu0 %v3682
      %v3771 = vpop.f32.mrb[0].mxu0
      %v3772 = vadd.f32 0.0, %v3771
      %v3773 = vpop.f32.mrb[0].mxu0
      %3774 = vmatprep.mubr.f32.mxu0 0.0
      %3775 = vmatmul.mubr.f32.gmra.mrb[0].mxu0 %v3685
      %v3776 = vpop.f32.mrb[0].mxu0
      %v3777 = vadd.f32 0.0, %v3776
      %v3778 = vpop.f32.mrb[0].mxu0
      %3779 = vmatprep.mubr.f32.mxu0 0.0
      %3780 = vmatmul.mubr.f32.gmra.mrb[0].mxu0 %v3688
      %v3781 = vpop.f32.mrb[0].mxu0
      %v3782 = vadd.f32 0.0, %v3781
      %v3783 = vpop.f32.mrb[0].mxu0
      %3784 = vmatprep.mubr.f32.mxu0 0.0
      %3785 = vmatmul.mubr.f32.gmra.mrb[0].mxu0 %v3691
      %v3786 = vpop.f32.mrb[0].mxu0
      %v3787 = vadd.f32 0.0, %v3786
      %v3788 = vpop.f32.mrb[0].mxu0
      %3789 = vmatprep.mubr.f32.mxu0 0.0
      %3790 = vmatmul.mubr.f32.gmra.mrb[0].mxu0 %v3694
      %v3791 = vpop.f32.mrb[0].mxu0
      %v3792 = vadd.f32 0.0, %v3791
      %v3793 = vpop.f32.mrb[0].mxu0
      %3794 = vmatprep.mubr.f32.mxu0 0.0
      %3795 = vmatmul.mubr.f32.gmra.mrb[0].mxu0 %v3697
      %v3796 = vpop.f32.mrb[0].mxu0
      %v3797 = vadd.f32 0.0, %v3796
      %v3798 = vpop.f32.mrb[0].mxu0
      %3799 = vmatprep.mubr.f32.mxu0 0.0
      %3800 = vmatmul.mubr.f32.gmra.mrb[0].mxu0 %v3700
      %v3801 = vpop.f32.mrb[0].mxu0
      %v3802 = vadd.f32 0.0, %v3801
      %v3803 = vpop.f32.mrb[0].mxu0
      %3804 = vmatprep.mubr.f32.mxu0 0.0
      %3805 = vmatmul.mubr.f32.gmra.mrb[0].mxu0 %v3703
      %v3806 = vpop.f32.mrb[0].mxu0
      %v3807 = vadd.f32 0.0, %v3806
      %v3808 = vpop.f32.mrb[0].mxu0
      %3809 = vdwg.mxu0
      %v3810 = vadd.f32 %v3658, %v3772
      %v3811 = vadd.f32 %v3659, %v3777
      %v3812 = vadd.f32 %v3660, %v3782
      %v3813 = vadd.f32 %v3661, %v3787
      %v3814 = vadd.f32 %v3662, %v3792
      %v3815 = vadd.f32 %v3663, %v3797
      %v3816 = vadd.f32 %v3664, %v3802
      %v3817 = vadd.f32 %v3665, %v3807
      %v3818 = vld [vmem:[%s3209 + $0x4] sm:$0xff]
      %v3819 = vld [vmem:[%s3209 + $0x14] sm:$0xff]
      %v3820 = vld [vmem:[%s3209 + $0x24] sm:$0xff]
      %v3821 = vld [vmem:[%s3209 + $0x34] sm:$0xff]
      %v3822 = vld [vmem:[%s3209 + $0x44] sm:$0xff]
      %v3823 = vld [vmem:[%s3209 + $0x54] sm:$0xff]
      %v3824 = vld [vmem:[%s3209 + $0x64] sm:$0xff]
      %v3825 = vld [vmem:[%s3209 + $0x74] sm:$0xff]
      %s3826 = scalar_lea.vmem %s1, 1152
      %v3827 = vld [vmem:[%s3826] sm:$0xff]
      %v3828 = vld [vmem:[%s3826 + $0x8] sm:$0xff]
      %v3829 = vld [vmem:[%s3826 + $0x10] sm:$0xff]
      %v3830 = vld [vmem:[%s3826 + $0x18] sm:$0xff]
      %v3831 = vld [vmem:[%s3826 + $0x20] sm:$0xff]
      %v3832 = vld [vmem:[%s3826 + $0x28] sm:$0xff]
      %v3834 = vsel %vm211, %v3818, 0
      %v3837 = vsel %vm211, %v3819, 0
      %v3840 = vsel %vm211, %v3820, 0
      %v3843 = vsel %vm211, %v3821, 0
      %v3846 = vsel %vm211, %v3822, 0
      %v3849 = vsel %vm211, %v3823, 0
      %v3852 = vsel %vm211, %v3824, 0
      %v3855 = vsel %vm211, %v3825, 0
      %3857 = vmatprep.subr.mxu0 0.0
      %3858 = vmatpush1.msra.mxu0 %v3827
      %3859 = vmatprep.subr.mxu0 0.0
      %3860 = vmatpush1.msra.mxu0 %v3828
      %3861 = vmatprep.subr.mxu0 0.0
      %3862 = vmatpush1.msra.mxu0 %v3829
      %3863 = vmatprep.subr.mxu0 0.0
      %3864 = vmatpush1.msra.mxu0 %v3830
      %3865 = vmatprep.subr.mxu0 0.0
      %3866 = vmatpush1.msra.mxu0 %v3831
      %3867 = vmatprep.subr.mxu0 0.0
      %3868 = vmatpush1.msra.mxu0 %v3832
      %3869 = vmatprep.subr.mxu0 0.0
      %3870 = vmatpush1.msra.mxu0 0.0
      %3871 = vmatprep.subr.mxu0 0.0
      %3872 = vmatpush1.msra.mxu0 0.0
      %3873 = vmatprep.subr.mxu0 0.0
      %3874 = vmatpush1.msra.mxu0 0.0
      %3875 = vmatprep.subr.mxu0 0.0
      %3876 = vmatpush1.msra.mxu0 0.0
      %3877 = vmatprep.subr.mxu0 0.0
      %3878 = vmatpush1.msra.mxu0 0.0
      %3879 = vmatprep.subr.mxu0 0.0
      %3880 = vmatpush1.msra.mxu0 0.0
      %3881 = vmatprep.subr.mxu0 0.0
      %3882 = vmatpush1.msra.mxu0 0.0
      %3883 = vmatprep.subr.mxu0 0.0
      %3884 = vmatpush1.msra.mxu0 0.0
      %3885 = vmatprep.subr.mxu0 0.0
      %3886 = vmatpush1.msra.mxu0 0.0
      %3887 = vmatprep.subr.mxu0 0.0
      %3888 = vmatpush1.msra.mxu0 0.0
      %3889 = vmatprep.subr.mxu0 0.0
      %3890 = vmatpush1.msra.mxu0 0.0
      %3891 = vmatprep.subr.mxu0 0.0
      %3892 = vmatpush1.msra.mxu0 0.0
      %3893 = vmatprep.subr.mxu0 0.0
      %3894 = vmatpush1.msra.mxu0 0.0
      %3895 = vmatprep.subr.mxu0 0.0
      %3896 = vmatpush1.msra.mxu0 0.0
      %3897 = vmatprep.subr.mxu0 0.0
      %3898 = vmatpush1.msra.mxu0 0.0
      %3899 = vmatprep.subr.mxu0 0.0
      %3900 = vmatpush1.msra.mxu0 0.0
      %3901 = vmatprep.subr.mxu0 0.0
      %3902 = vmatpush1.msra.mxu0 0.0
      %3903 = vmatprep.subr.mxu0 0.0
      %3904 = vmatpush1.msra.mxu0 0.0
      %3905 = vmatprep.subr.mxu0 0.0
      %3906 = vmatpush1.msra.mxu0 0.0
      %3907 = vmatprep.subr.mxu0 0.0
      %3908 = vmatpush1.msra.mxu0 0.0
      %3909 = vmatprep.subr.mxu0 0.0
      %3910 = vmatpush1.msra.mxu0 0.0
      %3911 = vmatprep.subr.mxu0 0.0
      %3912 = vmatpush1.msra.mxu0 0.0
      %3913 = vmatprep.subr.mxu0 0.0
      %3914 = vmatpush1.msra.mxu0 0.0
      %3915 = vmatprep.subr.mxu0 0.0
      %3916 = vmatpush1.msra.mxu0 0.0
      %3917 = vmatprep.subr.mxu0 0.0
      %3918 = vmatpush1.msra.mxu0 0.0
      %3919 = vmatprep.subr.mxu0 0.0
      %3920 = vmatpush1.msra.mxu0 0.0
      %3921 = vmatprep.mubr.f32.mxu0 0.0
      %3922 = vmatmul.mubr.f32.gmra.mrb[0].mxu0 %v3834
      %v3923 = vpop.f32.mrb[0].mxu0
      %v3924 = vadd.f32 0.0, %v3923
      %v3925 = vpop.f32.mrb[0].mxu0
      %3926 = vmatprep.mubr.f32.mxu0 0.0
      %3927 = vmatmul.mubr.f32.gmra.mrb[0].mxu0 %v3837
      %v3928 = vpop.f32.mrb[0].mxu0
      %v3929 = vadd.f32 0.0, %v3928
      %v3930 = vpop.f32.mrb[0].mxu0
      %3931 = vmatprep.mubr.f32.mxu0 0.0
      %3932 = vmatmul.mubr.f32.gmra.mrb[0].mxu0 %v3840
      %v3933 = vpop.f32.mrb[0].mxu0
      %v3934 = vadd.f32 0.0, %v3933
      %v3935 = vpop.f32.mrb[0].mxu0
      %3936 = vmatprep.mubr.f32.mxu0 0.0
      %3937 = vmatmul.mubr.f32.gmra.mrb[0].mxu0 %v3843
      %v3938 = vpop.f32.mrb[0].mxu0
      %v3939 = vadd.f32 0.0, %v3938
      %v3940 = vpop.f32.mrb[0].mxu0
      %3941 = vmatprep.mubr.f32.mxu0 0.0
      %3942 = vmatmul.mubr.f32.gmra.mrb[0].mxu0 %v3846
      %v3943 = vpop.f32.mrb[0].mxu0
      %v3944 = vadd.f32 0.0, %v3943
      %v3945 = vpop.f32.mrb[0].mxu0
      %3946 = vmatprep.mubr.f32.mxu0 0.0
      %3947 = vmatmul.mubr.f32.gmra.mrb[0].mxu0 %v3849
      %v3948 = vpop.f32.mrb[0].mxu0
      %v3949 = vadd.f32 0.0, %v3948
      %v3950 = vpop.f32.mrb[0].mxu0
      %3951 = vmatprep.mubr.f32.mxu0 0.0
      %3952 = vmatmul.mubr.f32.gmra.mrb[0].mxu0 %v3852
      %v3953 = vpop.f32.mrb[0].mxu0
      %v3954 = vadd.f32 0.0, %v3953
      %v3955 = vpop.f32.mrb[0].mxu0
      %3956 = vmatprep.mubr.f32.mxu0 0.0
      %3957 = vmatmul.mubr.f32.gmra.mrb[0].mxu0 %v3855
      %v3958 = vpop.f32.mrb[0].mxu0
      %v3959 = vadd.f32 0.0, %v3958
      %v3960 = vpop.f32.mrb[0].mxu0
      %3961 = vdwg.mxu0
      %v3962 = vadd.f32 %v3810, %v3924
      %v3963 = vadd.f32 %v3811, %v3929
      %v3964 = vadd.f32 %v3812, %v3934
      %v3965 = vadd.f32 %v3813, %v3939
      %v3966 = vadd.f32 %v3814, %v3944
      %v3967 = vadd.f32 %v3815, %v3949
      %v3968 = vadd.f32 %v3816, %v3954
      %v3969 = vadd.f32 %v3817, %v3959
      %vm3970 = vcmask 64512
      %3971 = vst.msk [vmem:[%s177] sm:$0xff] %vm3970, %v3962
      %3972 = vst.msk [vmem:[%s177 + $0x8] sm:$0xff] %vm3970, %v3963
      %3973 = vst.msk [vmem:[%s177 + $0x10] sm:$0xff] %vm3970, %v3964
      %3974 = vst.msk [vmem:[%s177 + $0x18] sm:$0xff] %vm3970, %v3965
      %3975 = vst.msk [vmem:[%s177 + $0x20] sm:$0xff] %vm3970, %v3966
      %3976 = vst.msk [vmem:[%s177 + $0x28] sm:$0xff] %vm3970, %v3967
      %3977 = vst.msk [vmem:[%s177 + $0x30] sm:$0xff] %vm3970, %v3968
      %3978 = vst.msk [vmem:[%s177 + $0x38] sm:$0xff] %vm3970, %v3969
      %3987 = vrot.lane.b32.xlu0 %v3962, 120
      %v3988 = vpop.permute.xlu0 %3987
      %3989 = vrot.lane.b32.xlu0 %v3963, 120
      %v3990 = vpop.permute.xlu0 %3989
      %3991 = vrot.lane.b32.xlu0 %v3964, 120
      %v3992 = vpop.permute.xlu0 %3991
      %3993 = vrot.lane.b32.xlu0 %v3965, 120
      %v3994 = vpop.permute.xlu0 %3993
      %3995 = vrot.lane.b32.xlu0 %v3966, 120
      %v3996 = vpop.permute.xlu0 %3995
      %3997 = vrot.lane.b32.xlu0 %v3967, 120
      %v3998 = vpop.permute.xlu0 %3997
      %3999 = vrot.lane.b32.xlu0 %v3968, 120
      %v4000 = vpop.permute.xlu0 %3999
      %4001 = vrot.lane.b32.xlu0 %v3969, 120
      %v4002 = vpop.permute.xlu0 %4001
      %s4011 = scalar_lea.vmem %s177, 64
      %4012 = vst.msk [vmem:[%s4011] sm:$0xff] %vm3970, %v3988
      %4013 = vst.msk [vmem:[%s4011 + $0x8] sm:$0xff] %vm3970, %v3990
      %4014 = vst.msk [vmem:[%s4011 + $0x10] sm:$0xff] %vm3970, %v3992
      %4015 = vst.msk [vmem:[%s4011 + $0x18] sm:$0xff] %vm3970, %v3994
      %4016 = vst.msk [vmem:[%s4011 + $0x20] sm:$0xff] %vm3970, %v3996
      %4017 = vst.msk [vmem:[%s4011 + $0x28] sm:$0xff] %vm3970, %v3998
      %4018 = vst.msk [vmem:[%s4011 + $0x30] sm:$0xff] %vm3970, %v4000
      %4019 = vst.msk [vmem:[%s4011 + $0x38] sm:$0xff] %vm3970, %v4002
      %v4020 = vsel %vm3970, %v3962, 0.0
      %v4021 = vsel %vm3970, %v3963, 0.0
      %v4022 = vadd.f32 %v4020, %v4021
      %v4023 = vsel %vm3970, %v3964, 0.0
      %v4024 = vadd.f32 %v4022, %v4023
      %v4025 = vsel %vm3970, %v3965, 0.0
      %v4026 = vadd.f32 %v4024, %v4025
      %v4027 = vsel %vm3970, %v3966, 0.0
      %v4028 = vadd.f32 %v4026, %v4027
      %v4029 = vsel %vm3970, %v3967, 0.0
      %v4030 = vadd.f32 %v4028, %v4029
      %v4031 = vsel %vm3970, %v3968, 0.0
      %v4032 = vadd.f32 %v4030, %v4031
      %v4033 = vsel %vm3970, %v3969, 0.0
      %v4034 = vadd.f32 %v4032, %v4033
      %v4035 = vrot.slane %v4034, 4
      %v4036 = vadd.f32 %v4034, %v4035
      %v4037 = vrot.slane %v4036, 2
      %v4038 = vadd.f32 %v4036, %v4037
      %v4039 = vrot.slane %v4038, 1
      %v4040 = vadd.f32 %v4038, %v4039
      %vm4041 = vcmask 57344
      %4042 = vst.msk [vmem:[%s181] sm:$0x1] %vm4041, %v4040
      %v4043 = vmul.f32 %v3962, %v3962
      %v4044 = vmul.f32 %v3963, %v3963
      %v4045 = vmul.f32 %v3964, %v3964
      %v4046 = vmul.f32 %v3965, %v3965
      %v4047 = vmul.f32 %v3966, %v3966
      %v4048 = vmul.f32 %v3967, %v3967
      %v4049 = vmul.f32 %v3968, %v3968
      %v4050 = vmul.f32 %v3969, %v3969
      %v4051 = vsel %vm3970, %v4043, 0.0
      %v4052 = vsel %vm3970, %v4044, 0.0
      %v4053 = vadd.f32 %v4051, %v4052
      %v4054 = vsel %vm3970, %v4045, 0.0
      %v4055 = vadd.f32 %v4053, %v4054
      %v4056 = vsel %vm3970, %v4046, 0.0
      %v4057 = vadd.f32 %v4055, %v4056
      %v4058 = vsel %vm3970, %v4047, 0.0
      %v4059 = vadd.f32 %v4057, %v4058
      %v4060 = vsel %vm3970, %v4048, 0.0
      %v4061 = vadd.f32 %v4059, %v4060
      %v4062 = vsel %vm3970, %v4049, 0.0
      %v4063 = vadd.f32 %v4061, %v4062
      %v4064 = vsel %vm3970, %v4050, 0.0
      %v4065 = vadd.f32 %v4063, %v4064
      %v4066 = vrot.slane %v4065, 4
      %v4067 = vadd.f32 %v4065, %v4066
      %v4068 = vrot.slane %v4067, 2
      %v4069 = vadd.f32 %v4067, %v4068
      %v4070 = vrot.slane %v4069, 1
      %v4071 = vadd.f32 %v4069, %v4070
      %4072 = vst.msk [vmem:[%s181 + $0x1] sm:$0x1] %vm4041, %v4071
      %vm4073 = vcmask 130112
      %v4074 = vsel %vm4073, %v3962, 0.0
      %v4075 = vsel %vm4073, %v3963, 0.0
      %v4076 = vadd.f32 %v4074, %v4075
      %v4077 = vsel %vm4073, %v3964, 0.0
      %v4078 = vadd.f32 %v4076, %v4077
      %v4079 = vsel %vm4073, %v3965, 0.0
      %v4080 = vadd.f32 %v4078, %v4079
      %v4081 = vsel %vm4073, %v3966, 0.0
      %v4082 = vadd.f32 %v4080, %v4081
      %v4083 = vsel %vm4073, %v3967, 0.0
      %v4084 = vadd.f32 %v4082, %v4083
      %v4085 = vsel %vm4073, %v3968, 0.0
      %v4086 = vadd.f32 %v4084, %v4085
      %v4087 = vsel %vm4073, %v3969, 0.0
      %v4088 = vadd.f32 %v4086, %v4087
      %v4089 = vrot.slane %v4088, 4
      %v4090 = vadd.f32 %v4088, %v4089
      %v4091 = vrot.slane %v4090, 2
      %v4092 = vadd.f32 %v4090, %v4091
      %v4093 = vrot.slane %v4092, 1
      %v4094 = vadd.f32 %v4092, %v4093
      %4096 = vrot.lane.b32.xlu0 %v4094, 120
      %v4097 = vpop.permute.xlu0 %4096
      %4099 = vst.msk [vmem:[%s181 + $0x2] sm:$0x1] %vm4041, %v4097
      %v4100 = vsel %vm4073, %v4043, 0.0
      %v4101 = vsel %vm4073, %v4044, 0.0
      %v4102 = vadd.f32 %v4100, %v4101
      %v4103 = vsel %vm4073, %v4045, 0.0
      %v4104 = vadd.f32 %v4102, %v4103
      %v4105 = vsel %vm4073, %v4046, 0.0
      %v4106 = vadd.f32 %v4104, %v4105
      %v4107 = vsel %vm4073, %v4047, 0.0
      %v4108 = vadd.f32 %v4106, %v4107
      %v4109 = vsel %vm4073, %v4048, 0.0
      %v4110 = vadd.f32 %v4108, %v4109
      %v4111 = vsel %vm4073, %v4049, 0.0
      %v4112 = vadd.f32 %v4110, %v4111
      %v4113 = vsel %vm4073, %v4050, 0.0
      %v4114 = vadd.f32 %v4112, %v4113
      %v4115 = vrot.slane %v4114, 4
      %v4116 = vadd.f32 %v4114, %v4115
      %v4117 = vrot.slane %v4116, 2
      %v4118 = vadd.f32 %v4116, %v4117
      %v4119 = vrot.slane %v4118, 1
      %v4120 = vadd.f32 %v4118, %v4119
      %4122 = vrot.lane.b32.xlu0 %v4120, 120
      %v4123 = vpop.permute.xlu0 %4122
      %4125 = vst.msk [vmem:[%s181 + $0x3] sm:$0x1] %vm4041, %v4123
      %p4126 = scmp.lt.s32.totalorder %s15, 1
      %s4127 = scalar_select %p4126, %s15, 1
      %s4128 = smul.addr %s4127, 16
      %s4129 = smul.addr %s4128, 8
      %s4130 = scalar_lea.vmem %s2, %s4129
      %p4131 = scmp.lt.s32.totalorder %s15, 1
      %s4132 = scalar_select %p4131, %s15, 1
      %s4133 = smul.addr %s4132, 4
      %s4134 = scalar_lea.vmem %s3, %s4133
      // Predicated region
      $region29: #{output_transition.2} parent=27 // pred_check
        %p4135 = pneg %p80
      $region30: #{output_transition.2} parent=27 // pred_check_branch
        %4137 = sbr.rel (%p4135) target = $region32
      $region31: #{output_transition.2} parent=27 // pred_region
        _
      $region32: #{output_transition.2} parent=27 // pred_fallthru
        _
      // Predicated region
      $region33: #{output_transition.2} parent=27 // pred_check
        %p4138 = pneg %p106
      $region34: #{output_transition.2} parent=27 // pred_check_branch
        %4140 = sbr.rel (%p4138) target = $region36
      $region35: #{output_transition.2} parent=27 // pred_region
        _
      $region36: #{output_transition.2} parent=27 // pred_fallthru
        _
    $region28: #{output_transition.2} parent=5 // pred_fallthru
      _
    %p4141 = scmp.le.s32.totalorder 2, %s10
    // Predicated region
    $region37: #{output_transition.2} parent=5 // pred_check
      %p4142 = pneg %p4141
    $region38: #{output_transition.2} parent=5 // pred_check_branch
      %4144 = sbr.rel (%p4142) target = $region40
    $region39: #{output_transition.2} parent=5 // pred_region
      %s4145 = ssub.s32 %s10, 2
      // Predicated region
      $region41: #{output_transition.2} parent=39 // pred_check
        %p4146 = pneg %p86
      $region42: #{output_transition.2} parent=39 // pred_check_branch
        %4148 = sbr.rel (%p4146) target = $region44
      $region43: #{output_transition.2} parent=39 // pred_region
        %p4149 = scmp.lt.s32.totalorder %s16, 1
        %s4150 = scalar_select %p4149, %s16, 1
        %s4151 = smul.addr %s4150, 16
        %s4152 = smul.addr %s4151, 8
        %s4153 = scalar_lea.vmem %s2, %s4152
      $region44: #{output_transition.2} parent=39 // pred_fallthru
        _
      // Predicated region
      $region45: #{output_transition.2} parent=39 // pred_check
        %p4154 = pneg %p112
      $region46: #{output_transition.2} parent=39 // pred_check_branch
        %4156 = sbr.rel (%p4154) target = $region48
      $region47: #{output_transition.2} parent=39 // pred_region
        %p4157 = scmp.lt.s32.totalorder %s16, 1
        %s4158 = scalar_select %p4157, %s16, 1
        %s4159 = smul.addr %s4158, 4
        %s4160 = scalar_lea.vmem %s3, %s4159
      $region48: #{output_transition.2} parent=39 // pred_fallthru
        _
    $region40: #{output_transition.2} parent=5 // pred_fallthru
      _
  $region6: #{output_transition.2} parent=0 // loop_footer
    %s14 = sadd.s32 1, %s10
  $region7: #{output_transition.2} parent=0 // loop_footer_branch
    %9 = sbr.rel target = $region3
  $region8: #{output_transition.2} parent=0 // loop_exit
    _

</llo_original>
